<compile_context>
chip_gen: v7x
topology: tpu7x:2x2x1
jax: 0.10.0
libtpu: 0.0.40
codegen_flags: <defaults>
</compile_context>

<pallas_src>
import jax
import jax.numpy as jnp
from jax.experimental import pallas as pl
from jax.experimental.pallas import tpu as pltpu

NEG_SLOPE = 0.2


def _lrelu(v):
    # LeakyReLU(0.2): max(v, 0.2*v) -- 2 VALU ops/elem, no compare+select.
    return jnp.maximum(v, NEG_SLOPE * v)


def _autocorr_kernel(x_ref, mask_ref, w1_ref, b1_ref, w2_ref, b2_ref,
                     w3_ref, b3_ref, o_ref):
    # x_ref   : (1, M, 1)   flattened zero-padded block of input rows
    # mask_ref: (M, 1)      1.0 at real positions, 0.0 at per-row pad columns
    # w1_ref  : (3, 128)    layer-1 taps   (tap, Cout)
    # b1_ref  : (1, 128)
    # w2_ref  : (384, 256)  layer-2 taps fused along K: rows [k*128,(k+1)*128)
    # b2_ref  : (1, 256)
    # w3_ref  : (3, 256)    layer-3 taps   (tap, Cin)
    # b3_ref  : (1, 1)
    # o_ref   : (1, M, 1)
    m = x_ref.shape[1]

    x = x_ref[0]                  # (M, 1) f32; pad positions are exact zeros
    mask = mask_ref[...]          # (M, 1)
    w1 = w1_ref[...]
    w3 = w3_ref[...]
    mm_dtype = w2_ref.dtype

    # Circular rolls give the +-1 shifted conv views.  Wrap-around only hits
    # flattened positions 0 and M-1, which are per-row pad columns whose
    # values are zero (x) or zeroed by `mask` (h1, h2), so real positions see
    # exactly the zero-padded convolution.

    # ---- layer 1: conv(1 -> 128) on the VPU (Cin == 1 -> broadcast mul) ----
    x_m1 = pltpu.roll(x, shift=1, axis=0)        # x[p-1]
    x_p1 = pltpu.roll(x, shift=m - 1, axis=0)    # x[p+1]
    acc1 = (x_m1 * w1[0:1, :] + x * w1[1:2, :] + x_p1 * w1[2:3, :]
            + b1_ref[...])                       # (M, 128) f32
    h1 = _lrelu(acc1) * mask                     # pad positions -> exact 0

    # ---- layer 2: conv(128 -> 256) as ONE fused K=384 MXU matmul (bf16) ----
    h1_m1 = pltpu.roll(h1, shift=1, axis=0)
    h1_p1 = pltpu.roll(h1, shift=m - 1, axis=0)
    taps = jnp.concatenate([h1_m1.astype(mm_dtype),
                            h1.astype(mm_dtype),
                            h1_p1.astype(mm_dtype)], axis=1)   # (M, 384) bf16
    acc2 = jnp.dot(taps, w2_ref[...],
                   preferred_element_type=jnp.float32) + b2_ref[...]
    h2 = _lrelu(acc2) * mask                     # (M, 256) f32

    # ---- layer 3: conv(256 -> 1): VPU tap-sum, then ONE lane reduce --------
    h2_m1 = pltpu.roll(h2, shift=1, axis=0)
    h2_p1 = pltpu.roll(h2, shift=m - 1, axis=0)
    prod = h2_m1 * w3[0:1, :] + h2 * w3[1:2, :] + h2_p1 * w3[2:3, :]
    r = jnp.sum(prod, axis=1, keepdims=True) + b3_ref[...]     # (M, 1)
    # TODO(synk): output stays a lane-sparse (M,1) column; only restructure to
    # a lane-dense row (in-kernel transpose) if a trace shows the writeback
    # exposed -- it is only 4*M bytes per block.
    o_ref[0] = _lrelu(r)


def prepare_params(params, *, use_bf16=True):
    """One-time conversion of PyTorch conv layouts (O, I, 1, 3) to kernel
    layouts.  Hoisted out of the per-call path (review: avoid re-materializing
    ~200 KB of weights every forward)."""
    w1, b1, w2, b2, w3, b3 = params
    mm_dtype = jnp.bfloat16 if use_bf16 else jnp.float32
    w1t = w1[:, 0, 0, :].T.astype(jnp.float32)                       # (3, 128)
    b1r = b1.reshape(1, -1).astype(jnp.float32)                      # (1, 128)
    w2f = jnp.concatenate([w2[:, :, 0, k].T for k in range(3)],
                          axis=0).astype(mm_dtype)                   # (384, 256)
    b2r = b2.reshape(1, -1).astype(jnp.float32)                      # (1, 256)
    w3t = w3[0, :, 0, :].T.astype(jnp.float32)                       # (3, 256)
    b3r = b3.reshape(1, 1).astype(jnp.float32)                       # (1, 1)
    return (w1t, b1r, w2f, b2r, w3t, b3r)


def _auto_tb(B, Wp):
    """Pick rows-per-block: big blocks (amortize grid-step overhead + weight
    push), M = tb*Wp capped ~4K for v7x's 64 MiB VMEM, tb a multiple of 8 so M
    stays sublane-aligned, and >= 2 blocks when possible (v7x megacore)."""
    cap = min(128, 4096 // Wp)
    cap = max(8, (cap // 8) * 8)
    half = -(-B // 2)                       # ceil(B/2) -> aim for >= 2 blocks
    half = max(8, ((half + 7) // 8) * 8)
    return min(cap, half)


def iclabel_autocorr_forward(x_nchw, prepped, *, tb=None):
    """Forward pass; x_nchw is (N, 1, H, W) like the PyTorch module.
    `prepped` comes from prepare_params()."""
    w1t, b1r, w2f, b2r, w3t, b3r = prepped
    N, C, H, W = x_nchw.shape
    assert C == 1
    B = N * H
    Wp = W + 2
    if tb is None:
        tb = _auto_tb(B, Wp)
    tb = max(8, (tb // 8) * 8)              # M multiple of 8 (sublane aligned)
    nblk = pl.cdiv(B, tb)
    Bp = nblk * tb
    M = tb * Wp                             # flattened positions per block

    # (N,1,H,W) -> (B, W) -> add conv zero-pad columns, round rows up to tb.
    xr = x_nchw.reshape(B, W).astype(jnp.float32)
    xr = jnp.pad(xr, ((0, Bp - B), (1, 1)))                    # (Bp, Wp)
    x_blk = xr.reshape(nblk, M, 1)

    # Mask of real (non-pad) positions inside a flattened block.
    col = jnp.arange(Wp, dtype=jnp.int32)
    mrow = ((col >= 1) & (col <= W)).astype(jnp.float32)       # (Wp,)
    mask = jnp.tile(mrow, (tb,)).reshape(M, 1)                 # (M, 1)

    # Explicit VMEM budget: generous per-position estimate, clamped to a
    # v7x-safe 48 MiB ceiling (v5e default scoped limit is only 16 MiB).
    est = M * 6144 + (2 << 20)
    vmem_limit = int(min(48 << 20, max(32 << 20, 2 * est)))

    def resident(shape):
        return pl.BlockSpec(shape, lambda i: (0,) * len(shape))

    out = pl.pallas_call(
        _autocorr_kernel,
        out_shape=jax.ShapeDtypeStruct((nblk, M, 1), jnp.float32),
        grid=(nblk,),
        in_specs=[
            pl.BlockSpec((1, M, 1), lambda i: (i, 0, 0)),      # streamed x
            resident((M, 1)),                                  # mask
            resident((3, 128)), resident((1, 128)),            # w1, b1
            resident((384, 256)), resident((1, 256)),          # fused w2, b2
            resident((3, 256)), resident((1, 1)),              # w3, b3
        ],
        out_specs=pl.BlockSpec((1, M, 1), lambda i: (i, 0, 0)),
        compiler_params=pltpu.CompilerParams(
            dimension_semantics=("parallel",),
            vmem_limit_bytes=vmem_limit),
    )(x_blk, mask, w1t, b1r, w2f, b2r, w3t, b3r)

    # Strip per-row pad columns and any padded rows, restore (N, 1, H, W).
    out = out.reshape(nblk, tb, Wp)[:, :, 1:W + 1].reshape(Bp, W)[:B]
    return out.reshape(N, H, W)[:, None, :, :]


def _ref_forward(x, params):
    """Plain-JAX reference matching PyTorch Conv2d/LeakyReLU semantics."""
    w1, b1, w2, b2, w3, b3 = params

    def conv(x, w, b):
        y = jax.lax.conv_general_dilated(
            x, w, window_strides=(1, 1), padding=((0, 0), (1, 1)),
            dimension_numbers=("NCHW", "OIHW", "NCHW"))
        return y + b.reshape(1, -1, 1, 1)

    y = _lrelu(conv(x, w1, b1))
    y = _lrelu(conv(y, w2, b2))
    y = _lrelu(conv(y, w3, b3))
    return y


def _init_params(key):
    """Deterministic synthetic weights (PyTorch conv layout: O, I, 1, 3)."""
    def conv_params(key, cin, cout):
        k_w, k_b = jax.random.split(key)
        bound = 1.0 / jnp.sqrt(cin * 3.0)
        w = jax.random.uniform(k_w, (cout, cin, 1, 3), jnp.float32, -bound, bound)
        b = jax.random.uniform(k_b, (cout,), jnp.float32, -bound, bound)
        return w, b

    k1, k2, k3 = jax.random.split(key, 3)
    w1, b1 = conv_params(k1, 1, 128)
    w2, b2 = conv_params(k2, 128, 256)
    w3, b3 = conv_params(k3, 256, 1)
    return (w1, b1, w2, b2, w3, b3)


if __name__ == "__main__":
    key = jax.random.PRNGKey(0)
    k_x, k_p = jax.random.split(key)

    # Small autocorr-style input (NCHW): 4 ICs, 1 channel, H=4, W=32.
    x = jax.random.normal(k_x, (4, 1, 4, 32), jnp.float32)
    params = _init_params(k_p)

    use_bf16 = True
    prepped = prepare_params(params, use_bf16=use_bf16)  # hoisted weight prep
    fwd = jax.jit(iclabel_autocorr_forward)

    out = jax.block_until_ready(fwd(x, prepped))

    ref = jax.block_until_ready(_ref_forward(x, params))
    assert out.shape == ref.shape == (4, 1, 4, 32)
    rtol, atol = (2e-2, 1e-2) if use_bf16 else (1e-4, 1e-4)
    assert jnp.allclose(out, ref, rtol=rtol, atol=atol), "mismatch vs reference"

    print("KERNEL_OK")
</pallas_src>

<mosaic_0001>
module attributes {stable_mosaic.version = 11 : i64} {
  func.func @_autocorr_kernel(%arg0: i32, %arg1: memref<1x272x1xf32, #tpu.memory_space<vmem>>, %arg2: memref<272x1xf32, #tpu.memory_space<vmem>>, %arg3: memref<3x128xf32, #tpu.memory_space<vmem>>, %arg4: memref<1x128xf32, #tpu.memory_space<vmem>>, %arg5: memref<384x256xbf16, #tpu.memory_space<vmem>>, %arg6: memref<1x256xf32, #tpu.memory_space<vmem>>, %arg7: memref<3x256xf32, #tpu.memory_space<vmem>>, %arg8: memref<1x1xf32, #tpu.memory_space<vmem>>, %arg9: memref<1x272x1xf32, #tpu.memory_space<vmem>>) attributes {dimension_semantics = [#tpu.dimension_semantics<parallel>], iteration_bounds = array<i64: 2>, scalar_prefetch = 0 : i64, scratch_operands = 0 : i64, tpu.core_type = #tpu.core_type<tc>, window_params = [{transform_indices = @transform_0, window_bounds = array<i64: 1, 272, 1>}, {pipeline_mode = #tpu.pipeline_mode<synchronous>, transform_indices = @transform_1, window_bounds = array<i64: 272, 1>}, {pipeline_mode = #tpu.pipeline_mode<synchronous>, transform_indices = @transform_2, window_bounds = array<i64: 3, 128>}, {pipeline_mode = #tpu.pipeline_mode<synchronous>, transform_indices = @transform_3, window_bounds = array<i64: 1, 128>}, {pipeline_mode = #tpu.pipeline_mode<synchronous>, transform_indices = @transform_4, window_bounds = array<i64: 384, 256>}, {pipeline_mode = #tpu.pipeline_mode<synchronous>, transform_indices = @transform_5, window_bounds = array<i64: 1, 256>}, {pipeline_mode = #tpu.pipeline_mode<synchronous>, transform_indices = @transform_6, window_bounds = array<i64: 3, 256>}, {pipeline_mode = #tpu.pipeline_mode<synchronous>, transform_indices = @transform_7, window_bounds = array<i64: 1, 1>}, {transform_indices = @transform_8, window_bounds = array<i64: 1, 272, 1>}]} {
    %c0 = arith.constant 0 : index
    %c0_0 = arith.constant 0 : index
    %c0_1 = arith.constant 0 : index
    %0 = vector.load %arg1[%c0, %c0_0, %c0_1] : memref<1x272x1xf32, #tpu.memory_space<vmem>>, vector<1x272x1xf32>
    %1 = vector.shape_cast %0 : vector<1x272x1xf32> to vector<272x1xf32>
    %c0_2 = arith.constant 0 : index
    %c0_3 = arith.constant 0 : index
    %2 = vector.load %arg2[%c0_2, %c0_3] : memref<272x1xf32, #tpu.memory_space<vmem>>, vector<272x1xf32>
    %c0_4 = arith.constant 0 : index
    %c0_5 = arith.constant 0 : index
    %3 = vector.load %arg3[%c0_4, %c0_5] : memref<3x128xf32, #tpu.memory_space<vmem>>, vector<3x128xf32>
    %c0_6 = arith.constant 0 : index
    %c0_7 = arith.constant 0 : index
    %4 = vector.load %arg7[%c0_6, %c0_7] : memref<3x256xf32, #tpu.memory_space<vmem>>, vector<3x256xf32>
    %c1_i32 = arith.constant 1 : i32
    %5 = tpu.dynamic_rotate %1 by %c1_i32 dim 0 : vector<272x1xf32>, i32 -> vector<272x1xf32>
    %c271_i32 = arith.constant 271 : i32
    %6 = tpu.dynamic_rotate %1 by %c271_i32 dim 0 : vector<272x1xf32>, i32 -> vector<272x1xf32>
    %7 = vector.extract_strided_slice %3 {offsets = [0, 0], sizes = [1, 128], strides = [1, 1]} : vector<3x128xf32> to vector<1x128xf32>
    %8 = vector.broadcast %5 : vector<272x1xf32> to vector<272x128xf32>
    %9 = vector.broadcast %7 : vector<1x128xf32> to vector<272x128xf32>
    %10 = arith.mulf %8, %9 : vector<272x128xf32>
    %11 = vector.extract_strided_slice %3 {offsets = [1, 0], sizes = [1, 128], strides = [1, 1]} : vector<3x128xf32> to vector<1x128xf32>
    %12 = vector.broadcast %1 : vector<272x1xf32> to vector<272x128xf32>
    %13 = vector.broadcast %11 : vector<1x128xf32> to vector<272x128xf32>
    %14 = arith.mulf %12, %13 : vector<272x128xf32>
    %15 = arith.addf %10, %14 : vector<272x128xf32>
    %16 = vector.extract_strided_slice %3 {offsets = [2, 0], sizes = [1, 128], strides = [1, 1]} : vector<3x128xf32> to vector<1x128xf32>
    %17 = vector.broadcast %6 : vector<272x1xf32> to vector<272x128xf32>
    %18 = vector.broadcast %16 : vector<1x128xf32> to vector<272x128xf32>
    %19 = arith.mulf %17, %18 : vector<272x128xf32>
    %20 = arith.addf %15, %19 : vector<272x128xf32>
    %c0_8 = arith.constant 0 : index
    %c0_9 = arith.constant 0 : index
    %21 = vector.load %arg4[%c0_8, %c0_9] : memref<1x128xf32, #tpu.memory_space<vmem>>, vector<1x128xf32>
    %22 = vector.broadcast %21 : vector<1x128xf32> to vector<272x128xf32>
    %23 = arith.addf %20, %22 : vector<272x128xf32>
    %cst = arith.constant 2.000000e-01 : f32
    %24 = vector.broadcast %cst : f32 to vector<272x128xf32>
    %25 = arith.mulf %24, %23 : vector<272x128xf32>
    %26 = arith.maximumf %23, %25 : vector<272x128xf32>
    %27 = vector.broadcast %2 : vector<272x1xf32> to vector<272x128xf32>
    %28 = arith.mulf %26, %27 : vector<272x128xf32>
    %c1_i32_10 = arith.constant 1 : i32
    %29 = tpu.dynamic_rotate %28 by %c1_i32_10 dim 0 : vector<272x128xf32>, i32 -> vector<272x128xf32>
    %c271_i32_11 = arith.constant 271 : i32
    %30 = tpu.dynamic_rotate %28 by %c271_i32_11 dim 0 : vector<272x128xf32>, i32 -> vector<272x128xf32>
    %31 = arith.truncf %29 : vector<272x128xf32> to vector<272x128xbf16>
    %32 = arith.truncf %28 : vector<272x128xf32> to vector<272x128xbf16>
    %33 = arith.truncf %30 : vector<272x128xf32> to vector<272x128xbf16>
    %34 = tpu.concatenate %31, %32, %33 in 1 : vector<272x128xbf16>, vector<272x128xbf16>, vector<272x128xbf16> -> vector<272x384xbf16>
    %c0_12 = arith.constant 0 : index
    %c0_13 = arith.constant 0 : index
    %35 = vector.load %arg5[%c0_12, %c0_13] : memref<384x256xbf16, #tpu.memory_space<vmem>>, vector<384x256xbf16>
    %cst_14 = arith.constant dense<0.000000e+00> : vector<272x256xf32>
    %36 = tpu.matmul %34, %35, %cst_14 {dimension_numbers = #tpu.dot_dimension_numbers<[1], [0], [0], [1], [0, 0, 1, 1], [], []>} : vector<272x384xbf16>, vector<384x256xbf16>, vector<272x256xf32> -> vector<272x256xf32>
    %c0_15 = arith.constant 0 : index
    %c0_16 = arith.constant 0 : index
    %37 = vector.load %arg6[%c0_15, %c0_16] : memref<1x256xf32, #tpu.memory_space<vmem>>, vector<1x256xf32>
    %38 = vector.broadcast %37 : vector<1x256xf32> to vector<272x256xf32>
    %39 = arith.addf %36, %38 : vector<272x256xf32>
    %cst_17 = arith.constant 2.000000e-01 : f32
    %40 = vector.broadcast %cst_17 : f32 to vector<272x256xf32>
    %41 = arith.mulf %40, %39 : vector<272x256xf32>
    %42 = arith.maximumf %39, %41 : vector<272x256xf32>
    %43 = vector.broadcast %2 : vector<272x1xf32> to vector<272x256xf32>
    %44 = arith.mulf %42, %43 : vector<272x256xf32>
    %c1_i32_18 = arith.constant 1 : i32
    %45 = tpu.dynamic_rotate %44 by %c1_i32_18 dim 0 : vector<272x256xf32>, i32 -> vector<272x256xf32>
    %c271_i32_19 = arith.constant 271 : i32
    %46 = tpu.dynamic_rotate %44 by %c271_i32_19 dim 0 : vector<272x256xf32>, i32 -> vector<272x256xf32>
    %47 = vector.extract_strided_slice %4 {offsets = [0, 0], sizes = [1, 256], strides = [1, 1]} : vector<3x256xf32> to vector<1x256xf32>
    %48 = vector.broadcast %47 : vector<1x256xf32> to vector<272x256xf32>
    %49 = arith.mulf %45, %48 : vector<272x256xf32>
    %50 = vector.extract_strided_slice %4 {offsets = [1, 0], sizes = [1, 256], strides = [1, 1]} : vector<3x256xf32> to vector<1x256xf32>
    %51 = vector.broadcast %50 : vector<1x256xf32> to vector<272x256xf32>
    %52 = arith.mulf %44, %51 : vector<272x256xf32>
    %53 = arith.addf %49, %52 : vector<272x256xf32>
    %54 = vector.extract_strided_slice %4 {offsets = [2, 0], sizes = [1, 256], strides = [1, 1]} : vector<3x256xf32> to vector<1x256xf32>
    %55 = vector.broadcast %54 : vector<1x256xf32> to vector<272x256xf32>
    %56 = arith.mulf %46, %55 : vector<272x256xf32>
    %57 = arith.addf %53, %56 : vector<272x256xf32>
    %cst_20 = arith.constant dense<0.000000e+00> : vector<272xf32>
    %58 = vector.multi_reduction <add>, %57, %cst_20 [1] : vector<272x256xf32> to vector<272xf32>
    %59 = vector.shape_cast %58 : vector<272xf32> to vector<272x1xf32>
    %c0_21 = arith.constant 0 : index
    %c0_22 = arith.constant 0 : index
    %60 = vector.load %arg8[%c0_21, %c0_22] : memref<1x1xf32, #tpu.memory_space<vmem>>, vector<1x1xf32>
    %61 = vector.broadcast %60 : vector<1x1xf32> to vector<272x1xf32>
    %62 = arith.addf %59, %61 : vector<272x1xf32>
    %cst_23 = arith.constant 2.000000e-01 : f32
    %63 = vector.broadcast %cst_23 : f32 to vector<272x1xf32>
    %64 = arith.mulf %63, %62 : vector<272x1xf32>
    %65 = arith.maximumf %62, %64 : vector<272x1xf32>
    %c0_24 = arith.constant 0 : index
    %c0_25 = arith.constant 0 : index
    %c0_26 = arith.constant 0 : index
    %66 = vector.load %arg9[%c0_24, %c0_25, %c0_26] : memref<1x272x1xf32, #tpu.memory_space<vmem>>, vector<1x272x1xf32>
    %67 = vector.shape_cast %66 : vector<1x272x1xf32> to vector<272x1xf32>
    %68 = vector.shape_cast %65 : vector<272x1xf32> to vector<1x272x1xf32>
    tpu.vector_store %arg9[%c0_24, %c0_25, %c0_26], %68 {strides = array<i32>} : memref<1x272x1xf32, #tpu.memory_space<vmem>>, vector<1x272x1xf32>,
    return
  }
  func.func @transform_0(%arg0: i32) -> (i32, i32, i32) {
    %c0_i32 = arith.constant 0 : i32
    %c0_i32_0 = arith.constant 0 : i32
    %c0_i32_1 = arith.constant 0 : i32
    return %arg0, %c0_i32, %c0_i32_0 : i32, i32, i32
  }
  func.func @transform_1(%arg0: i32) -> (i32, i32) {
    %c0_i32 = arith.constant 0 : i32
    %c0_i32_0 = arith.constant 0 : i32
    %c0_i32_1 = arith.constant 0 : i32
    return %c0_i32, %c0_i32_0 : i32, i32
  }
  func.func @transform_2(%arg0: i32) -> (i32, i32) {
    %c0_i32 = arith.constant 0 : i32
    %c0_i32_0 = arith.constant 0 : i32
    %c0_i32_1 = arith.constant 0 : i32
    return %c0_i32, %c0_i32_0 : i32, i32
  }
  func.func @transform_3(%arg0: i32) -> (i32, i32) {
    %c0_i32 = arith.constant 0 : i32
    %c0_i32_0 = arith.constant 0 : i32
    %c0_i32_1 = arith.constant 0 : i32
    return %c0_i32, %c0_i32_0 : i32, i32
  }
  func.func @transform_4(%arg0: i32) -> (i32, i32) {
    %c0_i32 = arith.constant 0 : i32
    %c0_i32_0 = arith.constant 0 : i32
    %c0_i32_1 = arith.constant 0 : i32
    return %c0_i32, %c0_i32_0 : i32, i32
  }
  func.func @transform_5(%arg0: i32) -> (i32, i32) {
    %c0_i32 = arith.constant 0 : i32
    %c0_i32_0 = arith.constant 0 : i32
    %c0_i32_1 = arith.constant 0 : i32
    return %c0_i32, %c0_i32_0 : i32, i32
  }
  func.func @transform_6(%arg0: i32) -> (i32, i32) {
    %c0_i32 = arith.constant 0 : i32
    %c0_i32_0 = arith.constant 0 : i32
    %c0_i32_1 = arith.constant 0 : i32
    return %c0_i32, %c0_i32_0 : i32, i32
  }
  func.func @transform_7(%arg0: i32) -> (i32, i32) {
    %c0_i32 = arith.constant 0 : i32
    %c0_i32_0 = arith.constant 0 : i32
    %c0_i32_1 = arith.constant 0 : i32
    return %c0_i32, %c0_i32_0 : i32, i32
  }
  func.func @transform_8(%arg0: i32) -> (i32, i32, i32) {
    %c0_i32 = arith.constant 0 : i32
    %c0_i32_0 = arith.constant 0 : i32
    %c0_i32_1 = arith.constant 0 : i32
    return %arg0, %c0_i32, %c0_i32_0 : i32, i32, i32
  }
}

</mosaic_0001>

<llo_original>
// kernel: tile.8
$region0: #{tile.8}
  #allocation0 [shape = 's32[1]{0}', space=sflag, size = 0x4, scoped, tag = 'scoped memory for tile.8']
  %s0 = inlined_call_operand.vmem [shape: f32[34], index: 0, kind: input, shape index: {}]
  %s1 = inlined_call_operand.vmem [shape: f32[8,34], index: 1, kind: output, shape index: {}]
  // Predicated region
  $region2: #{tile.8} parent=0 // pred_check
    _
  $region3: #{tile.8} parent=0 // pred_check_branch
    %3 = sbr.rel (0) target = $region5
  $region4: #{tile.8} parent=0 // pred_region
    _
  $region5: #{tile.8} parent=0 // pred_fallthru
    _
  %v4 = vld [vmem:[%s0] ss:$0 sm:$0xff]
  %5 = vst [vmem:[%s1] sm:$0xff] %v4

// kernel: tile.0
$region0: #{tile.0}
  %s0 = inlined_call_operand.vmem [shape: f32[8,34], index: 0, kind: input, shape index: {}]
  %s1 = inlined_call_operand.vmem [shape: f32[272,1], index: 1, kind: output, shape index: {}]
  %v2 = vld [vmem:[%s0] sm:$0xff]
  %vm3 = vcmask 7168
  %4 = vst.msk [vmem:[%s1] ss:$34 sm:$0xff] %vm3, %v2
  %v5 = vld [vmem:[%s0] sm:$0xff]
  %6 = vrot.lane.b32.xlu0 %v5, 127
  %v7 = vpop.permute.xlu0 %6
  %vm8 = vcmask 7168
  %s9 = scalar_lea.vmem %s1, 1
  %10 = vst.msk [vmem:[%s9] ss:$34 sm:$0xff] %vm8, %v7
  %v11 = vld [vmem:[%s0] sm:$0xff]
  %12 = vrot.lane.b32.xlu0 %v11, 126
  %v13 = vpop.permute.xlu0 %12
  %vm14 = vcmask 7168
  %s15 = scalar_lea.vmem %s1, 2
  %16 = vst.msk [vmem:[%s15] ss:$34 sm:$0xff] %vm14, %v13
  %v17 = vld [vmem:[%s0] sm:$0xff]
  %18 = vrot.lane.b32.xlu0 %v17, 125
  %v19 = vpop.permute.xlu0 %18
  %vm20 = vcmask 7168
  %s21 = scalar_lea.vmem %s1, 3
  %22 = vst.msk [vmem:[%s21] ss:$34 sm:$0xff] %vm20, %v19
  %v23 = vld [vmem:[%s0] sm:$0xff]
  %24 = vrot.lane.b32.xlu0 %v23, 124
  %v25 = vpop.permute.xlu0 %24
  %vm26 = vcmask 7168
  %s27 = scalar_lea.vmem %s1, 4
  %28 = vst.msk [vmem:[%s27] ss:$34 sm:$0xff] %vm26, %v25
  %v29 = vld [vmem:[%s0] sm:$0xff]
  %30 = vrot.lane.b32.xlu0 %v29, 123
  %v31 = vpop.permute.xlu0 %30
  %vm32 = vcmask 7168
  %s33 = scalar_lea.vmem %s1, 5
  %34 = vst.msk [vmem:[%s33] ss:$34 sm:$0xff] %vm32, %v31
  %v35 = vld [vmem:[%s0] sm:$0xff]
  %36 = vrot.lane.b32.xlu0 %v35, 122
  %v37 = vpop.permute.xlu0 %36
  %vm38 = vcmask 7168
  %s39 = scalar_lea.vmem %s1, 6
  %40 = vst.msk [vmem:[%s39] ss:$34 sm:$0xff] %vm38, %v37
  %v41 = vld [vmem:[%s0] sm:$0xff]
  %42 = vrot.lane.b32.xlu0 %v41, 121
  %v43 = vpop.permute.xlu0 %42
  %vm44 = vcmask 7168
  %s45 = scalar_lea.vmem %s1, 7
  %46 = vst.msk [vmem:[%s45] ss:$34 sm:$0xff] %vm44, %v43
  %v47 = vld [vmem:[%s0] sm:$0xff]
  %48 = vrot.lane.b32.xlu0 %v47, 120
  %v49 = vpop.permute.xlu0 %48
  %vm50 = vcmask 7168
  %s51 = scalar_lea.vmem %s1, 8
  %52 = vst.msk [vmem:[%s51] ss:$34 sm:$0xff] %vm50, %v49
  %v53 = vld [vmem:[%s0] sm:$0xff]
  %54 = vrot.lane.b32.xlu0 %v53, 119
  %v55 = vpop.permute.xlu0 %54
  %vm56 = vcmask 7168
  %s57 = scalar_lea.vmem %s1, 9
  %58 = vst.msk [vmem:[%s57] ss:$34 sm:$0xff] %vm56, %v55
  %v59 = vld [vmem:[%s0] sm:$0xff]
  %60 = vrot.lane.b32.xlu0 %v59, 118
  %v61 = vpop.permute.xlu0 %60
  %vm62 = vcmask 7168
  %s63 = scalar_lea.vmem %s1, 10
  %64 = vst.msk [vmem:[%s63] ss:$34 sm:$0xff] %vm62, %v61
  %v65 = vld [vmem:[%s0] sm:$0xff]
  %66 = vrot.lane.b32.xlu0 %v65, 117
  %v67 = vpop.permute.xlu0 %66
  %vm68 = vcmask 7168
  %s69 = scalar_lea.vmem %s1, 11
  %70 = vst.msk [vmem:[%s69] ss:$34 sm:$0xff] %vm68, %v67
  %v71 = vld [vmem:[%s0] sm:$0xff]
  %72 = vrot.lane.b32.xlu0 %v71, 116
  %v73 = vpop.permute.xlu0 %72
  %vm74 = vcmask 7168
  %s75 = scalar_lea.vmem %s1, 12
  %76 = vst.msk [vmem:[%s75] ss:$34 sm:$0xff] %vm74, %v73
  %v77 = vld [vmem:[%s0] sm:$0xff]
  %78 = vrot.lane.b32.xlu0 %v77, 115
  %v79 = vpop.permute.xlu0 %78
  %vm80 = vcmask 7168
  %s81 = scalar_lea.vmem %s1, 13
  %82 = vst.msk [vmem:[%s81] ss:$34 sm:$0xff] %vm80, %v79
  %v83 = vld [vmem:[%s0] sm:$0xff]
  %84 = vrot.lane.b32.xlu0 %v83, 114
  %v85 = vpop.permute.xlu0 %84
  %vm86 = vcmask 7168
  %s87 = scalar_lea.vmem %s1, 14
  %88 = vst.msk [vmem:[%s87] ss:$34 sm:$0xff] %vm86, %v85
  %v89 = vld [vmem:[%s0] sm:$0xff]
  %90 = vrot.lane.b32.xlu0 %v89, 113
  %v91 = vpop.permute.xlu0 %90
  %vm92 = vcmask 7168
  %s93 = scalar_lea.vmem %s1, 15
  %94 = vst.msk [vmem:[%s93] ss:$34 sm:$0xff] %vm92, %v91
  %v95 = vld [vmem:[%s0] sm:$0xff]
  %96 = vrot.lane.b32.xlu0 %v95, 112
  %v97 = vpop.permute.xlu0 %96
  %vm98 = vcmask 7168
  %s99 = scalar_lea.vmem %s1, 16
  %100 = vst.msk [vmem:[%s99] ss:$34 sm:$0xff] %vm98, %v97
  %v101 = vld [vmem:[%s0] sm:$0xff]
  %102 = vrot.lane.b32.xlu0 %v101, 111
  %v103 = vpop.permute.xlu0 %102
  %vm104 = vcmask 7168
  %s105 = scalar_lea.vmem %s1, 17
  %106 = vst.msk [vmem:[%s105] ss:$34 sm:$0xff] %vm104, %v103
  %v107 = vld.sshfl [vmem:[%s0] sm:$0xff pattern:$0x65432107]
  %108 = vrot.lane.b32.xlu0 %v107, 110
  %v109 = vpop.permute.xlu0 %108
  %vm110 = vcmask 7168
  %s111 = scalar_lea.vmem %s1, 256
  %112 = vst.msk [vmem:[%s111] ss:$-238 sm:$0x3] %vm110, %v109
  %s113 = scalar_lea.vmem %s1, 4294967280
  %114 = vst.msk [vmem:[%s113] ss:$34 sm:$0xfc] %vm110, %v109
  %v115 = vld.sshfl [vmem:[%s0] sm:$0xff pattern:$0x65432107]
  %116 = vrot.lane.b32.xlu0 %v115, 109
  %v117 = vpop.permute.xlu0 %116
  %vm118 = vcmask 7168
  %s119 = scalar_lea.vmem %s1, 257
  %120 = vst.msk [vmem:[%s119] ss:$-238 sm:$0x3] %vm118, %v117
  %s121 = scalar_lea.vmem %s1, 4294967281
  %122 = vst.msk [vmem:[%s121] ss:$34 sm:$0xfc] %vm118, %v117
  %v123 = vld.sshfl [vmem:[%s0] sm:$0xff pattern:$0x54321076]
  %124 = vrot.lane.b32.xlu0 %v123, 108
  %v125 = vpop.permute.xlu0 %124
  %vm126 = vcmask 7168
  %s127 = scalar_lea.vmem %s1, 224
  %128 = vst.msk [vmem:[%s127] ss:$34 sm:$0x3] %vm126, %v125
  %s129 = scalar_lea.vmem %s1, 4294967248
  %130 = vst.msk [vmem:[%s129] ss:$34 sm:$0xfc] %vm126, %v125
  %v131 = vld.sshfl [vmem:[%s0] sm:$0xff pattern:$0x54321076]
  %132 = vrot.lane.b32.xlu0 %v131, 107
  %v133 = vpop.permute.xlu0 %132
  %vm134 = vcmask 7168
  %s135 = scalar_lea.vmem %s1, 225
  %136 = vst.msk [vmem:[%s135] ss:$34 sm:$0x3] %vm134, %v133
  %s137 = scalar_lea.vmem %s1, 4294967249
  %138 = vst.msk [vmem:[%s137] ss:$34 sm:$0xfc] %vm134, %v133
  %v139 = vld.sshfl [vmem:[%s0] sm:$0xff pattern:$0x43210765]
  %140 = vrot.lane.b32.xlu0 %v139, 106
  %v141 = vpop.permute.xlu0 %140
  %vm142 = vcmask 7168
  %s143 = scalar_lea.vmem %s1, 192
  %144 = vst.msk [vmem:[%s143] ss:$34 sm:$0x7] %vm142, %v141
  %s145 = scalar_lea.vmem %s1, 4294967216
  %146 = vst.msk [vmem:[%s145] ss:$34 sm:$0xf8] %vm142, %v141
  %v147 = vld.sshfl [vmem:[%s0] sm:$0xff pattern:$0x43210765]
  %148 = vrot.lane.b32.xlu0 %v147, 105
  %v149 = vpop.permute.xlu0 %148
  %vm150 = vcmask 7168
  %s151 = scalar_lea.vmem %s1, 193
  %152 = vst.msk [vmem:[%s151] ss:$34 sm:$0x7] %vm150, %v149
  %s153 = scalar_lea.vmem %s1, 4294967217
  %154 = vst.msk [vmem:[%s153] ss:$34 sm:$0xf8] %vm150, %v149
  %v155 = vld.sshfl [vmem:[%s0] sm:$0xff pattern:$0x32107654]
  %156 = vrot.lane.b32.xlu0 %v155, 104
  %v157 = vpop.permute.xlu0 %156
  %vm158 = vcmask 7168
  %s159 = scalar_lea.vmem %s1, 160
  %160 = vst.msk [vmem:[%s159] ss:$34 sm:$0xf] %vm158, %v157
  %s161 = scalar_lea.vmem %s1, 4294967184
  %162 = vst.msk [vmem:[%s161] ss:$34 sm:$0xf0] %vm158, %v157
  %v163 = vld.sshfl [vmem:[%s0] sm:$0xff pattern:$0x32107654]
  %164 = vrot.lane.b32.xlu0 %v163, 103
  %v165 = vpop.permute.xlu0 %164
  %vm166 = vcmask 7168
  %s167 = scalar_lea.vmem %s1, 161
  %168 = vst.msk [vmem:[%s167] ss:$34 sm:$0xf] %vm166, %v165
  %s169 = scalar_lea.vmem %s1, 4294967185
  %170 = vst.msk [vmem:[%s169] ss:$34 sm:$0xf0] %vm166, %v165
  %v171 = vld.sshfl [vmem:[%s0] sm:$0xff pattern:$0x21076543]
  %172 = vrot.lane.b32.xlu0 %v171, 102
  %v173 = vpop.permute.xlu0 %172
  %vm174 = vcmask 7168
  %s175 = scalar_lea.vmem %s1, 128
  %176 = vst.msk [vmem:[%s175] ss:$34 sm:$0x1f] %vm174, %v173
  %s177 = scalar_lea.vmem %s1, 4294967152
  %178 = vst.msk [vmem:[%s177] ss:$34 sm:$0xe0] %vm174, %v173
  %v179 = vld.sshfl [vmem:[%s0] sm:$0xff pattern:$0x21076543]
  %180 = vrot.lane.b32.xlu0 %v179, 101
  %v181 = vpop.permute.xlu0 %180
  %vm182 = vcmask 7168
  %s183 = scalar_lea.vmem %s1, 129
  %184 = vst.msk [vmem:[%s183] ss:$34 sm:$0x1f] %vm182, %v181
  %s185 = scalar_lea.vmem %s1, 4294967153
  %186 = vst.msk [vmem:[%s185] ss:$34 sm:$0xe0] %vm182, %v181
  %v187 = vld.sshfl [vmem:[%s0] sm:$0xff pattern:$0x10765432]
  %188 = vrot.lane.b32.xlu0 %v187, 100
  %v189 = vpop.permute.xlu0 %188
  %vm190 = vcmask 7168
  %s191 = scalar_lea.vmem %s1, 96
  %192 = vst.msk [vmem:[%s191] ss:$34 sm:$0x3f] %vm190, %v189
  %s193 = scalar_lea.vmem %s1, 4294967120
  %194 = vst.msk [vmem:[%s193] ss:$34 sm:$0xc0] %vm190, %v189
  %v195 = vld.sshfl [vmem:[%s0] sm:$0xff pattern:$0x10765432]
  %196 = vrot.lane.b32.xlu0 %v195, 99
  %v197 = vpop.permute.xlu0 %196
  %vm198 = vcmask 7168
  %s199 = scalar_lea.vmem %s1, 97
  %200 = vst.msk [vmem:[%s199] ss:$34 sm:$0x3f] %vm198, %v197
  %s201 = scalar_lea.vmem %s1, 4294967121
  %202 = vst.msk [vmem:[%s201] ss:$34 sm:$0xc0] %vm198, %v197
  %v203 = vld.sshfl [vmem:[%s0] sm:$0xff pattern:$0x7654321]
  %204 = vrot.lane.b32.xlu0 %v203, 98
  %v205 = vpop.permute.xlu0 %204
  %vm206 = vcmask 7168
  %s207 = scalar_lea.vmem %s1, 64
  %208 = vst.msk [vmem:[%s207] ss:$34 sm:$0x7f] %vm206, %v205
  %s209 = scalar_lea.vmem %s1, 23
  %210 = vst.msk [vmem:[%s209] sm:$0x80] %vm206, %v205
  %v211 = vld.sshfl [vmem:[%s0] sm:$0xff pattern:$0x7654321]
  %212 = vrot.lane.b32.xlu0 %v211, 97
  %v213 = vpop.permute.xlu0 %212
  %vm214 = vcmask 7168
  %s215 = scalar_lea.vmem %s1, 65
  %216 = vst.msk [vmem:[%s215] ss:$34 sm:$0x7f] %vm214, %v213
  %s217 = scalar_lea.vmem %s1, 24
  %218 = vst.msk [vmem:[%s217] sm:$0x80] %vm214, %v213
  %v219 = vld [vmem:[%s0] sm:$0xff]
  %220 = vrot.lane.b32.xlu0 %v219, 96
  %v221 = vpop.permute.xlu0 %220
  %vm222 = vcmask 7168
  %s223 = scalar_lea.vmem %s1, 32
  %224 = vst.msk [vmem:[%s223] ss:$34 sm:$0xff] %vm222, %v221
  %v225 = vld [vmem:[%s0] sm:$0xff]
  %226 = vrot.lane.b32.xlu0 %v225, 95
  %v227 = vpop.permute.xlu0 %226
  %vm228 = vcmask 7168
  %s229 = scalar_lea.vmem %s1, 33
  %230 = vst.msk [vmem:[%s229] ss:$34 sm:$0xff] %vm228, %v227

// kernel: iclabel_autocorr_forward.1
$region0: #{iclabel_autocorr_forward.1}
  #allocation0 [shape = 'u32[]', space=smem, size = 0x4, offset = 0x4, fixed_abs, tag = 'smem constant byte address 0x4 - core index']
  #allocation1 [shape = 'u32[144,128]{1,0:T(1,128)}', space=vmem, size = 0x12000, scoped, tag = 'internal scratch']
  #allocation2 [shape = 'f32[1,1]{1,0:T(1,128)S(1)}', space=vmem, size = 0x200, scoped, tag = 'scoped memory for iclabel_autocorr_forward.1']
  %s0 = inlined_call_operand.vmem [shape: f32[2,272,1], index: 0, kind: input, shape index: {}]
  %s1 = inlined_call_operand.vmem [shape: f32[272,1], index: 1, kind: input, shape index: {}]
  %s2 = inlined_call_operand.vmem [shape: f32[3,128], index: 2, kind: input, shape index: {}]
  %s3 = inlined_call_operand.vmem [shape: f32[1,128], index: 3, kind: input, shape index: {}]
  %s4 = inlined_call_operand.vmem [shape: bf16[384,256], index: 4, kind: input, shape index: {}]
  %s5 = inlined_call_operand.vmem [shape: f32[1,256], index: 5, kind: input, shape index: {}]
  %s6 = inlined_call_operand.vmem [shape: f32[3,256], index: 6, kind: input, shape index: {}]
  %s7 = inlined_call_operand.<no memory space> [shape: f32[1,1], index: 7, kind: input, shape index: {}]
  %s8 = inlined_call_operand.vmem [shape: f32[2,272,1], index: 8, kind: output, shape index: {}]
  %s9 = sld [smem:[#allocation0]]
  $region65: #{iclabel_autocorr_forward.1} parent=0
    _
  %s11 = ssub.s32 1, %s9
  %s12 = scalar_select 0, %s11, %s9
  %v13 = vstv %s7
  %14 = vst [vmem:[#allocation2] sm:$0x1] %v13
  loop: start=0, step=1, limit=4
  $region2: #{iclabel_autocorr_forward.1} parent=0 // loop_pre_header
    _
  $region3: #{iclabel_autocorr_forward.1} parent=0 // loop_header
    %s16 = sphi 0, %s20
    %p17 = scmp.ge.s32.totalorder %s16, 4
    %s26 = sphi 0, %s28
    %s29 = sphi 0, %s26
    %s30 = sphi 0, %s29
    %s46 = sphi 0, %s30
    %s50 = sphi 0, %s50
    %s52 = sphi 0, %s50
    %s53 = sphi 0, %s52
    %s67 = sphi 0, %s53
    %s71 = sphi 0, %s71
    %s73 = sphi 0, %s71
    %s74 = sphi 0, %s73
    %s88 = sphi 0, %s74
    %s92 = sphi 0, %s92
    %s94 = sphi 0, %s92
    %s95 = sphi 0, %s94
    %s109 = sphi 0, %s95
    %s113 = sphi 0, %s113
    %s115 = sphi 0, %s113
    %s116 = sphi 0, %s115
    %s130 = sphi 0, %s116
    %s134 = sphi 0, %s134
    %s136 = sphi 0, %s134
    %s137 = sphi 0, %s136
    %s151 = sphi 0, %s137
    %s155 = sphi 0, %s155
    %s157 = sphi 0, %s155
    %s158 = sphi 0, %s157
    %s172 = sphi 0, %s158
    %s176 = sphi 0, %s176
    %s178 = sphi 0, %s176
    %s179 = sphi 0, %s178
    %s193 = sphi 0, %s179
    %s199 = sphi 0, %s201
    %s202 = sphi 0, %s199
    %s203 = sphi 0, %s202
    %s219 = sphi 0, %s203
  $region4: #{iclabel_autocorr_forward.1} parent=0 // loop_header_branch
    %19 = sbr.rel (%p17) target = $region8
  $region5: #{iclabel_autocorr_forward.1} parent=0 // loop_body
    %s21 = ssub.s32 %s16, 1
    %s22 = ssub.s32 %s16, 2
    %s23 = sadd.s32 %s16, 1
    %s24 = ssub.s32 %s16, %s23
    %p25 = scmp.eq.s32.totalorder %s24, 0
    %s27 = sadd.s32 %s26, 1
    %s28 = scalar_select %p25, %s26, %s27
    %p31 = pneg %p25
    %p32 = scmp.eq.s32.totalorder %s16, 1
    %p33 = por %p31, %p32
    %p34 = scmp.ne.s32.totalorder %s26, %s29
    %p35 = scmp.eq.s32.totalorder %s16, 0
    %p36 = por %p34, %p35
    %p37 = scmp.ne.s32.totalorder %s26, %s29
    %p38 = scmp.eq.s32.totalorder %s21, 1
    %p39 = por %p37, %p38
    %p40 = scmp.ne.s32.totalorder %s29, %s30
    %p41 = scmp.eq.s32.totalorder %s21, 0
    %p42 = por %p40, %p41
    %p43 = scmp.ne.s32.totalorder %s29, %s30
    %p44 = scmp.eq.s32.totalorder %s22, 1
    %p45 = por %p43, %p44
    %p47 = scmp.ne.s32.totalorder %s30, %s46
    %p48 = scmp.eq.s32.totalorder %s22, 0
    %p49 = por %p47, %p48
    %s51 = sadd.s32 %s50, 1
    %p54 = scmp.eq.s32.totalorder %s16, 1
    %p55 = scmp.ne.s32.totalorder %s50, %s52
    %p56 = scmp.eq.s32.totalorder %s16, 0
    %p57 = por %p55, %p56
    %p58 = scmp.ne.s32.totalorder %s50, %s52
    %p59 = scmp.eq.s32.totalorder %s21, 1
    %p60 = por %p58, %p59
    %p61 = scmp.ne.s32.totalorder %s52, %s53
    %p62 = scmp.eq.s32.totalorder %s21, 0
    %p63 = por %p61, %p62
    %p64 = scmp.ne.s32.totalorder %s52, %s53
    %p65 = scmp.eq.s32.totalorder %s22, 1
    %p66 = por %p64, %p65
    %p68 = scmp.ne.s32.totalorder %s53, %s67
    %p69 = scmp.eq.s32.totalorder %s22, 0
    %p70 = por %p68, %p69
    %s72 = sadd.s32 %s71, 1
    %p75 = scmp.eq.s32.totalorder %s16, 1
    %p76 = scmp.ne.s32.totalorder %s71, %s73
    %p77 = scmp.eq.s32.totalorder %s16, 0
    %p78 = por %p76, %p77
    %p79 = scmp.ne.s32.totalorder %s71, %s73
    %p80 = scmp.eq.s32.totalorder %s21, 1
    %p81 = por %p79, %p80
    %p82 = scmp.ne.s32.totalorder %s73, %s74
    %p83 = scmp.eq.s32.totalorder %s21, 0
    %p84 = por %p82, %p83
    %p85 = scmp.ne.s32.totalorder %s73, %s74
    %p86 = scmp.eq.s32.totalorder %s22, 1
    %p87 = por %p85, %p86
    %p89 = scmp.ne.s32.totalorder %s74, %s88
    %p90 = scmp.eq.s32.totalorder %s22, 0
    %p91 = por %p89, %p90
    %s93 = sadd.s32 %s92, 1
    %p96 = scmp.eq.s32.totalorder %s16, 1
    %p97 = scmp.ne.s32.totalorder %s92, %s94
    %p98 = scmp.eq.s32.totalorder %s16, 0
    %p99 = por %p97, %p98
    %p100 = scmp.ne.s32.totalorder %s92, %s94
    %p101 = scmp.eq.s32.totalorder %s21, 1
    %p102 = por %p100, %p101
    %p103 = scmp.ne.s32.totalorder %s94, %s95
    %p104 = scmp.eq.s32.totalorder %s21, 0
    %p105 = por %p103, %p104
    %p106 = scmp.ne.s32.totalorder %s94, %s95
    %p107 = scmp.eq.s32.totalorder %s22, 1
    %p108 = por %p106, %p107
    %p110 = scmp.ne.s32.totalorder %s95, %s109
    %p111 = scmp.eq.s32.totalorder %s22, 0
    %p112 = por %p110, %p111
    %s114 = sadd.s32 %s113, 1
    %p117 = scmp.eq.s32.totalorder %s16, 1
    %p118 = scmp.ne.s32.totalorder %s113, %s115
    %p119 = scmp.eq.s32.totalorder %s16, 0
    %p120 = por %p118, %p119
    %p121 = scmp.ne.s32.totalorder %s113, %s115
    %p122 = scmp.eq.s32.totalorder %s21, 1
    %p123 = por %p121, %p122
    %p124 = scmp.ne.s32.totalorder %s115, %s116
    %p125 = scmp.eq.s32.totalorder %s21, 0
    %p126 = por %p124, %p125
    %p127 = scmp.ne.s32.totalorder %s115, %s116
    %p128 = scmp.eq.s32.totalorder %s22, 1
    %p129 = por %p127, %p128
    %p131 = scmp.ne.s32.totalorder %s116, %s130
    %p132 = scmp.eq.s32.totalorder %s22, 0
    %p133 = por %p131, %p132
    %s135 = sadd.s32 %s134, 1
    %p138 = scmp.eq.s32.totalorder %s16, 1
    %p139 = scmp.ne.s32.totalorder %s134, %s136
    %p140 = scmp.eq.s32.totalorder %s16, 0
    %p141 = por %p139, %p140
    %p142 = scmp.ne.s32.totalorder %s134, %s136
    %p143 = scmp.eq.s32.totalorder %s21, 1
    %p144 = por %p142, %p143
    %p145 = scmp.ne.s32.totalorder %s136, %s137
    %p146 = scmp.eq.s32.totalorder %s21, 0
    %p147 = por %p145, %p146
    %p148 = scmp.ne.s32.totalorder %s136, %s137
    %p149 = scmp.eq.s32.totalorder %s22, 1
    %p150 = por %p148, %p149
    %p152 = scmp.ne.s32.totalorder %s137, %s151
    %p153 = scmp.eq.s32.totalorder %s22, 0
    %p154 = por %p152, %p153
    %s156 = sadd.s32 %s155, 1
    %p159 = scmp.eq.s32.totalorder %s16, 1
    %p160 = scmp.ne.s32.totalorder %s155, %s157
    %p161 = scmp.eq.s32.totalorder %s16, 0
    %p162 = por %p160, %p161
    %p163 = scmp.ne.s32.totalorder %s155, %s157
    %p164 = scmp.eq.s32.totalorder %s21, 1
    %p165 = por %p163, %p164
    %p166 = scmp.ne.s32.totalorder %s157, %s158
    %p167 = scmp.eq.s32.totalorder %s21, 0
    %p168 = por %p166, %p167
    %p169 = scmp.ne.s32.totalorder %s157, %s158
    %p170 = scmp.eq.s32.totalorder %s22, 1
    %p171 = por %p169, %p170
    %p173 = scmp.ne.s32.totalorder %s158, %s172
    %p174 = scmp.eq.s32.totalorder %s22, 0
    %p175 = por %p173, %p174
    %s177 = sadd.s32 %s176, 1
    %p180 = scmp.eq.s32.totalorder %s16, 1
    %p181 = scmp.ne.s32.totalorder %s176, %s178
    %p182 = scmp.eq.s32.totalorder %s16, 0
    %p183 = por %p181, %p182
    %p184 = scmp.ne.s32.totalorder %s176, %s178
    %p185 = scmp.eq.s32.totalorder %s21, 1
    %p186 = por %p184, %p185
    %p187 = scmp.ne.s32.totalorder %s178, %s179
    %p188 = scmp.eq.s32.totalorder %s21, 0
    %p189 = por %p187, %p188
    %p190 = scmp.ne.s32.totalorder %s178, %s179
    %p191 = scmp.eq.s32.totalorder %s22, 1
    %p192 = por %p190, %p191
    %p194 = scmp.ne.s32.totalorder %s179, %s193
    %p195 = scmp.eq.s32.totalorder %s22, 0
    %p196 = por %p194, %p195
    %s197 = ssub.s32 %s16, %s23
    %p198 = scmp.eq.s32.totalorder %s197, 0
    %s200 = sadd.s32 %s199, 1
    %s201 = scalar_select %p198, %s199, %s200
    %p204 = pneg %p198
    %p205 = scmp.eq.s32.totalorder %s16, 1
    %p206 = por %p204, %p205
    %p207 = scmp.ne.s32.totalorder %s199, %s202
    %p208 = scmp.eq.s32.totalorder %s16, 0
    %p209 = por %p207, %p208
    %p210 = scmp.ne.s32.totalorder %s199, %s202
    %p211 = scmp.eq.s32.totalorder %s21, 1
    %p212 = por %p210, %p211
    %p213 = scmp.ne.s32.totalorder %s202, %s203
    %p214 = scmp.eq.s32.totalorder %s21, 0
    %p215 = por %p213, %p214
    %p216 = scmp.ne.s32.totalorder %s202, %s203
    %p217 = scmp.eq.s32.totalorder %s22, 1
    %p218 = por %p216, %p217
    %p220 = scmp.ne.s32.totalorder %s203, %s219
    %p221 = scmp.eq.s32.totalorder %s22, 0
    %p222 = por %p220, %p221
    %p223 = scmp.le.s32.totalorder 1, %s16
    %p224 = scmp.lt.s32.totalorder %s16, 3
    %p225 = pnand %p223, %p224
    %p226 = pneg %p225
    // Predicated region
    $region9: #{iclabel_autocorr_forward.1} parent=5 // pred_check
      _
    $region10: #{iclabel_autocorr_forward.1} parent=5 // pred_check_branch
      %228 = sbr.rel (%p225) target = $region12
    $region11: #{iclabel_autocorr_forward.1} parent=5 // pred_region
      %s229 = ssub.s32 %s16, 1
      // Predicated region
      $region13: #{iclabel_autocorr_forward.1} parent=11 // pred_check
        %p230 = pneg %p63
      $region14: #{iclabel_autocorr_forward.1} parent=11 // pred_check_branch
        %232 = sbr.rel (%p230) target = $region16
      $region15: #{iclabel_autocorr_forward.1} parent=11 // pred_region
        _
      $region16: #{iclabel_autocorr_forward.1} parent=11 // pred_fallthru
        _
      // Predicated region
      $region17: #{iclabel_autocorr_forward.1} parent=11 // pred_check
        %p233 = pneg %p84
      $region18: #{iclabel_autocorr_forward.1} parent=11 // pred_check_branch
        %235 = sbr.rel (%p233) target = $region20
      $region19: #{iclabel_autocorr_forward.1} parent=11 // pred_region
        _
      $region20: #{iclabel_autocorr_forward.1} parent=11 // pred_fallthru
        _
      // Predicated region
      $region21: #{iclabel_autocorr_forward.1} parent=11 // pred_check
        %p236 = pneg %p105
      $region22: #{iclabel_autocorr_forward.1} parent=11 // pred_check_branch
        %238 = sbr.rel (%p236) target = $region24
      $region23: #{iclabel_autocorr_forward.1} parent=11 // pred_region
        _
      $region24: #{iclabel_autocorr_forward.1} parent=11 // pred_fallthru
        _
      // Predicated region
      $region25: #{iclabel_autocorr_forward.1} parent=11 // pred_check
        %p239 = pneg %p126
      $region26: #{iclabel_autocorr_forward.1} parent=11 // pred_check_branch
        %241 = sbr.rel (%p239) target = $region28
      $region27: #{iclabel_autocorr_forward.1} parent=11 // pred_region
        _
      $region28: #{iclabel_autocorr_forward.1} parent=11 // pred_fallthru
        _
      // Predicated region
      $region29: #{iclabel_autocorr_forward.1} parent=11 // pred_check
        %p242 = pneg %p147
      $region30: #{iclabel_autocorr_forward.1} parent=11 // pred_check_branch
        %244 = sbr.rel (%p242) target = $region32
      $region31: #{iclabel_autocorr_forward.1} parent=11 // pred_region
        _
      $region32: #{iclabel_autocorr_forward.1} parent=11 // pred_fallthru
        _
      // Predicated region
      $region33: #{iclabel_autocorr_forward.1} parent=11 // pred_check
        %p245 = pneg %p168
      $region34: #{iclabel_autocorr_forward.1} parent=11 // pred_check_branch
        %247 = sbr.rel (%p245) target = $region36
      $region35: #{iclabel_autocorr_forward.1} parent=11 // pred_region
        _
      $region36: #{iclabel_autocorr_forward.1} parent=11 // pred_fallthru
        _
      // Predicated region
      $region37: #{iclabel_autocorr_forward.1} parent=11 // pred_check
        %p248 = pneg %p189
      $region38: #{iclabel_autocorr_forward.1} parent=11 // pred_check_branch
        %250 = sbr.rel (%p248) target = $region40
      $region39: #{iclabel_autocorr_forward.1} parent=11 // pred_region
        _
      $region40: #{iclabel_autocorr_forward.1} parent=11 // pred_fallthru
        _
    $region12: #{iclabel_autocorr_forward.1} parent=5 // pred_fallthru
      _
    %p251 = scmp.lt.s32.totalorder %s16, 2
    // Predicated region
    $region41: #{iclabel_autocorr_forward.1} parent=5 // pred_check
      %p252 = pneg %p251
    $region42: #{iclabel_autocorr_forward.1} parent=5 // pred_check_branch
      %254 = sbr.rel (%p252) target = $region44
    $region43: #{iclabel_autocorr_forward.1} parent=5 // pred_region
      // Predicated region
      $region45: #{iclabel_autocorr_forward.1} parent=43 // pred_check
        %p255 = pneg %p36
      $region46: #{iclabel_autocorr_forward.1} parent=43 // pred_check_branch
        %257 = sbr.rel (%p255) target = $region48
      $region47: #{iclabel_autocorr_forward.1} parent=43 // pred_region
        %p258 = scmp.lt.s32.totalorder %s16, 1
        %s259 = scalar_select %p258, %s16, 1
        %s260 = smul.addr %s259, 34
        %s261 = smul.addr %s260, 8
        %s262 = scalar_lea.vmem %s0, %s261
      $region48: #{iclabel_autocorr_forward.1} parent=43 // pred_fallthru
        _
    $region44: #{iclabel_autocorr_forward.1} parent=5 // pred_fallthru
      _
    %p263 = scmp.le.s32.totalorder 1, %s16
    %p264 = scmp.lt.s32.totalorder %s16, 3
    %p265 = pnand %p263, %p264
    %p266 = pneg %p265
    // Predicated region
    $region49: #{iclabel_autocorr_forward.1} parent=5 // pred_check
      _
    $region50: #{iclabel_autocorr_forward.1} parent=5 // pred_check_branch
      %268 = sbr.rel (%p265) target = $region52
    $region51: #{iclabel_autocorr_forward.1} parent=5 // pred_region
      %s269 = ssub.s32 %s16, 1
      %p270 = scmp.lt.s32.totalorder %s21, 1
      %s271 = scalar_select %p270, %s21, 1
      %s272 = smul.addr %s271, 34
      %s273 = smul.addr %s272, 8
      %s274 = scalar_lea.vmem %s0, %s273
      %p275 = pneg %p42
      %p276 = pneg %p39
      %p277 = pneg %p63
      %p278 = pneg %p60
      %p279 = pneg %p84
      %p280 = pneg %p81
      %p281 = pneg %p105
      %p282 = pneg %p102
      %p283 = pneg %p126
      %p284 = pneg %p123
      %p285 = pneg %p147
      %p286 = pneg %p144
      %p287 = pneg %p168
      %p288 = pneg %p165
      %p289 = pneg %p189
      %p290 = pneg %p186
      %p291 = pneg %p215
      %p292 = pneg %p212
      %p293 = scmp.lt.s32.totalorder %s21, 1
      %s294 = scalar_select %p293, %s21, 1
      %s295 = smul.addr %s294, 34
      %s296 = smul.addr %s295, 8
      %s297 = scalar_lea.vmem %s8, %s296
      %p298 = scmp.lt.s32.totalorder %s21, 1
      %s299 = scalar_select %p298, %s21, 1
      %s300 = smul.addr %s299, 34
      %s301 = smul.addr %s300, 8
      %s302 = scalar_lea.vmem %s0, %s301
      %p303 = scmp.lt.s32.totalorder %s21, 1
      %s304 = scalar_select %p303, %s21, 1
      %s305 = smul.addr %s304, 34
      %s306 = smul.addr %s305, 8
      %s307 = scalar_lea.vmem %s8, %s306
      %v309 = vld [vmem:[%s302] sm:$0xff]
      %v310 = vld [vmem:[%s302 + $0x8] sm:$0xff]
      %v311 = vld [vmem:[%s302 + $0x10] sm:$0xff]
      %v312 = vld [vmem:[%s302 + $0x18] sm:$0xff]
      %v313 = vld [vmem:[%s302 + $0x20] sm:$0xff]
      %v314 = vld [vmem:[%s302 + $0x28] sm:$0xff]
      %v315 = vld [vmem:[%s302 + $0x30] sm:$0xff]
      %v316 = vld [vmem:[%s302 + $0x38] sm:$0xff]
      %v317 = vld [vmem:[%s302 + $0x40] sm:$0xff]
      %v318 = vld [vmem:[%s302 + $0x48] sm:$0xff]
      %v319 = vld [vmem:[%s302 + $0x50] sm:$0xff]
      %v320 = vld [vmem:[%s302 + $0x58] sm:$0xff]
      %v321 = vld [vmem:[%s302 + $0x60] sm:$0xff]
      %v322 = vld [vmem:[%s302 + $0x68] sm:$0xff]
      %v323 = vld [vmem:[%s302 + $0x70] sm:$0xff]
      %v324 = vld [vmem:[%s302 + $0x78] sm:$0xff]
      %v325 = vld [vmem:[%s302 + $0x80] sm:$0xff]
      %v326 = vld [vmem:[%s302 + $0x88] sm:$0xff]
      %v327 = vld [vmem:[%s302 + $0x90] sm:$0xff]
      %v328 = vld [vmem:[%s302 + $0x98] sm:$0xff]
      %v329 = vld [vmem:[%s302 + $0xa0] sm:$0xff]
      %v330 = vld [vmem:[%s302 + $0xa8] sm:$0xff]
      %v331 = vld [vmem:[%s302 + $0xb0] sm:$0xff]
      %v332 = vld [vmem:[%s302 + $0xb8] sm:$0xff]
      %v333 = vld [vmem:[%s302 + $0xc0] sm:$0xff]
      %v334 = vld [vmem:[%s302 + $0xc8] sm:$0xff]
      %v335 = vld [vmem:[%s302 + $0xd0] sm:$0xff]
      %v336 = vld [vmem:[%s302 + $0xd8] sm:$0xff]
      %v337 = vld [vmem:[%s302 + $0xe0] sm:$0xff]
      %v338 = vld [vmem:[%s302 + $0xe8] sm:$0xff]
      %v339 = vld [vmem:[%s302 + $0xf0] sm:$0xff]
      %v340 = vld [vmem:[%s302 + $0xf8] sm:$0xff]
      %v341 = vld [vmem:[%s302 + $0x100] sm:$0xff]
      %v342 = vld [vmem:[%s302 + $0x108] sm:$0xff]
      %v343 = vld [vmem:[%s1] sm:$0xff]
      %v344 = vld [vmem:[%s1 + $0x8] sm:$0xff]
      %v345 = vld [vmem:[%s1 + $0x10] sm:$0xff]
      %v346 = vld [vmem:[%s1 + $0x18] sm:$0xff]
      %v347 = vld [vmem:[%s1 + $0x20] sm:$0xff]
      %v348 = vld [vmem:[%s1 + $0x28] sm:$0xff]
      %v349 = vld [vmem:[%s1 + $0x30] sm:$0xff]
      %v350 = vld [vmem:[%s1 + $0x38] sm:$0xff]
      %v351 = vld [vmem:[%s1 + $0x40] sm:$0xff]
      %v352 = vld [vmem:[%s1 + $0x48] sm:$0xff]
      %v353 = vld [vmem:[%s1 + $0x50] sm:$0xff]
      %v354 = vld [vmem:[%s1 + $0x58] sm:$0xff]
      %v355 = vld [vmem:[%s1 + $0x60] sm:$0xff]
      %v356 = vld [vmem:[%s1 + $0x68] sm:$0xff]
      %v357 = vld [vmem:[%s1 + $0x70] sm:$0xff]
      %v358 = vld [vmem:[%s1 + $0x78] sm:$0xff]
      %v359 = vld [vmem:[%s1 + $0x80] sm:$0xff]
      %v360 = vld [vmem:[%s1 + $0x88] sm:$0xff]
      %v361 = vld [vmem:[%s1 + $0x90] sm:$0xff]
      %v362 = vld [vmem:[%s1 + $0x98] sm:$0xff]
      %v363 = vld [vmem:[%s1 + $0xa0] sm:$0xff]
      %v364 = vld [vmem:[%s1 + $0xa8] sm:$0xff]
      %v365 = vld [vmem:[%s1 + $0xb0] sm:$0xff]
      %v366 = vld [vmem:[%s1 + $0xb8] sm:$0xff]
      %v367 = vld [vmem:[%s1 + $0xc0] sm:$0xff]
      %v368 = vld [vmem:[%s1 + $0xc8] sm:$0xff]
      %v369 = vld [vmem:[%s1 + $0xd0] sm:$0xff]
      %v370 = vld [vmem:[%s1 + $0xd8] sm:$0xff]
      %v371 = vld [vmem:[%s1 + $0xe0] sm:$0xff]
      %v372 = vld [vmem:[%s1 + $0xe8] sm:$0xff]
      %v373 = vld [vmem:[%s1 + $0xf0] sm:$0xff]
      %v374 = vld [vmem:[%s1 + $0xf8] sm:$0xff]
      %v375 = vld [vmem:[%s1 + $0x100] sm:$0xff]
      %v376 = vld [vmem:[%s1 + $0x108] sm:$0xff]
      %v377 = vld [vmem:[%s2] sm:$0x7]
      %v378 = vld [vmem:[%s6] sm:$0x77]
      %v379 = vrot.slane %v309, 7
      %v380 = vrot.slane %v310, 7
      %v381 = vrot.slane %v311, 7
      %v382 = vrot.slane %v312, 7
      %v383 = vrot.slane %v313, 7
      %v384 = vrot.slane %v314, 7
      %v385 = vrot.slane %v315, 7
      %v386 = vrot.slane %v316, 7
      %v387 = vrot.slane %v317, 7
      %v388 = vrot.slane %v318, 7
      %v389 = vrot.slane %v319, 7
      %v390 = vrot.slane %v320, 7
      %v391 = vrot.slane %v321, 7
      %v392 = vrot.slane %v322, 7
      %v393 = vrot.slane %v323, 7
      %v394 = vrot.slane %v324, 7
      %v395 = vrot.slane %v325, 7
      %v396 = vrot.slane %v326, 7
      %v397 = vrot.slane %v327, 7
      %v398 = vrot.slane %v328, 7
      %v399 = vrot.slane %v329, 7
      %v400 = vrot.slane %v330, 7
      %v401 = vrot.slane %v331, 7
      %v402 = vrot.slane %v332, 7
      %v403 = vrot.slane %v333, 7
      %v404 = vrot.slane %v334, 7
      %v405 = vrot.slane %v335, 7
      %v406 = vrot.slane %v336, 7
      %v407 = vrot.slane %v337, 7
      %v408 = vrot.slane %v338, 7
      %v409 = vrot.slane %v339, 7
      %v410 = vrot.slane %v340, 7
      %v411 = vrot.slane %v341, 7
      %v412 = vrot.slane %v342, 7
      %v413 = vlaneseq
      %v414 = vshrl.u32 %v413, 7
      %vm415 = vcmp.lt.s32.totalorder %v414, 1
      %v416 = vsel %vm415, %v411, %v412
      %v417 = vsel %vm415, %v410, %v411
      %v418 = vsel %vm415, %v409, %v410
      %v419 = vsel %vm415, %v408, %v409
      %v420 = vsel %vm415, %v407, %v408
      %v421 = vsel %vm415, %v406, %v407
      %v422 = vsel %vm415, %v405, %v406
      %v423 = vsel %vm415, %v404, %v405
      %v424 = vsel %vm415, %v403, %v404
      %v425 = vsel %vm415, %v402, %v403
      %v426 = vsel %vm415, %v401, %v402
      %v427 = vsel %vm415, %v400, %v401
      %v428 = vsel %vm415, %v399, %v400
      %v429 = vsel %vm415, %v398, %v399
      %v430 = vsel %vm415, %v397, %v398
      %v431 = vsel %vm415, %v396, %v397
      %v432 = vsel %vm415, %v395, %v396
      %v433 = vsel %vm415, %v394, %v395
      %v434 = vsel %vm415, %v393, %v394
      %v435 = vsel %vm415, %v392, %v393
      %v436 = vsel %vm415, %v391, %v392
      %v437 = vsel %vm415, %v390, %v391
      %v438 = vsel %vm415, %v389, %v390
      %v439 = vsel %vm415, %v388, %v389
      %v440 = vsel %vm415, %v387, %v388
      %v441 = vsel %vm415, %v386, %v387
      %v442 = vsel %vm415, %v385, %v386
      %v443 = vsel %vm415, %v384, %v385
      %v444 = vsel %vm415, %v383, %v384
      %v445 = vsel %vm415, %v382, %v383
      %v446 = vsel %vm415, %v381, %v382
      %v447 = vsel %vm415, %v380, %v381
      %v448 = vsel %vm415, %v379, %v380
      %v449 = vsel %vm415, %v412, %v379
      %v450 = vrot.slane %v309, 1
      %v451 = vrot.slane %v310, 1
      %v452 = vrot.slane %v311, 1
      %v453 = vrot.slane %v312, 1
      %v454 = vrot.slane %v313, 1
      %v455 = vrot.slane %v314, 1
      %v456 = vrot.slane %v315, 1
      %v457 = vrot.slane %v316, 1
      %v458 = vrot.slane %v317, 1
      %v459 = vrot.slane %v318, 1
      %v460 = vrot.slane %v319, 1
      %v461 = vrot.slane %v320, 1
      %v462 = vrot.slane %v321, 1
      %v463 = vrot.slane %v322, 1
      %v464 = vrot.slane %v323, 1
      %v465 = vrot.slane %v324, 1
      %v466 = vrot.slane %v325, 1
      %v467 = vrot.slane %v326, 1
      %v468 = vrot.slane %v327, 1
      %v469 = vrot.slane %v328, 1
      %v470 = vrot.slane %v329, 1
      %v471 = vrot.slane %v330, 1
      %v472 = vrot.slane %v331, 1
      %v473 = vrot.slane %v332, 1
      %v474 = vrot.slane %v333, 1
      %v475 = vrot.slane %v334, 1
      %v476 = vrot.slane %v335, 1
      %v477 = vrot.slane %v336, 1
      %v478 = vrot.slane %v337, 1
      %v479 = vrot.slane %v338, 1
      %v480 = vrot.slane %v339, 1
      %v481 = vrot.slane %v340, 1
      %v482 = vrot.slane %v341, 1
      %v483 = vrot.slane %v342, 1
      %vm484 = vcmp.lt.s32.totalorder %v414, 7
      %v485 = vsel %vm484, %v482, %v483
      %v486 = vsel %vm484, %v481, %v482
      %v487 = vsel %vm484, %v480, %v481
      %v488 = vsel %vm484, %v479, %v480
      %v489 = vsel %vm484, %v478, %v479
      %v490 = vsel %vm484, %v477, %v478
      %v491 = vsel %vm484, %v476, %v477
      %v492 = vsel %vm484, %v475, %v476
      %v493 = vsel %vm484, %v474, %v475
      %v494 = vsel %vm484, %v473, %v474
      %v495 = vsel %vm484, %v472, %v473
      %v496 = vsel %vm484, %v471, %v472
      %v497 = vsel %vm484, %v470, %v471
      %v498 = vsel %vm484, %v469, %v470
      %v499 = vsel %vm484, %v468, %v469
      %v500 = vsel %vm484, %v467, %v468
      %v501 = vsel %vm484, %v466, %v467
      %v502 = vsel %vm484, %v465, %v466
      %v503 = vsel %vm484, %v464, %v465
      %v504 = vsel %vm484, %v463, %v464
      %v505 = vsel %vm484, %v462, %v463
      %v506 = vsel %vm484, %v461, %v462
      %v507 = vsel %vm484, %v460, %v461
      %v508 = vsel %vm484, %v459, %v460
      %v509 = vsel %vm484, %v458, %v459
      %v510 = vsel %vm484, %v457, %v458
      %v511 = vsel %vm484, %v456, %v457
      %v512 = vsel %vm484, %v455, %v456
      %v513 = vsel %vm484, %v454, %v455
      %v514 = vsel %vm484, %v453, %v454
      %v515 = vsel %vm484, %v452, %v453
      %v516 = vsel %vm484, %v451, %v452
      %v517 = vsel %vm484, %v450, %v451
      %v518 = vsel %vm484, %v483, %v450
      %520 = vset.pattern.permute.xlu0 0
      %521 = vperm.xlu0 %520, %v449
      %v522 = vpop.permute.xlu0 %521
      %525 = vset.pattern.permute.xlu0 0
      %526 = vperm.xlu0 %525, %v448
      %v527 = vpop.permute.xlu0 %526
      %530 = vset.pattern.permute.xlu0 0
      %531 = vperm.xlu0 %530, %v447
      %v532 = vpop.permute.xlu0 %531
      %535 = vset.pattern.permute.xlu0 0
      %536 = vperm.xlu0 %535, %v446
      %v537 = vpop.permute.xlu0 %536
      %540 = vset.pattern.permute.xlu0 0
      %541 = vperm.xlu0 %540, %v445
      %v542 = vpop.permute.xlu0 %541
      %545 = vset.pattern.permute.xlu0 0
      %546 = vperm.xlu0 %545, %v444
      %v547 = vpop.permute.xlu0 %546
      %550 = vset.pattern.permute.xlu0 0
      %551 = vperm.xlu0 %550, %v443
      %v552 = vpop.permute.xlu0 %551
      %555 = vset.pattern.permute.xlu0 0
      %556 = vperm.xlu0 %555, %v442
      %v557 = vpop.permute.xlu0 %556
      %560 = vset.pattern.permute.xlu0 0
      %561 = vperm.xlu0 %560, %v441
      %v562 = vpop.permute.xlu0 %561
      %565 = vset.pattern.permute.xlu0 0
      %566 = vperm.xlu0 %565, %v440
      %v567 = vpop.permute.xlu0 %566
      %570 = vset.pattern.permute.xlu0 0
      %571 = vperm.xlu0 %570, %v439
      %v572 = vpop.permute.xlu0 %571
      %575 = vset.pattern.permute.xlu0 0
      %576 = vperm.xlu0 %575, %v438
      %v577 = vpop.permute.xlu0 %576
      %580 = vset.pattern.permute.xlu0 0
      %581 = vperm.xlu0 %580, %v437
      %v582 = vpop.permute.xlu0 %581
      %585 = vset.pattern.permute.xlu0 0
      %586 = vperm.xlu0 %585, %v436
      %v587 = vpop.permute.xlu0 %586
      %590 = vset.pattern.permute.xlu0 0
      %591 = vperm.xlu0 %590, %v435
      %v592 = vpop.permute.xlu0 %591
      %595 = vset.pattern.permute.xlu0 0
      %596 = vperm.xlu0 %595, %v434
      %v597 = vpop.permute.xlu0 %596
      %600 = vset.pattern.permute.xlu0 0
      %601 = vperm.xlu0 %600, %v433
      %v602 = vpop.permute.xlu0 %601
      %605 = vset.pattern.permute.xlu0 0
      %606 = vperm.xlu0 %605, %v432
      %v607 = vpop.permute.xlu0 %606
      %610 = vset.pattern.permute.xlu0 0
      %611 = vperm.xlu0 %610, %v431
      %v612 = vpop.permute.xlu0 %611
      %615 = vset.pattern.permute.xlu0 0
      %616 = vperm.xlu0 %615, %v430
      %v617 = vpop.permute.xlu0 %616
      %620 = vset.pattern.permute.xlu0 0
      %621 = vperm.xlu0 %620, %v429
      %v622 = vpop.permute.xlu0 %621
      %625 = vset.pattern.permute.xlu0 0
      %626 = vperm.xlu0 %625, %v428
      %v627 = vpop.permute.xlu0 %626
      %630 = vset.pattern.permute.xlu0 0
      %631 = vperm.xlu0 %630, %v427
      %v632 = vpop.permute.xlu0 %631
      %635 = vset.pattern.permute.xlu0 0
      %636 = vperm.xlu0 %635, %v426
      %v637 = vpop.permute.xlu0 %636
      %640 = vset.pattern.permute.xlu0 0
      %641 = vperm.xlu0 %640, %v425
      %v642 = vpop.permute.xlu0 %641
      %645 = vset.pattern.permute.xlu0 0
      %646 = vperm.xlu0 %645, %v424
      %v647 = vpop.permute.xlu0 %646
      %650 = vset.pattern.permute.xlu0 0
      %651 = vperm.xlu0 %650, %v423
      %v652 = vpop.permute.xlu0 %651
      %655 = vset.pattern.permute.xlu0 0
      %656 = vperm.xlu0 %655, %v422
      %v657 = vpop.permute.xlu0 %656
      %660 = vset.pattern.permute.xlu0 0
      %661 = vperm.xlu0 %660, %v421
      %v662 = vpop.permute.xlu0 %661
      %665 = vset.pattern.permute.xlu0 0
      %666 = vperm.xlu0 %665, %v420
      %v667 = vpop.permute.xlu0 %666
      %670 = vset.pattern.permute.xlu0 0
      %671 = vperm.xlu0 %670, %v419
      %v672 = vpop.permute.xlu0 %671
      %675 = vset.pattern.permute.xlu0 0
      %676 = vperm.xlu0 %675, %v418
      %v677 = vpop.permute.xlu0 %676
      %680 = vset.pattern.permute.xlu0 0
      %681 = vperm.xlu0 %680, %v417
      %v682 = vpop.permute.xlu0 %681
      %685 = vset.pattern.permute.xlu0 0
      %686 = vperm.xlu0 %685, %v416
      %v687 = vpop.permute.xlu0 %686
      %v689 = vlaneseq
      %v690 = vshrl.u32 %v689, 7
      %v691 = vsub.s32 0, %v690
      %v692 = vrot.slane %v377, %v691
      %v693 = vmul.f32 %v522, %v692
      %v694 = vmul.f32 %v527, %v692
      %v695 = vmul.f32 %v532, %v692
      %v696 = vmul.f32 %v537, %v692
      %v697 = vmul.f32 %v542, %v692
      %v698 = vmul.f32 %v547, %v692
      %v699 = vmul.f32 %v552, %v692
      %v700 = vmul.f32 %v557, %v692
      %v701 = vmul.f32 %v562, %v692
      %v702 = vmul.f32 %v567, %v692
      %v703 = vmul.f32 %v572, %v692
      %v704 = vmul.f32 %v577, %v692
      %v705 = vmul.f32 %v582, %v692
      %v706 = vmul.f32 %v587, %v692
      %v707 = vmul.f32 %v592, %v692
      %v708 = vmul.f32 %v597, %v692
      %v709 = vmul.f32 %v602, %v692
      %v710 = vmul.f32 %v607, %v692
      %v711 = vmul.f32 %v612, %v692
      %v712 = vmul.f32 %v617, %v692
      %v713 = vmul.f32 %v622, %v692
      %v714 = vmul.f32 %v627, %v692
      %v715 = vmul.f32 %v632, %v692
      %v716 = vmul.f32 %v637, %v692
      %v717 = vmul.f32 %v642, %v692
      %v718 = vmul.f32 %v647, %v692
      %v719 = vmul.f32 %v652, %v692
      %v720 = vmul.f32 %v657, %v692
      %v721 = vmul.f32 %v662, %v692
      %v722 = vmul.f32 %v667, %v692
      %v723 = vmul.f32 %v672, %v692
      %v724 = vmul.f32 %v677, %v692
      %v725 = vmul.f32 %v682, %v692
      %v726 = vmul.f32 %v687, %v692
      %728 = vset.pattern.permute.xlu0 0
      %729 = vperm.xlu0 %728, %v309
      %v730 = vpop.permute.xlu0 %729
      %733 = vset.pattern.permute.xlu0 0
      %734 = vperm.xlu0 %733, %v310
      %v735 = vpop.permute.xlu0 %734
      %738 = vset.pattern.permute.xlu0 0
      %739 = vperm.xlu0 %738, %v311
      %v740 = vpop.permute.xlu0 %739
      %743 = vset.pattern.permute.xlu0 0
      %744 = vperm.xlu0 %743, %v312
      %v745 = vpop.permute.xlu0 %744
      %748 = vset.pattern.permute.xlu0 0
      %749 = vperm.xlu0 %748, %v313
      %v750 = vpop.permute.xlu0 %749
      %753 = vset.pattern.permute.xlu0 0
      %754 = vperm.xlu0 %753, %v314
      %v755 = vpop.permute.xlu0 %754
      %758 = vset.pattern.permute.xlu0 0
      %759 = vperm.xlu0 %758, %v315
      %v760 = vpop.permute.xlu0 %759
      %763 = vset.pattern.permute.xlu0 0
      %764 = vperm.xlu0 %763, %v316
      %v765 = vpop.permute.xlu0 %764
      %768 = vset.pattern.permute.xlu0 0
      %769 = vperm.xlu0 %768, %v317
      %v770 = vpop.permute.xlu0 %769
      %773 = vset.pattern.permute.xlu0 0
      %774 = vperm.xlu0 %773, %v318
      %v775 = vpop.permute.xlu0 %774
      %778 = vset.pattern.permute.xlu0 0
      %779 = vperm.xlu0 %778, %v319
      %v780 = vpop.permute.xlu0 %779
      %783 = vset.pattern.permute.xlu0 0
      %784 = vperm.xlu0 %783, %v320
      %v785 = vpop.permute.xlu0 %784
      %788 = vset.pattern.permute.xlu0 0
      %789 = vperm.xlu0 %788, %v321
      %v790 = vpop.permute.xlu0 %789
      %793 = vset.pattern.permute.xlu0 0
      %794 = vperm.xlu0 %793, %v322
      %v795 = vpop.permute.xlu0 %794
      %798 = vset.pattern.permute.xlu0 0
      %799 = vperm.xlu0 %798, %v323
      %v800 = vpop.permute.xlu0 %799
      %803 = vset.pattern.permute.xlu0 0
      %804 = vperm.xlu0 %803, %v324
      %v805 = vpop.permute.xlu0 %804
      %808 = vset.pattern.permute.xlu0 0
      %809 = vperm.xlu0 %808, %v325
      %v810 = vpop.permute.xlu0 %809
      %813 = vset.pattern.permute.xlu0 0
      %814 = vperm.xlu0 %813, %v326
      %v815 = vpop.permute.xlu0 %814
      %818 = vset.pattern.permute.xlu0 0
      %819 = vperm.xlu0 %818, %v327
      %v820 = vpop.permute.xlu0 %819
      %823 = vset.pattern.permute.xlu0 0
      %824 = vperm.xlu0 %823, %v328
      %v825 = vpop.permute.xlu0 %824
      %828 = vset.pattern.permute.xlu0 0
      %829 = vperm.xlu0 %828, %v329
      %v830 = vpop.permute.xlu0 %829
      %833 = vset.pattern.permute.xlu0 0
      %834 = vperm.xlu0 %833, %v330
      %v835 = vpop.permute.xlu0 %834
      %838 = vset.pattern.permute.xlu0 0
      %839 = vperm.xlu0 %838, %v331
      %v840 = vpop.permute.xlu0 %839
      %843 = vset.pattern.permute.xlu0 0
      %844 = vperm.xlu0 %843, %v332
      %v845 = vpop.permute.xlu0 %844
      %848 = vset.pattern.permute.xlu0 0
      %849 = vperm.xlu0 %848, %v333
      %v850 = vpop.permute.xlu0 %849
      %853 = vset.pattern.permute.xlu0 0
      %854 = vperm.xlu0 %853, %v334
      %v855 = vpop.permute.xlu0 %854
      %858 = vset.pattern.permute.xlu0 0
      %859 = vperm.xlu0 %858, %v335
      %v860 = vpop.permute.xlu0 %859
      %863 = vset.pattern.permute.xlu0 0
      %864 = vperm.xlu0 %863, %v336
      %v865 = vpop.permute.xlu0 %864
      %868 = vset.pattern.permute.xlu0 0
      %869 = vperm.xlu0 %868, %v337
      %v870 = vpop.permute.xlu0 %869
      %873 = vset.pattern.permute.xlu0 0
      %874 = vperm.xlu0 %873, %v338
      %v875 = vpop.permute.xlu0 %874
      %878 = vset.pattern.permute.xlu0 0
      %879 = vperm.xlu0 %878, %v339
      %v880 = vpop.permute.xlu0 %879
      %883 = vset.pattern.permute.xlu0 0
      %884 = vperm.xlu0 %883, %v340
      %v885 = vpop.permute.xlu0 %884
      %888 = vset.pattern.permute.xlu0 0
      %889 = vperm.xlu0 %888, %v341
      %v890 = vpop.permute.xlu0 %889
      %893 = vset.pattern.permute.xlu0 0
      %894 = vperm.xlu0 %893, %v342
      %v895 = vpop.permute.xlu0 %894
      %v897 = vlaneseq
      %v898 = vshrl.u32 %v897, 7
      %v899 = vsub.s32 1, %v898
      %v900 = vrot.slane %v377, %v899
      %v901 = vmul.f32 %v730, %v900
      %v902 = vmul.f32 %v735, %v900
      %v903 = vmul.f32 %v740, %v900
      %v904 = vmul.f32 %v745, %v900
      %v905 = vmul.f32 %v750, %v900
      %v906 = vmul.f32 %v755, %v900
      %v907 = vmul.f32 %v760, %v900
      %v908 = vmul.f32 %v765, %v900
      %v909 = vmul.f32 %v770, %v900
      %v910 = vmul.f32 %v775, %v900
      %v911 = vmul.f32 %v780, %v900
      %v912 = vmul.f32 %v785, %v900
      %v913 = vmul.f32 %v790, %v900
      %v914 = vmul.f32 %v795, %v900
      %v915 = vmul.f32 %v800, %v900
      %v916 = vmul.f32 %v805, %v900
      %v917 = vmul.f32 %v810, %v900
      %v918 = vmul.f32 %v815, %v900
      %v919 = vmul.f32 %v820, %v900
      %v920 = vmul.f32 %v825, %v900
      %v921 = vmul.f32 %v830, %v900
      %v922 = vmul.f32 %v835, %v900
      %v923 = vmul.f32 %v840, %v900
      %v924 = vmul.f32 %v845, %v900
      %v925 = vmul.f32 %v850, %v900
      %v926 = vmul.f32 %v855, %v900
      %v927 = vmul.f32 %v860, %v900
      %v928 = vmul.f32 %v865, %v900
      %v929 = vmul.f32 %v870, %v900
      %v930 = vmul.f32 %v875, %v900
      %v931 = vmul.f32 %v880, %v900
      %v932 = vmul.f32 %v885, %v900
      %v933 = vmul.f32 %v890, %v900
      %v934 = vmul.f32 %v895, %v900
      %v935 = vadd.f32 %v693, %v901
      %v936 = vadd.f32 %v694, %v902
      %v937 = vadd.f32 %v695, %v903
      %v938 = vadd.f32 %v696, %v904
      %v939 = vadd.f32 %v697, %v905
      %v940 = vadd.f32 %v698, %v906
      %v941 = vadd.f32 %v699, %v907
      %v942 = vadd.f32 %v700, %v908
      %v943 = vadd.f32 %v701, %v909
      %v944 = vadd.f32 %v702, %v910
      %v945 = vadd.f32 %v703, %v911
      %v946 = vadd.f32 %v704, %v912
      %v947 = vadd.f32 %v705, %v913
      %v948 = vadd.f32 %v706, %v914
      %v949 = vadd.f32 %v707, %v915
      %v950 = vadd.f32 %v708, %v916
      %v951 = vadd.f32 %v709, %v917
      %v952 = vadd.f32 %v710, %v918
      %v953 = vadd.f32 %v711, %v919
      %v954 = vadd.f32 %v712, %v920
      %v955 = vadd.f32 %v713, %v921
      %v956 = vadd.f32 %v714, %v922
      %v957 = vadd.f32 %v715, %v923
      %v958 = vadd.f32 %v716, %v924
      %v959 = vadd.f32 %v717, %v925
      %v960 = vadd.f32 %v718, %v926
      %v961 = vadd.f32 %v719, %v927
      %v962 = vadd.f32 %v720, %v928
      %v963 = vadd.f32 %v721, %v929
      %v964 = vadd.f32 %v722, %v930
      %v965 = vadd.f32 %v723, %v931
      %v966 = vadd.f32 %v724, %v932
      %v967 = vadd.f32 %v725, %v933
      %v968 = vadd.f32 %v726, %v934
      %970 = vset.pattern.permute.xlu0 0
      %971 = vperm.xlu0 %970, %v517
      %v972 = vpop.permute.xlu0 %971
      %975 = vset.pattern.permute.xlu0 0
      %976 = vperm.xlu0 %975, %v516
      %v977 = vpop.permute.xlu0 %976
      %980 = vset.pattern.permute.xlu0 0
      %981 = vperm.xlu0 %980, %v515
      %v982 = vpop.permute.xlu0 %981
      %985 = vset.pattern.permute.xlu0 0
      %986 = vperm.xlu0 %985, %v514
      %v987 = vpop.permute.xlu0 %986
      %990 = vset.pattern.permute.xlu0 0
      %991 = vperm.xlu0 %990, %v513
      %v992 = vpop.permute.xlu0 %991
      %995 = vset.pattern.permute.xlu0 0
      %996 = vperm.xlu0 %995, %v512
      %v997 = vpop.permute.xlu0 %996
      %1000 = vset.pattern.permute.xlu0 0
      %1001 = vperm.xlu0 %1000, %v511
      %v1002 = vpop.permute.xlu0 %1001
      %1005 = vset.pattern.permute.xlu0 0
      %1006 = vperm.xlu0 %1005, %v510
      %v1007 = vpop.permute.xlu0 %1006
      %1010 = vset.pattern.permute.xlu0 0
      %1011 = vperm.xlu0 %1010, %v509
      %v1012 = vpop.permute.xlu0 %1011
      %1015 = vset.pattern.permute.xlu0 0
      %1016 = vperm.xlu0 %1015, %v508
      %v1017 = vpop.permute.xlu0 %1016
      %1020 = vset.pattern.permute.xlu0 0
      %1021 = vperm.xlu0 %1020, %v507
      %v1022 = vpop.permute.xlu0 %1021
      %1025 = vset.pattern.permute.xlu0 0
      %1026 = vperm.xlu0 %1025, %v506
      %v1027 = vpop.permute.xlu0 %1026
      %1030 = vset.pattern.permute.xlu0 0
      %1031 = vperm.xlu0 %1030, %v505
      %v1032 = vpop.permute.xlu0 %1031
      %1035 = vset.pattern.permute.xlu0 0
      %1036 = vperm.xlu0 %1035, %v504
      %v1037 = vpop.permute.xlu0 %1036
      %1040 = vset.pattern.permute.xlu0 0
      %1041 = vperm.xlu0 %1040, %v503
      %v1042 = vpop.permute.xlu0 %1041
      %1045 = vset.pattern.permute.xlu0 0
      %1046 = vperm.xlu0 %1045, %v502
      %v1047 = vpop.permute.xlu0 %1046
      %1050 = vset.pattern.permute.xlu0 0
      %1051 = vperm.xlu0 %1050, %v501
      %v1052 = vpop.permute.xlu0 %1051
      %1055 = vset.pattern.permute.xlu0 0
      %1056 = vperm.xlu0 %1055, %v500
      %v1057 = vpop.permute.xlu0 %1056
      %1060 = vset.pattern.permute.xlu0 0
      %1061 = vperm.xlu0 %1060, %v499
      %v1062 = vpop.permute.xlu0 %1061
      %1065 = vset.pattern.permute.xlu0 0
      %1066 = vperm.xlu0 %1065, %v498
      %v1067 = vpop.permute.xlu0 %1066
      %1070 = vset.pattern.permute.xlu0 0
      %1071 = vperm.xlu0 %1070, %v497
      %v1072 = vpop.permute.xlu0 %1071
      %1075 = vset.pattern.permute.xlu0 0
      %1076 = vperm.xlu0 %1075, %v496
      %v1077 = vpop.permute.xlu0 %1076
      %1080 = vset.pattern.permute.xlu0 0
      %1081 = vperm.xlu0 %1080, %v495
      %v1082 = vpop.permute.xlu0 %1081
      %1085 = vset.pattern.permute.xlu0 0
      %1086 = vperm.xlu0 %1085, %v494
      %v1087 = vpop.permute.xlu0 %1086
      %1090 = vset.pattern.permute.xlu0 0
      %1091 = vperm.xlu0 %1090, %v493
      %v1092 = vpop.permute.xlu0 %1091
      %1095 = vset.pattern.permute.xlu0 0
      %1096 = vperm.xlu0 %1095, %v492
      %v1097 = vpop.permute.xlu0 %1096
      %1100 = vset.pattern.permute.xlu0 0
      %1101 = vperm.xlu0 %1100, %v491
      %v1102 = vpop.permute.xlu0 %1101
      %1105 = vset.pattern.permute.xlu0 0
      %1106 = vperm.xlu0 %1105, %v490
      %v1107 = vpop.permute.xlu0 %1106
      %1110 = vset.pattern.permute.xlu0 0
      %1111 = vperm.xlu0 %1110, %v489
      %v1112 = vpop.permute.xlu0 %1111
      %1115 = vset.pattern.permute.xlu0 0
      %1116 = vperm.xlu0 %1115, %v488
      %v1117 = vpop.permute.xlu0 %1116
      %1120 = vset.pattern.permute.xlu0 0
      %1121 = vperm.xlu0 %1120, %v487
      %v1122 = vpop.permute.xlu0 %1121
      %1125 = vset.pattern.permute.xlu0 0
      %1126 = vperm.xlu0 %1125, %v486
      %v1127 = vpop.permute.xlu0 %1126
      %1130 = vset.pattern.permute.xlu0 0
      %1131 = vperm.xlu0 %1130, %v485
      %v1132 = vpop.permute.xlu0 %1131
      %1135 = vset.pattern.permute.xlu0 0
      %1136 = vperm.xlu0 %1135, %v518
      %v1137 = vpop.permute.xlu0 %1136
      %v1139 = vlaneseq
      %v1140 = vshrl.u32 %v1139, 7
      %v1141 = vsub.s32 2, %v1140
      %v1142 = vrot.slane %v377, %v1141
      %v1143 = vmul.f32 %v972, %v1142
      %v1144 = vmul.f32 %v977, %v1142
      %v1145 = vmul.f32 %v982, %v1142
      %v1146 = vmul.f32 %v987, %v1142
      %v1147 = vmul.f32 %v992, %v1142
      %v1148 = vmul.f32 %v997, %v1142
      %v1149 = vmul.f32 %v1002, %v1142
      %v1150 = vmul.f32 %v1007, %v1142
      %v1151 = vmul.f32 %v1012, %v1142
      %v1152 = vmul.f32 %v1017, %v1142
      %v1153 = vmul.f32 %v1022, %v1142
      %v1154 = vmul.f32 %v1027, %v1142
      %v1155 = vmul.f32 %v1032, %v1142
      %v1156 = vmul.f32 %v1037, %v1142
      %v1157 = vmul.f32 %v1042, %v1142
      %v1158 = vmul.f32 %v1047, %v1142
      %v1159 = vmul.f32 %v1052, %v1142
      %v1160 = vmul.f32 %v1057, %v1142
      %v1161 = vmul.f32 %v1062, %v1142
      %v1162 = vmul.f32 %v1067, %v1142
      %v1163 = vmul.f32 %v1072, %v1142
      %v1164 = vmul.f32 %v1077, %v1142
      %v1165 = vmul.f32 %v1082, %v1142
      %v1166 = vmul.f32 %v1087, %v1142
      %v1167 = vmul.f32 %v1092, %v1142
      %v1168 = vmul.f32 %v1097, %v1142
      %v1169 = vmul.f32 %v1102, %v1142
      %v1170 = vmul.f32 %v1107, %v1142
      %v1171 = vmul.f32 %v1112, %v1142
      %v1172 = vmul.f32 %v1117, %v1142
      %v1173 = vmul.f32 %v1122, %v1142
      %v1174 = vmul.f32 %v1127, %v1142
      %v1175 = vmul.f32 %v1132, %v1142
      %v1176 = vmul.f32 %v1137, %v1142
      %v1177 = vadd.f32 %v935, %v1143
      %v1178 = vadd.f32 %v936, %v1144
      %v1179 = vadd.f32 %v937, %v1145
      %v1180 = vadd.f32 %v938, %v1146
      %v1181 = vadd.f32 %v939, %v1147
      %v1182 = vadd.f32 %v940, %v1148
      %v1183 = vadd.f32 %v941, %v1149
      %v1184 = vadd.f32 %v942, %v1150
      %v1185 = vadd.f32 %v943, %v1151
      %v1186 = vadd.f32 %v944, %v1152
      %v1187 = vadd.f32 %v945, %v1153
      %v1188 = vadd.f32 %v946, %v1154
      %v1189 = vadd.f32 %v947, %v1155
      %v1190 = vadd.f32 %v948, %v1156
      %v1191 = vadd.f32 %v949, %v1157
      %v1192 = vadd.f32 %v950, %v1158
      %v1193 = vadd.f32 %v951, %v1159
      %v1194 = vadd.f32 %v952, %v1160
      %v1195 = vadd.f32 %v953, %v1161
      %v1196 = vadd.f32 %v954, %v1162
      %v1197 = vadd.f32 %v955, %v1163
      %v1198 = vadd.f32 %v956, %v1164
      %v1199 = vadd.f32 %v957, %v1165
      %v1200 = vadd.f32 %v958, %v1166
      %v1201 = vadd.f32 %v959, %v1167
      %v1202 = vadd.f32 %v960, %v1168
      %v1203 = vadd.f32 %v961, %v1169
      %v1204 = vadd.f32 %v962, %v1170
      %v1205 = vadd.f32 %v963, %v1171
      %v1206 = vadd.f32 %v964, %v1172
      %v1207 = vadd.f32 %v965, %v1173
      %v1208 = vadd.f32 %v966, %v1174
      %v1209 = vadd.f32 %v967, %v1175
      %v1210 = vadd.f32 %v968, %v1176
      %v1211 = vld [vmem:[%s3] sm:$0x1]
      %v1213 = vlaneseq
      %v1214 = vshrl.u32 %v1213, 7
      %v1215 = vsub.s32 0, %v1214
      %v1216 = vrot.slane %v1211, %v1215
      %v1218 = vadd.f32 %v1177, %v1216
      %v1219 = vadd.f32 %v1178, %v1216
      %v1220 = vadd.f32 %v1179, %v1216
      %v1221 = vadd.f32 %v1180, %v1216
      %v1222 = vadd.f32 %v1181, %v1216
      %v1223 = vadd.f32 %v1182, %v1216
      %v1224 = vadd.f32 %v1183, %v1216
      %v1225 = vadd.f32 %v1184, %v1216
      %v1226 = vadd.f32 %v1185, %v1216
      %v1227 = vadd.f32 %v1186, %v1216
      %v1228 = vadd.f32 %v1187, %v1216
      %v1229 = vadd.f32 %v1188, %v1216
      %v1230 = vadd.f32 %v1189, %v1216
      %v1231 = vadd.f32 %v1190, %v1216
      %v1232 = vadd.f32 %v1191, %v1216
      %v1233 = vadd.f32 %v1192, %v1216
      %v1234 = vadd.f32 %v1193, %v1216
      %v1235 = vadd.f32 %v1194, %v1216
      %v1236 = vadd.f32 %v1195, %v1216
      %v1237 = vadd.f32 %v1196, %v1216
      %v1238 = vadd.f32 %v1197, %v1216
      %v1239 = vadd.f32 %v1198, %v1216
      %v1240 = vadd.f32 %v1199, %v1216
      %v1241 = vadd.f32 %v1200, %v1216
      %v1242 = vadd.f32 %v1201, %v1216
      %v1243 = vadd.f32 %v1202, %v1216
      %v1244 = vadd.f32 %v1203, %v1216
      %v1245 = vadd.f32 %v1204, %v1216
      %v1246 = vadd.f32 %v1205, %v1216
      %v1247 = vadd.f32 %v1206, %v1216
      %v1248 = vadd.f32 %v1207, %v1216
      %v1249 = vadd.f32 %v1208, %v1216
      %v1250 = vadd.f32 %v1209, %v1216
      %v1251 = vadd.f32 %v1210, %v1216
      %v1252 = vmul.f32 %v1218, 0.2
      %v1253 = vmul.f32 %v1219, 0.2
      %v1254 = vmul.f32 %v1220, 0.2
      %v1255 = vmul.f32 %v1221, 0.2
      %v1256 = vmul.f32 %v1222, 0.2
      %v1257 = vmul.f32 %v1223, 0.2
      %v1258 = vmul.f32 %v1224, 0.2
      %v1259 = vmul.f32 %v1225, 0.2
      %v1260 = vmul.f32 %v1226, 0.2
      %v1261 = vmul.f32 %v1227, 0.2
      %v1262 = vmul.f32 %v1228, 0.2
      %v1263 = vmul.f32 %v1229, 0.2
      %v1264 = vmul.f32 %v1230, 0.2
      %v1265 = vmul.f32 %v1231, 0.2
      %v1266 = vmul.f32 %v1232, 0.2
      %v1267 = vmul.f32 %v1233, 0.2
      %v1268 = vmul.f32 %v1234, 0.2
      %v1269 = vmul.f32 %v1235, 0.2
      %v1270 = vmul.f32 %v1236, 0.2
      %v1271 = vmul.f32 %v1237, 0.2
      %v1272 = vmul.f32 %v1238, 0.2
      %v1273 = vmul.f32 %v1239, 0.2
      %v1274 = vmul.f32 %v1240, 0.2
      %v1275 = vmul.f32 %v1241, 0.2
      %v1276 = vmul.f32 %v1242, 0.2
      %v1277 = vmul.f32 %v1243, 0.2
      %v1278 = vmul.f32 %v1244, 0.2
      %v1279 = vmul.f32 %v1245, 0.2
      %v1280 = vmul.f32 %v1246, 0.2
      %v1281 = vmul.f32 %v1247, 0.2
      %v1282 = vmul.f32 %v1248, 0.2
      %v1283 = vmul.f32 %v1249, 0.2
      %v1284 = vmul.f32 %v1250, 0.2
      %v1285 = vmul.f32 %v1251, 0.2
      %v1286 = vmax.f32 %v1218, %v1252
      %v1287 = vmax.f32 %v1219, %v1253
      %v1288 = vmax.f32 %v1220, %v1254
      %v1289 = vmax.f32 %v1221, %v1255
      %v1290 = vmax.f32 %v1222, %v1256
      %v1291 = vmax.f32 %v1223, %v1257
      %v1292 = vmax.f32 %v1224, %v1258
      %v1293 = vmax.f32 %v1225, %v1259
      %v1294 = vmax.f32 %v1226, %v1260
      %v1295 = vmax.f32 %v1227, %v1261
      %v1296 = vmax.f32 %v1228, %v1262
      %v1297 = vmax.f32 %v1229, %v1263
      %v1298 = vmax.f32 %v1230, %v1264
      %v1299 = vmax.f32 %v1231, %v1265
      %v1300 = vmax.f32 %v1232, %v1266
      %v1301 = vmax.f32 %v1233, %v1267
      %v1302 = vmax.f32 %v1234, %v1268
      %v1303 = vmax.f32 %v1235, %v1269
      %v1304 = vmax.f32 %v1236, %v1270
      %v1305 = vmax.f32 %v1237, %v1271
      %v1306 = vmax.f32 %v1238, %v1272
      %v1307 = vmax.f32 %v1239, %v1273
      %v1308 = vmax.f32 %v1240, %v1274
      %v1309 = vmax.f32 %v1241, %v1275
      %v1310 = vmax.f32 %v1242, %v1276
      %v1311 = vmax.f32 %v1243, %v1277
      %v1312 = vmax.f32 %v1244, %v1278
      %v1313 = vmax.f32 %v1245, %v1279
      %v1314 = vmax.f32 %v1246, %v1280
      %v1315 = vmax.f32 %v1247, %v1281
      %v1316 = vmax.f32 %v1248, %v1282
      %v1317 = vmax.f32 %v1249, %v1283
      %v1318 = vmax.f32 %v1250, %v1284
      %v1319 = vmax.f32 %v1251, %v1285
      %1321 = vset.pattern.permute.xlu0 0
      %1322 = vperm.xlu0 %1321, %v343
      %v1323 = vpop.permute.xlu0 %1322
      %1326 = vset.pattern.permute.xlu0 0
      %1327 = vperm.xlu0 %1326, %v344
      %v1328 = vpop.permute.xlu0 %1327
      %1331 = vset.pattern.permute.xlu0 0
      %1332 = vperm.xlu0 %1331, %v345
      %v1333 = vpop.permute.xlu0 %1332
      %1336 = vset.pattern.permute.xlu0 0
      %1337 = vperm.xlu0 %1336, %v346
      %v1338 = vpop.permute.xlu0 %1337
      %1341 = vset.pattern.permute.xlu0 0
      %1342 = vperm.xlu0 %1341, %v347
      %v1343 = vpop.permute.xlu0 %1342
      %1346 = vset.pattern.permute.xlu0 0
      %1347 = vperm.xlu0 %1346, %v348
      %v1348 = vpop.permute.xlu0 %1347
      %1351 = vset.pattern.permute.xlu0 0
      %1352 = vperm.xlu0 %1351, %v349
      %v1353 = vpop.permute.xlu0 %1352
      %1356 = vset.pattern.permute.xlu0 0
      %1357 = vperm.xlu0 %1356, %v350
      %v1358 = vpop.permute.xlu0 %1357
      %1361 = vset.pattern.permute.xlu0 0
      %1362 = vperm.xlu0 %1361, %v351
      %v1363 = vpop.permute.xlu0 %1362
      %1366 = vset.pattern.permute.xlu0 0
      %1367 = vperm.xlu0 %1366, %v352
      %v1368 = vpop.permute.xlu0 %1367
      %1371 = vset.pattern.permute.xlu0 0
      %1372 = vperm.xlu0 %1371, %v353
      %v1373 = vpop.permute.xlu0 %1372
      %1376 = vset.pattern.permute.xlu0 0
      %1377 = vperm.xlu0 %1376, %v354
      %v1378 = vpop.permute.xlu0 %1377
      %1381 = vset.pattern.permute.xlu0 0
      %1382 = vperm.xlu0 %1381, %v355
      %v1383 = vpop.permute.xlu0 %1382
      %1386 = vset.pattern.permute.xlu0 0
      %1387 = vperm.xlu0 %1386, %v356
      %v1388 = vpop.permute.xlu0 %1387
      %1391 = vset.pattern.permute.xlu0 0
      %1392 = vperm.xlu0 %1391, %v357
      %v1393 = vpop.permute.xlu0 %1392
      %1396 = vset.pattern.permute.xlu0 0
      %1397 = vperm.xlu0 %1396, %v358
      %v1398 = vpop.permute.xlu0 %1397
      %1401 = vset.pattern.permute.xlu0 0
      %1402 = vperm.xlu0 %1401, %v359
      %v1403 = vpop.permute.xlu0 %1402
      %1406 = vset.pattern.permute.xlu0 0
      %1407 = vperm.xlu0 %1406, %v360
      %v1408 = vpop.permute.xlu0 %1407
      %1411 = vset.pattern.permute.xlu0 0
      %1412 = vperm.xlu0 %1411, %v361
      %v1413 = vpop.permute.xlu0 %1412
      %1416 = vset.pattern.permute.xlu0 0
      %1417 = vperm.xlu0 %1416, %v362
      %v1418 = vpop.permute.xlu0 %1417
      %1421 = vset.pattern.permute.xlu0 0
      %1422 = vperm.xlu0 %1421, %v363
      %v1423 = vpop.permute.xlu0 %1422
      %1426 = vset.pattern.permute.xlu0 0
      %1427 = vperm.xlu0 %1426, %v364
      %v1428 = vpop.permute.xlu0 %1427
      %1431 = vset.pattern.permute.xlu0 0
      %1432 = vperm.xlu0 %1431, %v365
      %v1433 = vpop.permute.xlu0 %1432
      %1436 = vset.pattern.permute.xlu0 0
      %1437 = vperm.xlu0 %1436, %v366
      %v1438 = vpop.permute.xlu0 %1437
      %1441 = vset.pattern.permute.xlu0 0
      %1442 = vperm.xlu0 %1441, %v367
      %v1443 = vpop.permute.xlu0 %1442
      %1446 = vset.pattern.permute.xlu0 0
      %1447 = vperm.xlu0 %1446, %v368
      %v1448 = vpop.permute.xlu0 %1447
      %1451 = vset.pattern.permute.xlu0 0
      %1452 = vperm.xlu0 %1451, %v369
      %v1453 = vpop.permute.xlu0 %1452
      %1456 = vset.pattern.permute.xlu0 0
      %1457 = vperm.xlu0 %1456, %v370
      %v1458 = vpop.permute.xlu0 %1457
      %1461 = vset.pattern.permute.xlu0 0
      %1462 = vperm.xlu0 %1461, %v371
      %v1463 = vpop.permute.xlu0 %1462
      %1466 = vset.pattern.permute.xlu0 0
      %1467 = vperm.xlu0 %1466, %v372
      %v1468 = vpop.permute.xlu0 %1467
      %1471 = vset.pattern.permute.xlu0 0
      %1472 = vperm.xlu0 %1471, %v373
      %v1473 = vpop.permute.xlu0 %1472
      %1476 = vset.pattern.permute.xlu0 0
      %1477 = vperm.xlu0 %1476, %v374
      %v1478 = vpop.permute.xlu0 %1477
      %1481 = vset.pattern.permute.xlu0 0
      %1482 = vperm.xlu0 %1481, %v375
      %v1483 = vpop.permute.xlu0 %1482
      %1486 = vset.pattern.permute.xlu0 0
      %1487 = vperm.xlu0 %1486, %v376
      %v1488 = vpop.permute.xlu0 %1487
      %v1490 = vmul.f32 %v1286, %v1323
      %v1491 = vmul.f32 %v1287, %v1328
      %v1492 = vmul.f32 %v1288, %v1333
      %v1493 = vmul.f32 %v1289, %v1338
      %v1494 = vmul.f32 %v1290, %v1343
      %v1495 = vmul.f32 %v1291, %v1348
      %v1496 = vmul.f32 %v1292, %v1353
      %v1497 = vmul.f32 %v1293, %v1358
      %v1498 = vmul.f32 %v1294, %v1363
      %v1499 = vmul.f32 %v1295, %v1368
      %v1500 = vmul.f32 %v1296, %v1373
      %v1501 = vmul.f32 %v1297, %v1378
      %v1502 = vmul.f32 %v1298, %v1383
      %v1503 = vmul.f32 %v1299, %v1388
      %v1504 = vmul.f32 %v1300, %v1393
      %v1505 = vmul.f32 %v1301, %v1398
      %v1506 = vmul.f32 %v1302, %v1403
      %v1507 = vmul.f32 %v1303, %v1408
      %v1508 = vmul.f32 %v1304, %v1413
      %v1509 = vmul.f32 %v1305, %v1418
      %v1510 = vmul.f32 %v1306, %v1423
      %v1511 = vmul.f32 %v1307, %v1428
      %v1512 = vmul.f32 %v1308, %v1433
      %v1513 = vmul.f32 %v1309, %v1438
      %v1514 = vmul.f32 %v1310, %v1443
      %v1515 = vmul.f32 %v1311, %v1448
      %v1516 = vmul.f32 %v1312, %v1453
      %v1517 = vmul.f32 %v1313, %v1458
      %v1518 = vmul.f32 %v1314, %v1463
      %v1519 = vmul.f32 %v1315, %v1468
      %v1520 = vmul.f32 %v1316, %v1473
      %v1521 = vmul.f32 %v1317, %v1478
      %v1522 = vmul.f32 %v1318, %v1483
      %v1523 = vmul.f32 %v1319, %v1488
      %v1524 = vrot.slane %v1490, 7
      %v1525 = vrot.slane %v1491, 7
      %v1526 = vrot.slane %v1492, 7
      %v1527 = vrot.slane %v1493, 7
      %v1528 = vrot.slane %v1494, 7
      %v1529 = vrot.slane %v1495, 7
      %v1530 = vrot.slane %v1496, 7
      %v1531 = vrot.slane %v1497, 7
      %v1532 = vrot.slane %v1498, 7
      %v1533 = vrot.slane %v1499, 7
      %v1534 = vrot.slane %v1500, 7
      %v1535 = vrot.slane %v1501, 7
      %v1536 = vrot.slane %v1502, 7
      %v1537 = vrot.slane %v1503, 7
      %v1538 = vrot.slane %v1504, 7
      %v1539 = vrot.slane %v1505, 7
      %v1540 = vrot.slane %v1506, 7
      %v1541 = vrot.slane %v1507, 7
      %v1542 = vrot.slane %v1508, 7
      %v1543 = vrot.slane %v1509, 7
      %v1544 = vrot.slane %v1510, 7
      %v1545 = vrot.slane %v1511, 7
      %v1546 = vrot.slane %v1512, 7
      %v1547 = vrot.slane %v1513, 7
      %v1548 = vrot.slane %v1514, 7
      %v1549 = vrot.slane %v1515, 7
      %v1550 = vrot.slane %v1516, 7
      %v1551 = vrot.slane %v1517, 7
      %v1552 = vrot.slane %v1518, 7
      %v1553 = vrot.slane %v1519, 7
      %v1554 = vrot.slane %v1520, 7
      %v1555 = vrot.slane %v1521, 7
      %v1556 = vrot.slane %v1522, 7
      %v1557 = vrot.slane %v1523, 7
      %v1558 = vsel %vm415, %v1556, %v1557
      %v1559 = vsel %vm415, %v1555, %v1556
      %v1560 = vsel %vm415, %v1554, %v1555
      %v1561 = vsel %vm415, %v1553, %v1554
      %v1562 = vsel %vm415, %v1552, %v1553
      %v1563 = vsel %vm415, %v1551, %v1552
      %v1564 = vsel %vm415, %v1550, %v1551
      %v1565 = vsel %vm415, %v1549, %v1550
      %v1566 = vsel %vm415, %v1548, %v1549
      %v1567 = vsel %vm415, %v1547, %v1548
      %v1568 = vsel %vm415, %v1546, %v1547
      %v1569 = vsel %vm415, %v1545, %v1546
      %v1570 = vsel %vm415, %v1544, %v1545
      %v1571 = vsel %vm415, %v1543, %v1544
      %v1572 = vsel %vm415, %v1542, %v1543
      %v1573 = vsel %vm415, %v1541, %v1542
      %v1574 = vsel %vm415, %v1540, %v1541
      %v1575 = vsel %vm415, %v1539, %v1540
      %v1576 = vsel %vm415, %v1538, %v1539
      %v1577 = vsel %vm415, %v1537, %v1538
      %v1578 = vsel %vm415, %v1536, %v1537
      %v1579 = vsel %vm415, %v1535, %v1536
      %v1580 = vsel %vm415, %v1534, %v1535
      %v1581 = vsel %vm415, %v1533, %v1534
      %v1582 = vsel %vm415, %v1532, %v1533
      %v1583 = vsel %vm415, %v1531, %v1532
      %v1584 = vsel %vm415, %v1530, %v1531
      %v1585 = vsel %vm415, %v1529, %v1530
      %v1586 = vsel %vm415, %v1528, %v1529
      %v1587 = vsel %vm415, %v1527, %v1528
      %v1588 = vsel %vm415, %v1526, %v1527
      %v1589 = vsel %vm415, %v1525, %v1526
      %v1590 = vsel %vm415, %v1524, %v1525
      %v1591 = vsel %vm415, %v1557, %v1524
      %v1592 = vrot.slane %v1490, 1
      %v1593 = vrot.slane %v1491, 1
      %v1594 = vrot.slane %v1492, 1
      %v1595 = vrot.slane %v1493, 1
      %v1596 = vrot.slane %v1494, 1
      %v1597 = vrot.slane %v1495, 1
      %v1598 = vrot.slane %v1496, 1
      %v1599 = vrot.slane %v1497, 1
      %v1600 = vrot.slane %v1498, 1
      %v1601 = vrot.slane %v1499, 1
      %v1602 = vrot.slane %v1500, 1
      %v1603 = vrot.slane %v1501, 1
      %v1604 = vrot.slane %v1502, 1
      %v1605 = vrot.slane %v1503, 1
      %v1606 = vrot.slane %v1504, 1
      %v1607 = vrot.slane %v1505, 1
      %v1608 = vrot.slane %v1506, 1
      %v1609 = vrot.slane %v1507, 1
      %v1610 = vrot.slane %v1508, 1
      %v1611 = vrot.slane %v1509, 1
      %v1612 = vrot.slane %v1510, 1
      %v1613 = vrot.slane %v1511, 1
      %v1614 = vrot.slane %v1512, 1
      %v1615 = vrot.slane %v1513, 1
      %v1616 = vrot.slane %v1514, 1
      %v1617 = vrot.slane %v1515, 1
      %v1618 = vrot.slane %v1516, 1
      %v1619 = vrot.slane %v1517, 1
      %v1620 = vrot.slane %v1518, 1
      %v1621 = vrot.slane %v1519, 1
      %v1622 = vrot.slane %v1520, 1
      %v1623 = vrot.slane %v1521, 1
      %v1624 = vrot.slane %v1522, 1
      %v1625 = vrot.slane %v1523, 1
      %v1626 = vsel %vm484, %v1624, %v1625
      %v1627 = vsel %vm484, %v1623, %v1624
      %v1628 = vsel %vm484, %v1622, %v1623
      %v1629 = vsel %vm484, %v1621, %v1622
      %v1630 = vsel %vm484, %v1620, %v1621
      %v1631 = vsel %vm484, %v1619, %v1620
      %v1632 = vsel %vm484, %v1618, %v1619
      %v1633 = vsel %vm484, %v1617, %v1618
      %v1634 = vsel %vm484, %v1616, %v1617
      %v1635 = vsel %vm484, %v1615, %v1616
      %v1636 = vsel %vm484, %v1614, %v1615
      %v1637 = vsel %vm484, %v1613, %v1614
      %v1638 = vsel %vm484, %v1612, %v1613
      %v1639 = vsel %vm484, %v1611, %v1612
      %v1640 = vsel %vm484, %v1610, %v1611
      %v1641 = vsel %vm484, %v1609, %v1610
      %v1642 = vsel %vm484, %v1608, %v1609
      %v1643 = vsel %vm484, %v1607, %v1608
      %v1644 = vsel %vm484, %v1606, %v1607
      %v1645 = vsel %vm484, %v1605, %v1606
      %v1646 = vsel %vm484, %v1604, %v1605
      %v1647 = vsel %vm484, %v1603, %v1604
      %v1648 = vsel %vm484, %v1602, %v1603
      %v1649 = vsel %vm484, %v1601, %v1602
      %v1650 = vsel %vm484, %v1600, %v1601
      %v1651 = vsel %vm484, %v1599, %v1600
      %v1652 = vsel %vm484, %v1598, %v1599
      %v1653 = vsel %vm484, %v1597, %v1598
      %v1654 = vsel %vm484, %v1596, %v1597
      %v1655 = vsel %vm484, %v1595, %v1596
      %v1656 = vsel %vm484, %v1594, %v1595
      %v1657 = vsel %vm484, %v1593, %v1594
      %v1658 = vsel %vm484, %v1592, %v1593
      %v1659 = vsel %vm484, %v1625, %v1592
      %v1660 = vpack.c.bf16 %v1590, %v1591
      %v1661 = vpack.c.bf16 %v1588, %v1589
      %v1662 = vpack.c.bf16 %v1586, %v1587
      %v1663 = vpack.c.bf16 %v1584, %v1585
      %v1664 = vpack.c.bf16 %v1582, %v1583
      %v1665 = vpack.c.bf16 %v1580, %v1581
      %v1666 = vpack.c.bf16 %v1578, %v1579
      %v1667 = vpack.c.bf16 %v1576, %v1577
      %v1668 = vpack.c.bf16 %v1574, %v1575
      %v1669 = vpack.c.bf16 %v1572, %v1573
      %v1670 = vpack.c.bf16 %v1570, %v1571
      %v1671 = vpack.c.bf16 %v1568, %v1569
      %v1672 = vpack.c.bf16 %v1566, %v1567
      %v1673 = vpack.c.bf16 %v1564, %v1565
      %v1674 = vpack.c.bf16 %v1562, %v1563
      %v1675 = vpack.c.bf16 %v1560, %v1561
      %v1676 = vpack.c.bf16 %v1558, %v1559
      %v1677 = vpack.c.bf16 %v1491, %v1490
      %v1678 = vpack.c.bf16 %v1493, %v1492
      %v1679 = vpack.c.bf16 %v1495, %v1494
      %v1680 = vpack.c.bf16 %v1497, %v1496
      %v1681 = vpack.c.bf16 %v1499, %v1498
      %v1682 = vpack.c.bf16 %v1501, %v1500
      %v1683 = vpack.c.bf16 %v1503, %v1502
      %v1684 = vpack.c.bf16 %v1505, %v1504
      %v1685 = vpack.c.bf16 %v1507, %v1506
      %v1686 = vpack.c.bf16 %v1509, %v1508
      %v1687 = vpack.c.bf16 %v1511, %v1510
      %v1688 = vpack.c.bf16 %v1513, %v1512
      %v1689 = vpack.c.bf16 %v1515, %v1514
      %v1690 = vpack.c.bf16 %v1517, %v1516
      %v1691 = vpack.c.bf16 %v1519, %v1518
      %v1692 = vpack.c.bf16 %v1521, %v1520
      %v1693 = vpack.c.bf16 %v1523, %v1522
      %v1694 = vpack.c.bf16 %v1657, %v1658
      %v1695 = vpack.c.bf16 %v1655, %v1656
      %v1696 = vpack.c.bf16 %v1653, %v1654
      %v1697 = vpack.c.bf16 %v1651, %v1652
      %v1698 = vpack.c.bf16 %v1649, %v1650
      %v1699 = vpack.c.bf16 %v1647, %v1648
      %v1700 = vpack.c.bf16 %v1645, %v1646
      %v1701 = vpack.c.bf16 %v1643, %v1644
      %v1702 = vpack.c.bf16 %v1641, %v1642
      %v1703 = vpack.c.bf16 %v1639, %v1640
      %v1704 = vpack.c.bf16 %v1637, %v1638
      %v1705 = vpack.c.bf16 %v1635, %v1636
      %v1706 = vpack.c.bf16 %v1633, %v1634
      %v1707 = vpack.c.bf16 %v1631, %v1632
      %v1708 = vpack.c.bf16 %v1629, %v1630
      %v1709 = vpack.c.bf16 %v1627, %v1628
      %v1710 = vpack.c.bf16 %v1659, %v1626
      %v1711 = vld [vmem:[%s4] sm:$0xff]
      %v1712 = vld [vmem:[%s4 + $0x8] sm:$0xff]
      %v1713 = vld [vmem:[%s4 + $0x10] sm:$0xff]
      %v1714 = vld [vmem:[%s4 + $0x18] sm:$0xff]
      %v1715 = vld [vmem:[%s4 + $0x20] sm:$0xff]
      %v1716 = vld [vmem:[%s4 + $0x28] sm:$0xff]
      %v1717 = vld [vmem:[%s4 + $0x30] sm:$0xff]
      %v1718 = vld [vmem:[%s4 + $0x38] sm:$0xff]
      %v1719 = vld [vmem:[%s4 + $0x40] sm:$0xff]
      %v1720 = vld [vmem:[%s4 + $0x48] sm:$0xff]
      %v1721 = vld [vmem:[%s4 + $0x50] sm:$0xff]
      %v1722 = vld [vmem:[%s4 + $0x58] sm:$0xff]
      %v1723 = vld [vmem:[%s4 + $0x60] sm:$0xff]
      %v1724 = vld [vmem:[%s4 + $0x68] sm:$0xff]
      %v1725 = vld [vmem:[%s4 + $0x70] sm:$0xff]
      %v1726 = vld [vmem:[%s4 + $0x78] sm:$0xff]
      %v1727 = vld [vmem:[%s4 + $0x80] sm:$0xff]
      %v1728 = vld [vmem:[%s4 + $0x88] sm:$0xff]
      %v1729 = vld [vmem:[%s4 + $0x90] sm:$0xff]
      %v1730 = vld [vmem:[%s4 + $0x98] sm:$0xff]
      %v1731 = vld [vmem:[%s4 + $0xa0] sm:$0xff]
      %v1732 = vld [vmem:[%s4 + $0xa8] sm:$0xff]
      %v1733 = vld [vmem:[%s4 + $0xb0] sm:$0xff]
      %v1734 = vld [vmem:[%s4 + $0xb8] sm:$0xff]
      %v1735 = vld [vmem:[%s4 + $0xc0] sm:$0xff]
      %v1736 = vld [vmem:[%s4 + $0xc8] sm:$0xff]
      %v1737 = vld [vmem:[%s4 + $0xd0] sm:$0xff]
      %v1738 = vld [vmem:[%s4 + $0xd8] sm:$0xff]
      %v1739 = vld [vmem:[%s4 + $0xe0] sm:$0xff]
      %v1740 = vld [vmem:[%s4 + $0xe8] sm:$0xff]
      %v1741 = vld [vmem:[%s4 + $0xf0] sm:$0xff]
      %v1742 = vld [vmem:[%s4 + $0xf8] sm:$0xff]
      %v1743 = vld [vmem:[%s4 + $0x100] sm:$0xff]
      %v1744 = vld [vmem:[%s4 + $0x108] sm:$0xff]
      %v1745 = vld [vmem:[%s4 + $0x110] sm:$0xff]
      %v1746 = vld [vmem:[%s4 + $0x118] sm:$0xff]
      %v1747 = vld [vmem:[%s4 + $0x120] sm:$0xff]
      %v1748 = vld [vmem:[%s4 + $0x128] sm:$0xff]
      %v1749 = vld [vmem:[%s4 + $0x130] sm:$0xff]
      %v1750 = vld [vmem:[%s4 + $0x138] sm:$0xff]
      %v1751 = vld [vmem:[%s4 + $0x140] sm:$0xff]
      %v1752 = vld [vmem:[%s4 + $0x148] sm:$0xff]
      %v1753 = vld [vmem:[%s4 + $0x150] sm:$0xff]
      %v1754 = vld [vmem:[%s4 + $0x158] sm:$0xff]
      %v1755 = vld [vmem:[%s4 + $0x160] sm:$0xff]
      %v1756 = vld [vmem:[%s4 + $0x168] sm:$0xff]
      %v1757 = vld [vmem:[%s4 + $0x170] sm:$0xff]
      %v1758 = vld [vmem:[%s4 + $0x178] sm:$0xff]
      %v1759 = vld [vmem:[%s5] sm:$0x3]
      %v1761 = vlaneseq
      %v1762 = vshrl.u32 %v1761, 7
      %v1763 = vsub.s32 0, %v1762
      %v1764 = vrot.slane %v1759, %v1763
      %v1765 = vlaneseq
      %v1766 = vshrl.u32 %v1765, 7
      %v1767 = vsub.s32 1, %v1766
      %v1768 = vrot.slane %v1759, %v1767
      %v1819 = vunpack.c.l.b16 %v1711
      %v1820 = vunpack.c.h.b16 %v1711
      %v1821 = vunpack.c.l.b16 %v1712
      %v1822 = vunpack.c.h.b16 %v1712
      %v1823 = vunpack.c.l.b16 %v1713
      %v1824 = vunpack.c.h.b16 %v1713
      %v1825 = vunpack.c.l.b16 %v1714
      %v1826 = vunpack.c.h.b16 %v1714
      %v1827 = vunpack.c.l.b16 %v1715
      %v1828 = vunpack.c.h.b16 %v1715
      %v1829 = vunpack.c.l.b16 %v1716
      %v1830 = vunpack.c.h.b16 %v1716
      %v1831 = vunpack.c.l.b16 %v1717
      %v1832 = vunpack.c.h.b16 %v1717
      %v1833 = vunpack.c.l.b16 %v1718
      %v1834 = vunpack.c.h.b16 %v1718
      %v1835 = vunpack.c.l.b16 %v1719
      %v1836 = vunpack.c.h.b16 %v1719
      %v1837 = vunpack.c.l.b16 %v1720
      %v1838 = vunpack.c.h.b16 %v1720
      %v1839 = vunpack.c.l.b16 %v1721
      %v1840 = vunpack.c.h.b16 %v1721
      %v1841 = vunpack.c.l.b16 %v1722
      %v1842 = vunpack.c.h.b16 %v1722
      %v1843 = vunpack.c.l.b16 %v1723
      %v1844 = vunpack.c.h.b16 %v1723
      %v1845 = vunpack.c.l.b16 %v1724
      %v1846 = vunpack.c.h.b16 %v1724
      %v1847 = vunpack.c.l.b16 %v1725
      %v1848 = vunpack.c.h.b16 %v1725
      %v1849 = vunpack.c.l.b16 %v1726
      %v1850 = vunpack.c.h.b16 %v1726
      %v1851 = vunpack.c.l.b16 %v1727
      %v1852 = vunpack.c.h.b16 %v1727
      %v1853 = vunpack.c.l.b16 %v1728
      %v1854 = vunpack.c.h.b16 %v1728
      %v1855 = vunpack.c.l.b16 %v1729
      %v1856 = vunpack.c.h.b16 %v1729
      %v1857 = vunpack.c.l.b16 %v1730
      %v1858 = vunpack.c.h.b16 %v1730
      %v1859 = vunpack.c.l.b16 %v1731
      %v1860 = vunpack.c.h.b16 %v1731
      %v1861 = vunpack.c.l.b16 %v1732
      %v1862 = vunpack.c.h.b16 %v1732
      %v1863 = vunpack.c.l.b16 %v1733
      %v1864 = vunpack.c.h.b16 %v1733
      %v1865 = vunpack.c.l.b16 %v1734
      %v1866 = vunpack.c.h.b16 %v1734
      %v1867 = vunpack.c.l.b16 %v1735
      %v1868 = vunpack.c.h.b16 %v1735
      %v1869 = vunpack.c.l.b16 %v1736
      %v1870 = vunpack.c.h.b16 %v1736
      %v1871 = vunpack.c.l.b16 %v1737
      %v1872 = vunpack.c.h.b16 %v1737
      %v1873 = vunpack.c.l.b16 %v1738
      %v1874 = vunpack.c.h.b16 %v1738
      %v1875 = vunpack.c.l.b16 %v1739
      %v1876 = vunpack.c.h.b16 %v1739
      %v1877 = vunpack.c.l.b16 %v1740
      %v1878 = vunpack.c.h.b16 %v1740
      %v1879 = vunpack.c.l.b16 %v1741
      %v1880 = vunpack.c.h.b16 %v1741
      %v1881 = vunpack.c.l.b16 %v1742
      %v1882 = vunpack.c.h.b16 %v1742
      %v1883 = vunpack.c.l.b16 %v1743
      %v1884 = vunpack.c.h.b16 %v1743
      %v1885 = vunpack.c.l.b16 %v1744
      %v1886 = vunpack.c.h.b16 %v1744
      %v1887 = vunpack.c.l.b16 %v1745
      %v1888 = vunpack.c.h.b16 %v1745
      %v1889 = vunpack.c.l.b16 %v1746
      %v1890 = vunpack.c.h.b16 %v1746
      %v1891 = vunpack.c.l.b16 %v1747
      %v1892 = vunpack.c.h.b16 %v1747
      %v1893 = vunpack.c.l.b16 %v1748
      %v1894 = vunpack.c.h.b16 %v1748
      %v1895 = vunpack.c.l.b16 %v1749
      %v1896 = vunpack.c.h.b16 %v1749
      %v1897 = vunpack.c.l.b16 %v1750
      %v1898 = vunpack.c.h.b16 %v1750
      %v1899 = vunpack.c.l.b16 %v1751
      %v1900 = vunpack.c.h.b16 %v1751
      %v1901 = vunpack.c.l.b16 %v1752
      %v1902 = vunpack.c.h.b16 %v1752
      %v1903 = vunpack.c.l.b16 %v1753
      %v1904 = vunpack.c.h.b16 %v1753
      %v1905 = vunpack.c.l.b16 %v1754
      %v1906 = vunpack.c.h.b16 %v1754
      %v1907 = vunpack.c.l.b16 %v1755
      %v1908 = vunpack.c.h.b16 %v1755
      %v1909 = vunpack.c.l.b16 %v1756
      %v1910 = vunpack.c.h.b16 %v1756
      %v1911 = vunpack.c.l.b16 %v1757
      %v1912 = vunpack.c.h.b16 %v1757
      %v1913 = vunpack.c.l.b16 %v1758
      %v1914 = vunpack.c.h.b16 %v1758
      %v1915 = vpack.c.b16 %v1821, %v1819
      %v1916 = vpack.c.b16 %v1822, %v1820
      %v1917 = vpack.c.b16 %v1825, %v1823
      %v1918 = vpack.c.b16 %v1826, %v1824
      %v1919 = vpack.c.b16 %v1829, %v1827
      %v1920 = vpack.c.b16 %v1830, %v1828
      %v1921 = vpack.c.b16 %v1833, %v1831
      %v1922 = vpack.c.b16 %v1834, %v1832
      %v1923 = vpack.c.b16 %v1837, %v1835
      %v1924 = vpack.c.b16 %v1838, %v1836
      %v1925 = vpack.c.b16 %v1841, %v1839
      %v1926 = vpack.c.b16 %v1842, %v1840
      %v1927 = vpack.c.b16 %v1845, %v1843
      %v1928 = vpack.c.b16 %v1846, %v1844
      %v1929 = vpack.c.b16 %v1849, %v1847
      %v1930 = vpack.c.b16 %v1850, %v1848
      %v1931 = vpack.c.b16 %v1853, %v1851
      %v1932 = vpack.c.b16 %v1854, %v1852
      %v1933 = vpack.c.b16 %v1857, %v1855
      %v1934 = vpack.c.b16 %v1858, %v1856
      %v1935 = vpack.c.b16 %v1861, %v1859
      %v1936 = vpack.c.b16 %v1862, %v1860
      %v1937 = vpack.c.b16 %v1865, %v1863
      %v1938 = vpack.c.b16 %v1866, %v1864
      %v1939 = vpack.c.b16 %v1869, %v1867
      %v1940 = vpack.c.b16 %v1870, %v1868
      %v1941 = vpack.c.b16 %v1873, %v1871
      %v1942 = vpack.c.b16 %v1874, %v1872
      %v1943 = vpack.c.b16 %v1877, %v1875
      %v1944 = vpack.c.b16 %v1878, %v1876
      %v1945 = vpack.c.b16 %v1881, %v1879
      %v1946 = vpack.c.b16 %v1882, %v1880
      %v1947 = vpack.c.b16 %v1885, %v1883
      %v1948 = vpack.c.b16 %v1886, %v1884
      %v1949 = vpack.c.b16 %v1889, %v1887
      %v1950 = vpack.c.b16 %v1890, %v1888
      %v1951 = vpack.c.b16 %v1893, %v1891
      %v1952 = vpack.c.b16 %v1894, %v1892
      %v1953 = vpack.c.b16 %v1897, %v1895
      %v1954 = vpack.c.b16 %v1898, %v1896
      %v1955 = vpack.c.b16 %v1901, %v1899
      %v1956 = vpack.c.b16 %v1902, %v1900
      %v1957 = vpack.c.b16 %v1905, %v1903
      %v1958 = vpack.c.b16 %v1906, %v1904
      %v1959 = vpack.c.b16 %v1909, %v1907
      %v1960 = vpack.c.b16 %v1910, %v1908
      %v1961 = vpack.c.b16 %v1913, %v1911
      %v1962 = vpack.c.b16 %v1914, %v1912
      %2011 = vmatprep.subr.bf16.mxu0 %v1916
      %2012 = vmatpush1.bf16.msra.mxu0 %v1915
      %2013 = vmatprep.subr.bf16.mxu0 %v1918
      %2014 = vmatpush1.bf16.msra.mxu0 %v1917
      %2015 = vmatprep.subr.bf16.mxu0 %v1920
      %2016 = vmatpush1.bf16.msra.mxu0 %v1919
      %2017 = vmatprep.subr.bf16.mxu0 %v1922
      %2018 = vmatpush1.bf16.msra.mxu0 %v1921
      %2019 = vmatprep.subr.bf16.mxu0 %v1924
      %2020 = vmatpush1.bf16.msra.mxu0 %v1923
      %2021 = vmatprep.subr.bf16.mxu0 %v1926
      %2022 = vmatpush1.bf16.msra.mxu0 %v1925
      %2023 = vmatprep.subr.bf16.mxu0 %v1928
      %2024 = vmatpush1.bf16.msra.mxu0 %v1927
      %2025 = vmatprep.subr.bf16.mxu0 %v1930
      %2026 = vmatpush1.bf16.msra.mxu0 %v1929
      %2027 = vmatprep.subr.bf16.mxu0 %v1932
      %2028 = vmatpush1.bf16.msra.mxu0 %v1931
      %2029 = vmatprep.subr.bf16.mxu0 %v1934
      %2030 = vmatpush1.bf16.msra.mxu0 %v1933
      %2031 = vmatprep.subr.bf16.mxu0 %v1936
      %2032 = vmatpush1.bf16.msra.mxu0 %v1935
      %2033 = vmatprep.subr.bf16.mxu0 %v1938
      %2034 = vmatpush1.bf16.msra.mxu0 %v1937
      %2035 = vmatprep.subr.bf16.mxu0 %v1940
      %2036 = vmatpush1.bf16.msra.mxu0 %v1939
      %2037 = vmatprep.subr.bf16.mxu0 %v1942
      %2038 = vmatpush1.bf16.msra.mxu0 %v1941
      %2039 = vmatprep.subr.bf16.mxu0 %v1944
      %2040 = vmatpush1.bf16.msra.mxu0 %v1943
      %2041 = vmatprep.subr.bf16.mxu0 %v1946
      %2042 = vmatpush1.bf16.msra.mxu0 %v1945
      %2043 = vmatprep.mubr.bf16.mxu0 %v1677
      %2044 = vmatmul.mubr.bf16.gmra.mrb[0].mxu0 %v1660
      %v2045 = vpop.f32.mrb[0].mxu0
      %v2046 = vadd.f32 %v1764, %v2045
      %v2047 = vpop.f32.mrb[0].mxu0
      %v2048 = vadd.f32 %v1768, %v2047
      %v2049 = vpop.f32.mrb[0].mxu0
      %v2050 = vadd.f32 %v1764, %v2049
      %v2051 = vpop.f32.mrb[0].mxu0
      %v2052 = vadd.f32 %v1768, %v2051
      %2053 = vmatprep.mubr.bf16.mxu0 %v1678
      %2054 = vmatmul.mubr.bf16.gmra.mrb[0].mxu0 %v1661
      %v2055 = vpop.f32.mrb[0].mxu0
      %v2056 = vadd.f32 %v1764, %v2055
      %v2057 = vpop.f32.mrb[0].mxu0
      %v2058 = vadd.f32 %v1768, %v2057
      %v2059 = vpop.f32.mrb[0].mxu0
      %v2060 = vadd.f32 %v1764, %v2059
      %v2061 = vpop.f32.mrb[0].mxu0
      %v2062 = vadd.f32 %v1768, %v2061
      %2063 = vmatprep.mubr.bf16.mxu0 %v1679
      %2064 = vmatmul.mubr.bf16.gmra.mrb[0].mxu0 %v1662
      %v2065 = vpop.f32.mrb[0].mxu0
      %v2066 = vadd.f32 %v1764, %v2065
      %v2067 = vpop.f32.mrb[0].mxu0
      %v2068 = vadd.f32 %v1768, %v2067
      %v2069 = vpop.f32.mrb[0].mxu0
      %v2070 = vadd.f32 %v1764, %v2069
      %v2071 = vpop.f32.mrb[0].mxu0
      %v2072 = vadd.f32 %v1768, %v2071
      %2073 = vmatprep.mubr.bf16.mxu0 %v1680
      %2074 = vmatmul.mubr.bf16.gmra.mrb[0].mxu0 %v1663
      %v2075 = vpop.f32.mrb[0].mxu0
      %v2076 = vadd.f32 %v1764, %v2075
      %v2077 = vpop.f32.mrb[0].mxu0
      %v2078 = vadd.f32 %v1768, %v2077
      %v2079 = vpop.f32.mrb[0].mxu0
      %v2080 = vadd.f32 %v1764, %v2079
      %v2081 = vpop.f32.mrb[0].mxu0
      %v2082 = vadd.f32 %v1768, %v2081
      %2083 = vmatprep.mubr.bf16.mxu0 %v1681
      %2084 = vmatmul.mubr.bf16.gmra.mrb[0].mxu0 %v1664
      %v2085 = vpop.f32.mrb[0].mxu0
      %v2086 = vadd.f32 %v1764, %v2085
      %v2087 = vpop.f32.mrb[0].mxu0
      %v2088 = vadd.f32 %v1768, %v2087
      %v2089 = vpop.f32.mrb[0].mxu0
      %v2090 = vadd.f32 %v1764, %v2089
      %v2091 = vpop.f32.mrb[0].mxu0
      %v2092 = vadd.f32 %v1768, %v2091
      %2093 = vmatprep.mubr.bf16.mxu0 %v1682
      %2094 = vmatmul.mubr.bf16.gmra.mrb[0].mxu0 %v1665
      %v2095 = vpop.f32.mrb[0].mxu0
      %v2096 = vadd.f32 %v1764, %v2095
      %v2097 = vpop.f32.mrb[0].mxu0
      %v2098 = vadd.f32 %v1768, %v2097
      %v2099 = vpop.f32.mrb[0].mxu0
      %v2100 = vadd.f32 %v1764, %v2099
      %v2101 = vpop.f32.mrb[0].mxu0
      %v2102 = vadd.f32 %v1768, %v2101
      %2103 = vmatprep.mubr.bf16.mxu0 %v1683
      %2104 = vmatmul.mubr.bf16.gmra.mrb[0].mxu0 %v1666
      %v2105 = vpop.f32.mrb[0].mxu0
      %v2106 = vadd.f32 %v1764, %v2105
      %v2107 = vpop.f32.mrb[0].mxu0
      %v2108 = vadd.f32 %v1768, %v2107
      %v2109 = vpop.f32.mrb[0].mxu0
      %v2110 = vadd.f32 %v1764, %v2109
      %v2111 = vpop.f32.mrb[0].mxu0
      %v2112 = vadd.f32 %v1768, %v2111
      %2113 = vmatprep.mubr.bf16.mxu0 %v1684
      %2114 = vmatmul.mubr.bf16.gmra.mrb[0].mxu0 %v1667
      %v2115 = vpop.f32.mrb[0].mxu0
      %v2116 = vadd.f32 %v1764, %v2115
      %v2117 = vpop.f32.mrb[0].mxu0
      %v2118 = vadd.f32 %v1768, %v2117
      %v2119 = vpop.f32.mrb[0].mxu0
      %v2120 = vadd.f32 %v1764, %v2119
      %v2121 = vpop.f32.mrb[0].mxu0
      %v2122 = vadd.f32 %v1768, %v2121
      %2123 = vmatprep.mubr.bf16.mxu0 %v1685
      %2124 = vmatmul.mubr.bf16.gmra.mrb[0].mxu0 %v1668
      %v2125 = vpop.f32.mrb[0].mxu0
      %v2126 = vadd.f32 %v1764, %v2125
      %v2127 = vpop.f32.mrb[0].mxu0
      %v2128 = vadd.f32 %v1768, %v2127
      %v2129 = vpop.f32.mrb[0].mxu0
      %v2130 = vadd.f32 %v1764, %v2129
      %v2131 = vpop.f32.mrb[0].mxu0
      %v2132 = vadd.f32 %v1768, %v2131
      %2133 = vmatprep.mubr.bf16.mxu0 %v1686
      %2134 = vmatmul.mubr.bf16.gmra.mrb[0].mxu0 %v1669
      %v2135 = vpop.f32.mrb[0].mxu0
      %v2136 = vadd.f32 %v1764, %v2135
      %v2137 = vpop.f32.mrb[0].mxu0
      %v2138 = vadd.f32 %v1768, %v2137
      %v2139 = vpop.f32.mrb[0].mxu0
      %v2140 = vadd.f32 %v1764, %v2139
      %v2141 = vpop.f32.mrb[0].mxu0
      %v2142 = vadd.f32 %v1768, %v2141
      %2143 = vmatprep.mubr.bf16.mxu0 %v1687
      %2144 = vmatmul.mubr.bf16.gmra.mrb[0].mxu0 %v1670
      %v2145 = vpop.f32.mrb[0].mxu0
      %v2146 = vadd.f32 %v1764, %v2145
      %v2147 = vpop.f32.mrb[0].mxu0
      %v2148 = vadd.f32 %v1768, %v2147
      %v2149 = vpop.f32.mrb[0].mxu0
      %v2150 = vadd.f32 %v1764, %v2149
      %v2151 = vpop.f32.mrb[0].mxu0
      %v2152 = vadd.f32 %v1768, %v2151
      %2153 = vmatprep.mubr.bf16.mxu0 %v1688
      %2154 = vmatmul.mubr.bf16.gmra.mrb[0].mxu0 %v1671
      %v2155 = vpop.f32.mrb[0].mxu0
      %v2156 = vadd.f32 %v1764, %v2155
      %v2157 = vpop.f32.mrb[0].mxu0
      %v2158 = vadd.f32 %v1768, %v2157
      %v2159 = vpop.f32.mrb[0].mxu0
      %v2160 = vadd.f32 %v1764, %v2159
      %v2161 = vpop.f32.mrb[0].mxu0
      %v2162 = vadd.f32 %v1768, %v2161
      %2163 = vmatprep.mubr.bf16.mxu0 %v1689
      %2164 = vmatmul.mubr.bf16.gmra.mrb[0].mxu0 %v1672
      %v2165 = vpop.f32.mrb[0].mxu0
      %v2166 = vadd.f32 %v1764, %v2165
      %v2167 = vpop.f32.mrb[0].mxu0
      %v2168 = vadd.f32 %v1768, %v2167
      %v2169 = vpop.f32.mrb[0].mxu0
      %v2170 = vadd.f32 %v1764, %v2169
      %v2171 = vpop.f32.mrb[0].mxu0
      %v2172 = vadd.f32 %v1768, %v2171
      %2173 = vmatprep.mubr.bf16.mxu0 %v1690
      %2174 = vmatmul.mubr.bf16.gmra.mrb[0].mxu0 %v1673
      %v2175 = vpop.f32.mrb[0].mxu0
      %v2176 = vadd.f32 %v1764, %v2175
      %v2177 = vpop.f32.mrb[0].mxu0
      %v2178 = vadd.f32 %v1768, %v2177
      %v2179 = vpop.f32.mrb[0].mxu0
      %v2180 = vadd.f32 %v1764, %v2179
      %v2181 = vpop.f32.mrb[0].mxu0
      %v2182 = vadd.f32 %v1768, %v2181
      %2183 = vmatprep.mubr.bf16.mxu0 %v1691
      %2184 = vmatmul.mubr.bf16.gmra.mrb[0].mxu0 %v1674
      %v2185 = vpop.f32.mrb[0].mxu0
      %v2186 = vadd.f32 %v1764, %v2185
      %v2187 = vpop.f32.mrb[0].mxu0
      %v2188 = vadd.f32 %v1768, %v2187
      %v2189 = vpop.f32.mrb[0].mxu0
      %v2190 = vadd.f32 %v1764, %v2189
      %v2191 = vpop.f32.mrb[0].mxu0
      %v2192 = vadd.f32 %v1768, %v2191
      %2193 = vmatprep.mubr.bf16.mxu0 %v1692
      %2194 = vmatmul.mubr.bf16.gmra.mrb[0].mxu0 %v1675
      %v2195 = vpop.f32.mrb[0].mxu0
      %v2196 = vadd.f32 %v1764, %v2195
      %v2197 = vpop.f32.mrb[0].mxu0
      %v2198 = vadd.f32 %v1768, %v2197
      %v2199 = vpop.f32.mrb[0].mxu0
      %v2200 = vadd.f32 %v1764, %v2199
      %v2201 = vpop.f32.mrb[0].mxu0
      %v2202 = vadd.f32 %v1768, %v2201
      %2203 = vmatprep.mubr.bf16.mxu0 %v1693
      %2204 = vmatmul.mubr.bf16.gmra.mrb[0].mxu0 %v1676
      %v2205 = vpop.f32.mrb[0].mxu0
      %v2206 = vadd.f32 %v1764, %v2205
      %v2207 = vpop.f32.mrb[0].mxu0
      %v2208 = vadd.f32 %v1768, %v2207
      %v2209 = vpop.f32.mrb[0].mxu0
      %v2210 = vadd.f32 %v1764, %v2209
      %v2211 = vpop.f32.mrb[0].mxu0
      %v2212 = vadd.f32 %v1768, %v2211
      %2213 = vdwg.mxu0
      %2214 = vmatprep.subr.bf16.mxu0 %v1948
      %2215 = vmatpush1.bf16.msra.mxu0 %v1947
      %2216 = vmatprep.subr.bf16.mxu0 %v1950
      %2217 = vmatpush1.bf16.msra.mxu0 %v1949
      %2218 = vmatprep.subr.bf16.mxu0 %v1952
      %2219 = vmatpush1.bf16.msra.mxu0 %v1951
      %2220 = vmatprep.subr.bf16.mxu0 %v1954
      %2221 = vmatpush1.bf16.msra.mxu0 %v1953
      %2222 = vmatprep.subr.bf16.mxu0 %v1956
      %2223 = vmatpush1.bf16.msra.mxu0 %v1955
      %2224 = vmatprep.subr.bf16.mxu0 %v1958
      %2225 = vmatpush1.bf16.msra.mxu0 %v1957
      %2226 = vmatprep.subr.bf16.mxu0 %v1960
      %2227 = vmatpush1.bf16.msra.mxu0 %v1959
      %2228 = vmatprep.subr.bf16.mxu0 %v1962
      %2229 = vmatpush1.bf16.msra.mxu0 %v1961
      %2230 = vmatprep.subr.bf16.mxu0 0
      %2231 = vmatpush1.bf16.msra.mxu0 0
      %2232 = vmatprep.subr.bf16.mxu0 0
      %2233 = vmatpush1.bf16.msra.mxu0 0
      %2234 = vmatprep.subr.bf16.mxu0 0
      %2235 = vmatpush1.bf16.msra.mxu0 0
      %2236 = vmatprep.subr.bf16.mxu0 0
      %2237 = vmatpush1.bf16.msra.mxu0 0
      %2238 = vmatprep.subr.bf16.mxu0 0
      %2239 = vmatpush1.bf16.msra.mxu0 0
      %2240 = vmatprep.subr.bf16.mxu0 0
      %2241 = vmatpush1.bf16.msra.mxu0 0
      %2242 = vmatprep.subr.bf16.mxu0 0
      %2243 = vmatpush1.bf16.msra.mxu0 0
      %2244 = vmatprep.subr.bf16.mxu0 0
      %2245 = vmatpush1.bf16.msra.mxu0 0
      %2246 = vmatprep.mubr.bf16.mxu0 0
      %2247 = vmatmul.mubr.bf16.gmra.mrb[0].mxu0 %v1694
      %v2248 = vpop.f32.mrb[0].mxu0
      %v2249 = vadd.f32 %v2046, %v2248
      %v2250 = vpop.f32.mrb[0].mxu0
      %v2251 = vadd.f32 %v2048, %v2250
      %v2252 = vpop.f32.mrb[0].mxu0
      %v2253 = vadd.f32 %v2050, %v2252
      %v2254 = vpop.f32.mrb[0].mxu0
      %v2255 = vadd.f32 %v2052, %v2254
      %2256 = vmatprep.mubr.bf16.mxu0 0
      %2257 = vmatmul.mubr.bf16.gmra.mrb[0].mxu0 %v1695
      %v2258 = vpop.f32.mrb[0].mxu0
      %v2259 = vadd.f32 %v2056, %v2258
      %v2260 = vpop.f32.mrb[0].mxu0
      %v2261 = vadd.f32 %v2058, %v2260
      %v2262 = vpop.f32.mrb[0].mxu0
      %v2263 = vadd.f32 %v2060, %v2262
      %v2264 = vpop.f32.mrb[0].mxu0
      %v2265 = vadd.f32 %v2062, %v2264
      %2266 = vmatprep.mubr.bf16.mxu0 0
      %2267 = vmatmul.mubr.bf16.gmra.mrb[0].mxu0 %v1696
      %v2268 = vpop.f32.mrb[0].mxu0
      %v2269 = vadd.f32 %v2066, %v2268
      %v2270 = vpop.f32.mrb[0].mxu0
      %v2271 = vadd.f32 %v2068, %v2270
      %v2272 = vpop.f32.mrb[0].mxu0
      %v2273 = vadd.f32 %v2070, %v2272
      %v2274 = vpop.f32.mrb[0].mxu0
      %v2275 = vadd.f32 %v2072, %v2274
      %2276 = vmatprep.mubr.bf16.mxu0 0
      %2277 = vmatmul.mubr.bf16.gmra.mrb[0].mxu0 %v1697
      %v2278 = vpop.f32.mrb[0].mxu0
      %v2279 = vadd.f32 %v2076, %v2278
      %v2280 = vpop.f32.mrb[0].mxu0
      %v2281 = vadd.f32 %v2078, %v2280
      %v2282 = vpop.f32.mrb[0].mxu0
      %v2283 = vadd.f32 %v2080, %v2282
      %v2284 = vpop.f32.mrb[0].mxu0
      %v2285 = vadd.f32 %v2082, %v2284
      %2286 = vmatprep.mubr.bf16.mxu0 0
      %2287 = vmatmul.mubr.bf16.gmra.mrb[0].mxu0 %v1698
      %v2288 = vpop.f32.mrb[0].mxu0
      %v2289 = vadd.f32 %v2086, %v2288
      %v2290 = vpop.f32.mrb[0].mxu0
      %v2291 = vadd.f32 %v2088, %v2290
      %v2292 = vpop.f32.mrb[0].mxu0
      %v2293 = vadd.f32 %v2090, %v2292
      %v2294 = vpop.f32.mrb[0].mxu0
      %v2295 = vadd.f32 %v2092, %v2294
      %2296 = vmatprep.mubr.bf16.mxu0 0
      %2297 = vmatmul.mubr.bf16.gmra.mrb[0].mxu0 %v1699
      %v2298 = vpop.f32.mrb[0].mxu0
      %v2299 = vadd.f32 %v2096, %v2298
      %v2300 = vpop.f32.mrb[0].mxu0
      %v2301 = vadd.f32 %v2098, %v2300
      %v2302 = vpop.f32.mrb[0].mxu0
      %v2303 = vadd.f32 %v2100, %v2302
      %v2304 = vpop.f32.mrb[0].mxu0
      %v2305 = vadd.f32 %v2102, %v2304
      %2306 = vmatprep.mubr.bf16.mxu0 0
      %2307 = vmatmul.mubr.bf16.gmra.mrb[0].mxu0 %v1700
      %v2308 = vpop.f32.mrb[0].mxu0
      %v2309 = vadd.f32 %v2106, %v2308
      %v2310 = vpop.f32.mrb[0].mxu0
      %v2311 = vadd.f32 %v2108, %v2310
      %v2312 = vpop.f32.mrb[0].mxu0
      %v2313 = vadd.f32 %v2110, %v2312
      %v2314 = vpop.f32.mrb[0].mxu0
      %v2315 = vadd.f32 %v2112, %v2314
      %2316 = vmatprep.mubr.bf16.mxu0 0
      %2317 = vmatmul.mubr.bf16.gmra.mrb[0].mxu0 %v1701
      %v2318 = vpop.f32.mrb[0].mxu0
      %v2319 = vadd.f32 %v2116, %v2318
      %v2320 = vpop.f32.mrb[0].mxu0
      %v2321 = vadd.f32 %v2118, %v2320
      %v2322 = vpop.f32.mrb[0].mxu0
      %v2323 = vadd.f32 %v2120, %v2322
      %v2324 = vpop.f32.mrb[0].mxu0
      %v2325 = vadd.f32 %v2122, %v2324
      %2326 = vmatprep.mubr.bf16.mxu0 0
      %2327 = vmatmul.mubr.bf16.gmra.mrb[0].mxu0 %v1702
      %v2328 = vpop.f32.mrb[0].mxu0
      %v2329 = vadd.f32 %v2126, %v2328
      %v2330 = vpop.f32.mrb[0].mxu0
      %v2331 = vadd.f32 %v2128, %v2330
      %v2332 = vpop.f32.mrb[0].mxu0
      %v2333 = vadd.f32 %v2130, %v2332
      %v2334 = vpop.f32.mrb[0].mxu0
      %v2335 = vadd.f32 %v2132, %v2334
      %2336 = vmatprep.mubr.bf16.mxu0 0
      %2337 = vmatmul.mubr.bf16.gmra.mrb[0].mxu0 %v1703
      %v2338 = vpop.f32.mrb[0].mxu0
      %v2339 = vadd.f32 %v2136, %v2338
      %v2340 = vpop.f32.mrb[0].mxu0
      %v2341 = vadd.f32 %v2138, %v2340
      %v2342 = vpop.f32.mrb[0].mxu0
      %v2343 = vadd.f32 %v2140, %v2342
      %v2344 = vpop.f32.mrb[0].mxu0
      %v2345 = vadd.f32 %v2142, %v2344
      %2346 = vmatprep.mubr.bf16.mxu0 0
      %2347 = vmatmul.mubr.bf16.gmra.mrb[0].mxu0 %v1704
      %v2348 = vpop.f32.mrb[0].mxu0
      %v2349 = vadd.f32 %v2146, %v2348
      %v2350 = vpop.f32.mrb[0].mxu0
      %v2351 = vadd.f32 %v2148, %v2350
      %v2352 = vpop.f32.mrb[0].mxu0
      %v2353 = vadd.f32 %v2150, %v2352
      %v2354 = vpop.f32.mrb[0].mxu0
      %v2355 = vadd.f32 %v2152, %v2354
      %2356 = vmatprep.mubr.bf16.mxu0 0
      %2357 = vmatmul.mubr.bf16.gmra.mrb[0].mxu0 %v1705
      %v2358 = vpop.f32.mrb[0].mxu0
      %v2359 = vadd.f32 %v2156, %v2358
      %v2360 = vpop.f32.mrb[0].mxu0
      %v2361 = vadd.f32 %v2158, %v2360
      %v2362 = vpop.f32.mrb[0].mxu0
      %v2363 = vadd.f32 %v2160, %v2362
      %v2364 = vpop.f32.mrb[0].mxu0
      %v2365 = vadd.f32 %v2162, %v2364
      %2366 = vmatprep.mubr.bf16.mxu0 0
      %2367 = vmatmul.mubr.bf16.gmra.mrb[0].mxu0 %v1706
      %v2368 = vpop.f32.mrb[0].mxu0
      %v2369 = vadd.f32 %v2166, %v2368
      %v2370 = vpop.f32.mrb[0].mxu0
      %v2371 = vadd.f32 %v2168, %v2370
      %v2372 = vpop.f32.mrb[0].mxu0
      %v2373 = vadd.f32 %v2170, %v2372
      %v2374 = vpop.f32.mrb[0].mxu0
      %v2375 = vadd.f32 %v2172, %v2374
      %2376 = vmatprep.mubr.bf16.mxu0 0
      %2377 = vmatmul.mubr.bf16.gmra.mrb[0].mxu0 %v1707
      %v2378 = vpop.f32.mrb[0].mxu0
      %v2379 = vadd.f32 %v2176, %v2378
      %v2380 = vpop.f32.mrb[0].mxu0
      %v2381 = vadd.f32 %v2178, %v2380
      %v2382 = vpop.f32.mrb[0].mxu0
      %v2383 = vadd.f32 %v2180, %v2382
      %v2384 = vpop.f32.mrb[0].mxu0
      %v2385 = vadd.f32 %v2182, %v2384
      %2386 = vmatprep.mubr.bf16.mxu0 0
      %2387 = vmatmul.mubr.bf16.gmra.mrb[0].mxu0 %v1708
      %v2388 = vpop.f32.mrb[0].mxu0
      %v2389 = vadd.f32 %v2186, %v2388
      %v2390 = vpop.f32.mrb[0].mxu0
      %v2391 = vadd.f32 %v2188, %v2390
      %v2392 = vpop.f32.mrb[0].mxu0
      %v2393 = vadd.f32 %v2190, %v2392
      %v2394 = vpop.f32.mrb[0].mxu0
      %v2395 = vadd.f32 %v2192, %v2394
      %2396 = vmatprep.mubr.bf16.mxu0 0
      %2397 = vmatmul.mubr.bf16.gmra.mrb[0].mxu0 %v1709
      %v2398 = vpop.f32.mrb[0].mxu0
      %v2399 = vadd.f32 %v2196, %v2398
      %v2400 = vpop.f32.mrb[0].mxu0
      %v2401 = vadd.f32 %v2198, %v2400
      %v2402 = vpop.f32.mrb[0].mxu0
      %v2403 = vadd.f32 %v2200, %v2402
      %v2404 = vpop.f32.mrb[0].mxu0
      %v2405 = vadd.f32 %v2202, %v2404
      %2406 = vmatprep.mubr.bf16.mxu0 0
      %2407 = vmatmul.mubr.bf16.gmra.mrb[0].mxu0 %v1710
      %v2408 = vpop.f32.mrb[0].mxu0
      %v2409 = vadd.f32 %v2206, %v2408
      %v2410 = vpop.f32.mrb[0].mxu0
      %v2411 = vadd.f32 %v2208, %v2410
      %v2412 = vpop.f32.mrb[0].mxu0
      %v2413 = vadd.f32 %v2210, %v2412
      %v2414 = vpop.f32.mrb[0].mxu0
      %v2415 = vadd.f32 %v2212, %v2414
      %2416 = vdwg.mxu0
      %v2417 = vmul.f32 %v2249, 0.2
      %v2418 = vmul.f32 %v2251, 0.2
      %v2419 = vmul.f32 %v2253, 0.2
      %v2420 = vmul.f32 %v2255, 0.2
      %v2421 = vmul.f32 %v2259, 0.2
      %v2422 = vmul.f32 %v2261, 0.2
      %v2423 = vmul.f32 %v2263, 0.2
      %v2424 = vmul.f32 %v2265, 0.2
      %v2425 = vmul.f32 %v2269, 0.2
      %v2426 = vmul.f32 %v2271, 0.2
      %v2427 = vmul.f32 %v2273, 0.2
      %v2428 = vmul.f32 %v2275, 0.2
      %v2429 = vmul.f32 %v2279, 0.2
      %v2430 = vmul.f32 %v2281, 0.2
      %v2431 = vmul.f32 %v2283, 0.2
      %v2432 = vmul.f32 %v2285, 0.2
      %v2433 = vmul.f32 %v2289, 0.2
      %v2434 = vmul.f32 %v2291, 0.2
      %v2435 = vmul.f32 %v2293, 0.2
      %v2436 = vmul.f32 %v2295, 0.2
      %v2437 = vmul.f32 %v2299, 0.2
      %v2438 = vmul.f32 %v2301, 0.2
      %v2439 = vmul.f32 %v2303, 0.2
      %v2440 = vmul.f32 %v2305, 0.2
      %v2441 = vmul.f32 %v2309, 0.2
      %v2442 = vmul.f32 %v2311, 0.2
      %v2443 = vmul.f32 %v2313, 0.2
      %v2444 = vmul.f32 %v2315, 0.2
      %v2445 = vmul.f32 %v2319, 0.2
      %v2446 = vmul.f32 %v2321, 0.2
      %v2447 = vmul.f32 %v2323, 0.2
      %v2448 = vmul.f32 %v2325, 0.2
      %v2449 = vmul.f32 %v2329, 0.2
      %v2450 = vmul.f32 %v2331, 0.2
      %v2451 = vmul.f32 %v2333, 0.2
      %v2452 = vmul.f32 %v2335, 0.2
      %v2453 = vmul.f32 %v2339, 0.2
      %v2454 = vmul.f32 %v2341, 0.2
      %v2455 = vmul.f32 %v2343, 0.2
      %v2456 = vmul.f32 %v2345, 0.2
      %v2457 = vmul.f32 %v2349, 0.2
      %v2458 = vmul.f32 %v2351, 0.2
      %v2459 = vmul.f32 %v2353, 0.2
      %v2460 = vmul.f32 %v2355, 0.2
      %v2461 = vmul.f32 %v2359, 0.2
      %v2462 = vmul.f32 %v2361, 0.2
      %v2463 = vmul.f32 %v2363, 0.2
      %v2464 = vmul.f32 %v2365, 0.2
      %v2465 = vmul.f32 %v2369, 0.2
      %v2466 = vmul.f32 %v2371, 0.2
      %v2467 = vmul.f32 %v2373, 0.2
      %v2468 = vmul.f32 %v2375, 0.2
      %v2469 = vmul.f32 %v2379, 0.2
      %v2470 = vmul.f32 %v2381, 0.2
      %v2471 = vmul.f32 %v2383, 0.2
      %v2472 = vmul.f32 %v2385, 0.2
      %v2473 = vmul.f32 %v2389, 0.2
      %v2474 = vmul.f32 %v2391, 0.2
      %v2475 = vmul.f32 %v2393, 0.2
      %v2476 = vmul.f32 %v2395, 0.2
      %v2477 = vmul.f32 %v2399, 0.2
      %v2478 = vmul.f32 %v2401, 0.2
      %v2479 = vmul.f32 %v2403, 0.2
      %v2480 = vmul.f32 %v2405, 0.2
      %v2481 = vmul.f32 %v2409, 0.2
      %v2482 = vmul.f32 %v2411, 0.2
      %v2483 = vmul.f32 %v2413, 0.2
      %v2484 = vmul.f32 %v2415, 0.2
      %v2485 = vmax.f32 %v2249, %v2417
      %v2486 = vmax.f32 %v2251, %v2418
      %v2487 = vmax.f32 %v2253, %v2419
      %v2488 = vmax.f32 %v2255, %v2420
      %v2489 = vmax.f32 %v2259, %v2421
      %v2490 = vmax.f32 %v2261, %v2422
      %v2491 = vmax.f32 %v2263, %v2423
      %v2492 = vmax.f32 %v2265, %v2424
      %v2493 = vmax.f32 %v2269, %v2425
      %v2494 = vmax.f32 %v2271, %v2426
      %v2495 = vmax.f32 %v2273, %v2427
      %v2496 = vmax.f32 %v2275, %v2428
      %v2497 = vmax.f32 %v2279, %v2429
      %v2498 = vmax.f32 %v2281, %v2430
      %v2499 = vmax.f32 %v2283, %v2431
      %v2500 = vmax.f32 %v2285, %v2432
      %v2501 = vmax.f32 %v2289, %v2433
      %v2502 = vmax.f32 %v2291, %v2434
      %v2503 = vmax.f32 %v2293, %v2435
      %v2504 = vmax.f32 %v2295, %v2436
      %v2505 = vmax.f32 %v2299, %v2437
      %v2506 = vmax.f32 %v2301, %v2438
      %v2507 = vmax.f32 %v2303, %v2439
      %v2508 = vmax.f32 %v2305, %v2440
      %v2509 = vmax.f32 %v2309, %v2441
      %v2510 = vmax.f32 %v2311, %v2442
      %v2511 = vmax.f32 %v2313, %v2443
      %v2512 = vmax.f32 %v2315, %v2444
      %v2513 = vmax.f32 %v2319, %v2445
      %v2514 = vmax.f32 %v2321, %v2446
      %v2515 = vmax.f32 %v2323, %v2447
      %v2516 = vmax.f32 %v2325, %v2448
      %v2517 = vmax.f32 %v2329, %v2449
      %v2518 = vmax.f32 %v2331, %v2450
      %v2519 = vmax.f32 %v2333, %v2451
      %v2520 = vmax.f32 %v2335, %v2452
      %v2521 = vmax.f32 %v2339, %v2453
      %v2522 = vmax.f32 %v2341, %v2454
      %v2523 = vmax.f32 %v2343, %v2455
      %v2524 = vmax.f32 %v2345, %v2456
      %v2525 = vmax.f32 %v2349, %v2457
      %v2526 = vmax.f32 %v2351, %v2458
      %v2527 = vmax.f32 %v2353, %v2459
      %v2528 = vmax.f32 %v2355, %v2460
      %v2529 = vmax.f32 %v2359, %v2461
      %v2530 = vmax.f32 %v2361, %v2462
      %v2531 = vmax.f32 %v2363, %v2463
      %v2532 = vmax.f32 %v2365, %v2464
      %v2533 = vmax.f32 %v2369, %v2465
      %v2534 = vmax.f32 %v2371, %v2466
      %v2535 = vmax.f32 %v2373, %v2467
      %v2536 = vmax.f32 %v2375, %v2468
      %v2537 = vmax.f32 %v2379, %v2469
      %v2538 = vmax.f32 %v2381, %v2470
      %v2539 = vmax.f32 %v2383, %v2471
      %v2540 = vmax.f32 %v2385, %v2472
      %v2541 = vmax.f32 %v2389, %v2473
      %v2542 = vmax.f32 %v2391, %v2474
      %v2543 = vmax.f32 %v2393, %v2475
      %v2544 = vmax.f32 %v2395, %v2476
      %v2545 = vmax.f32 %v2399, %v2477
      %v2546 = vmax.f32 %v2401, %v2478
      %v2547 = vmax.f32 %v2403, %v2479
      %v2548 = vmax.f32 %v2405, %v2480
      %v2549 = vmax.f32 %v2409, %v2481
      %v2550 = vmax.f32 %v2411, %v2482
      %v2551 = vmax.f32 %v2413, %v2483
      %v2552 = vmax.f32 %v2415, %v2484
      %v2553 = vmul.f32 %v2485, %v1323
      %v2554 = vmul.f32 %v2486, %v1323
      %v2555 = vmul.f32 %v2487, %v1328
      %v2556 = vmul.f32 %v2488, %v1328
      %v2557 = vmul.f32 %v2489, %v1333
      %v2558 = vmul.f32 %v2490, %v1333
      %v2559 = vmul.f32 %v2491, %v1338
      %v2560 = vmul.f32 %v2492, %v1338
      %v2561 = vmul.f32 %v2493, %v1343
      %v2562 = vmul.f32 %v2494, %v1343
      %v2563 = vmul.f32 %v2495, %v1348
      %v2564 = vmul.f32 %v2496, %v1348
      %v2565 = vmul.f32 %v2497, %v1353
      %v2566 = vmul.f32 %v2498, %v1353
      %v2567 = vmul.f32 %v2499, %v1358
      %v2568 = vmul.f32 %v2500, %v1358
      %v2569 = vmul.f32 %v2501, %v1363
      %v2570 = vmul.f32 %v2502, %v1363
      %v2571 = vmul.f32 %v2503, %v1368
      %v2572 = vmul.f32 %v2504, %v1368
      %v2573 = vmul.f32 %v2505, %v1373
      %v2574 = vmul.f32 %v2506, %v1373
      %v2575 = vmul.f32 %v2507, %v1378
      %v2576 = vmul.f32 %v2508, %v1378
      %v2577 = vmul.f32 %v2509, %v1383
      %v2578 = vmul.f32 %v2510, %v1383
      %v2579 = vmul.f32 %v2511, %v1388
      %v2580 = vmul.f32 %v2512, %v1388
      %v2581 = vmul.f32 %v2513, %v1393
      %v2582 = vmul.f32 %v2514, %v1393
      %v2583 = vmul.f32 %v2515, %v1398
      %v2584 = vmul.f32 %v2516, %v1398
      %v2585 = vmul.f32 %v2517, %v1403
      %v2586 = vmul.f32 %v2518, %v1403
      %v2587 = vmul.f32 %v2519, %v1408
      %v2588 = vmul.f32 %v2520, %v1408
      %v2589 = vmul.f32 %v2521, %v1413
      %v2590 = vmul.f32 %v2522, %v1413
      %v2591 = vmul.f32 %v2523, %v1418
      %v2592 = vmul.f32 %v2524, %v1418
      %v2593 = vmul.f32 %v2525, %v1423
      %v2594 = vmul.f32 %v2526, %v1423
      %v2595 = vmul.f32 %v2527, %v1428
      %v2596 = vmul.f32 %v2528, %v1428
      %v2597 = vmul.f32 %v2529, %v1433
      %v2598 = vmul.f32 %v2530, %v1433
      %v2599 = vmul.f32 %v2531, %v1438
      %v2600 = vmul.f32 %v2532, %v1438
      %v2601 = vmul.f32 %v2533, %v1443
      %v2602 = vmul.f32 %v2534, %v1443
      %v2603 = vmul.f32 %v2535, %v1448
      %v2604 = vmul.f32 %v2536, %v1448
      %v2605 = vmul.f32 %v2537, %v1453
      %v2606 = vmul.f32 %v2538, %v1453
      %v2607 = vmul.f32 %v2539, %v1458
      %v2608 = vmul.f32 %v2540, %v1458
      %v2609 = vmul.f32 %v2541, %v1463
      %v2610 = vmul.f32 %v2542, %v1463
      %v2611 = vmul.f32 %v2543, %v1468
      %v2612 = vmul.f32 %v2544, %v1468
      %v2613 = vmul.f32 %v2545, %v1473
      %v2614 = vmul.f32 %v2546, %v1473
      %v2615 = vmul.f32 %v2547, %v1478
      %v2616 = vmul.f32 %v2548, %v1478
      %v2617 = vmul.f32 %v2549, %v1483
      %v2618 = vmul.f32 %v2550, %v1483
      %v2619 = vmul.f32 %v2551, %v1488
      %v2620 = vmul.f32 %v2552, %v1488
      %v2621 = vrot.slane %v2553, 7
      %v2622 = vrot.slane %v2554, 7
      %v2623 = vrot.slane %v2555, 7
      %v2624 = vrot.slane %v2556, 7
      %v2625 = vrot.slane %v2557, 7
      %v2626 = vrot.slane %v2558, 7
      %v2627 = vrot.slane %v2559, 7
      %v2628 = vrot.slane %v2560, 7
      %v2629 = vrot.slane %v2561, 7
      %v2630 = vrot.slane %v2562, 7
      %v2631 = vrot.slane %v2563, 7
      %v2632 = vrot.slane %v2564, 7
      %v2633 = vrot.slane %v2565, 7
      %v2634 = vrot.slane %v2566, 7
      %v2635 = vrot.slane %v2567, 7
      %v2636 = vrot.slane %v2568, 7
      %v2637 = vrot.slane %v2569, 7
      %v2638 = vrot.slane %v2570, 7
      %v2639 = vrot.slane %v2571, 7
      %v2640 = vrot.slane %v2572, 7
      %v2641 = vrot.slane %v2573, 7
      %v2642 = vrot.slane %v2574, 7
      %v2643 = vrot.slane %v2575, 7
      %v2644 = vrot.slane %v2576, 7
      %v2645 = vrot.slane %v2577, 7
      %v2646 = vrot.slane %v2578, 7
      %v2647 = vrot.slane %v2579, 7
      %v2648 = vrot.slane %v2580, 7
      %v2649 = vrot.slane %v2581, 7
      %v2650 = vrot.slane %v2582, 7
      %v2651 = vrot.slane %v2583, 7
      %v2652 = vrot.slane %v2584, 7
      %v2653 = vrot.slane %v2585, 7
      %v2654 = vrot.slane %v2586, 7
      %v2655 = vrot.slane %v2587, 7
      %v2656 = vrot.slane %v2588, 7
      %v2657 = vrot.slane %v2589, 7
      %v2658 = vrot.slane %v2590, 7
      %v2659 = vrot.slane %v2591, 7
      %v2660 = vrot.slane %v2592, 7
      %v2661 = vrot.slane %v2593, 7
      %v2662 = vrot.slane %v2594, 7
      %v2663 = vrot.slane %v2595, 7
      %v2664 = vrot.slane %v2596, 7
      %v2665 = vrot.slane %v2597, 7
      %v2666 = vrot.slane %v2598, 7
      %v2667 = vrot.slane %v2599, 7
      %v2668 = vrot.slane %v2600, 7
      %v2669 = vrot.slane %v2601, 7
      %v2670 = vrot.slane %v2602, 7
      %v2671 = vrot.slane %v2603, 7
      %v2672 = vrot.slane %v2604, 7
      %v2673 = vrot.slane %v2605, 7
      %v2674 = vrot.slane %v2606, 7
      %v2675 = vrot.slane %v2607, 7
      %v2676 = vrot.slane %v2608, 7
      %v2677 = vrot.slane %v2609, 7
      %v2678 = vrot.slane %v2610, 7
      %v2679 = vrot.slane %v2611, 7
      %v2680 = vrot.slane %v2612, 7
      %v2681 = vrot.slane %v2613, 7
      %v2682 = vrot.slane %v2614, 7
      %v2683 = vrot.slane %v2615, 7
      %v2684 = vrot.slane %v2616, 7
      %v2685 = vrot.slane %v2617, 7
      %v2686 = vrot.slane %v2618, 7
      %v2687 = vrot.slane %v2619, 7
      %v2688 = vrot.slane %v2620, 7
      %v2689 = vsel %vm415, %v2685, %v2687
      %v2690 = vsel %vm415, %v2686, %v2688
      %v2691 = vsel %vm415, %v2683, %v2685
      %v2692 = vsel %vm415, %v2684, %v2686
      %v2693 = vsel %vm415, %v2681, %v2683
      %v2694 = vsel %vm415, %v2682, %v2684
      %v2695 = vsel %vm415, %v2679, %v2681
      %v2696 = vsel %vm415, %v2680, %v2682
      %v2697 = vsel %vm415, %v2677, %v2679
      %v2698 = vsel %vm415, %v2678, %v2680
      %v2699 = vsel %vm415, %v2675, %v2677
      %v2700 = vsel %vm415, %v2676, %v2678
      %v2701 = vsel %vm415, %v2673, %v2675
      %v2702 = vsel %vm415, %v2674, %v2676
      %v2703 = vsel %vm415, %v2671, %v2673
      %v2704 = vsel %vm415, %v2672, %v2674
      %v2705 = vsel %vm415, %v2669, %v2671
      %v2706 = vsel %vm415, %v2670, %v2672
      %v2707 = vsel %vm415, %v2667, %v2669
      %v2708 = vsel %vm415, %v2668, %v2670
      %v2709 = vsel %vm415, %v2665, %v2667
      %v2710 = vsel %vm415, %v2666, %v2668
      %v2711 = vsel %vm415, %v2663, %v2665
      %v2712 = vsel %vm415, %v2664, %v2666
      %v2713 = vsel %vm415, %v2661, %v2663
      %v2714 = vsel %vm415, %v2662, %v2664
      %v2715 = vsel %vm415, %v2659, %v2661
      %v2716 = vsel %vm415, %v2660, %v2662
      %v2717 = vsel %vm415, %v2657, %v2659
      %v2718 = vsel %vm415, %v2658, %v2660
      %v2719 = vsel %vm415, %v2655, %v2657
      %v2720 = vsel %vm415, %v2656, %v2658
      %v2721 = vsel %vm415, %v2653, %v2655
      %v2722 = vsel %vm415, %v2654, %v2656
      %v2723 = vsel %vm415, %v2651, %v2653
      %v2724 = vsel %vm415, %v2652, %v2654
      %v2725 = vsel %vm415, %v2649, %v2651
      %v2726 = vsel %vm415, %v2650, %v2652
      %v2727 = vsel %vm415, %v2647, %v2649
      %v2728 = vsel %vm415, %v2648, %v2650
      %v2729 = vsel %vm415, %v2645, %v2647
      %v2730 = vsel %vm415, %v2646, %v2648
      %v2731 = vsel %vm415, %v2643, %v2645
      %v2732 = vsel %vm415, %v2644, %v2646
      %v2733 = vsel %vm415, %v2641, %v2643
      %v2734 = vsel %vm415, %v2642, %v2644
      %v2735 = vsel %vm415, %v2639, %v2641
      %v2736 = vsel %vm415, %v2640, %v2642
      %v2737 = vsel %vm415, %v2637, %v2639
      %v2738 = vsel %vm415, %v2638, %v2640
      %v2739 = vsel %vm415, %v2635, %v2637
      %v2740 = vsel %vm415, %v2636, %v2638
      %v2741 = vsel %vm415, %v2633, %v2635
      %v2742 = vsel %vm415, %v2634, %v2636
      %v2743 = vsel %vm415, %v2631, %v2633
      %v2744 = vsel %vm415, %v2632, %v2634
      %v2745 = vsel %vm415, %v2629, %v2631
      %v2746 = vsel %vm415, %v2630, %v2632
      %v2747 = vsel %vm415, %v2627, %v2629
      %v2748 = vsel %vm415, %v2628, %v2630
      %v2749 = vsel %vm415, %v2625, %v2627
      %v2750 = vsel %vm415, %v2626, %v2628
      %v2751 = vsel %vm415, %v2623, %v2625
      %v2752 = vsel %vm415, %v2624, %v2626
      %v2753 = vsel %vm415, %v2621, %v2623
      %v2754 = vsel %vm415, %v2622, %v2624
      %v2755 = vsel %vm415, %v2687, %v2621
      %v2756 = vsel %vm415, %v2688, %v2622
      %v2757 = vrot.slane %v2553, 1
      %v2758 = vrot.slane %v2554, 1
      %v2759 = vrot.slane %v2555, 1
      %v2760 = vrot.slane %v2556, 1
      %v2761 = vrot.slane %v2557, 1
      %v2762 = vrot.slane %v2558, 1
      %v2763 = vrot.slane %v2559, 1
      %v2764 = vrot.slane %v2560, 1
      %v2765 = vrot.slane %v2561, 1
      %v2766 = vrot.slane %v2562, 1
      %v2767 = vrot.slane %v2563, 1
      %v2768 = vrot.slane %v2564, 1
      %v2769 = vrot.slane %v2565, 1
      %v2770 = vrot.slane %v2566, 1
      %v2771 = vrot.slane %v2567, 1
      %v2772 = vrot.slane %v2568, 1
      %v2773 = vrot.slane %v2569, 1
      %v2774 = vrot.slane %v2570, 1
      %v2775 = vrot.slane %v2571, 1
      %v2776 = vrot.slane %v2572, 1
      %v2777 = vrot.slane %v2573, 1
      %v2778 = vrot.slane %v2574, 1
      %v2779 = vrot.slane %v2575, 1
      %v2780 = vrot.slane %v2576, 1
      %v2781 = vrot.slane %v2577, 1
      %v2782 = vrot.slane %v2578, 1
      %v2783 = vrot.slane %v2579, 1
      %v2784 = vrot.slane %v2580, 1
      %v2785 = vrot.slane %v2581, 1
      %v2786 = vrot.slane %v2582, 1
      %v2787 = vrot.slane %v2583, 1
      %v2788 = vrot.slane %v2584, 1
      %v2789 = vrot.slane %v2585, 1
      %v2790 = vrot.slane %v2586, 1
      %v2791 = vrot.slane %v2587, 1
      %v2792 = vrot.slane %v2588, 1
      %v2793 = vrot.slane %v2589, 1
      %v2794 = vrot.slane %v2590, 1
      %v2795 = vrot.slane %v2591, 1
      %v2796 = vrot.slane %v2592, 1
      %v2797 = vrot.slane %v2593, 1
      %v2798 = vrot.slane %v2594, 1
      %v2799 = vrot.slane %v2595, 1
      %v2800 = vrot.slane %v2596, 1
      %v2801 = vrot.slane %v2597, 1
      %v2802 = vrot.slane %v2598, 1
      %v2803 = vrot.slane %v2599, 1
      %v2804 = vrot.slane %v2600, 1
      %v2805 = vrot.slane %v2601, 1
      %v2806 = vrot.slane %v2602, 1
      %v2807 = vrot.slane %v2603, 1
      %v2808 = vrot.slane %v2604, 1
      %v2809 = vrot.slane %v2605, 1
      %v2810 = vrot.slane %v2606, 1
      %v2811 = vrot.slane %v2607, 1
      %v2812 = vrot.slane %v2608, 1
      %v2813 = vrot.slane %v2609, 1
      %v2814 = vrot.slane %v2610, 1
      %v2815 = vrot.slane %v2611, 1
      %v2816 = vrot.slane %v2612, 1
      %v2817 = vrot.slane %v2613, 1
      %v2818 = vrot.slane %v2614, 1
      %v2819 = vrot.slane %v2615, 1
      %v2820 = vrot.slane %v2616, 1
      %v2821 = vrot.slane %v2617, 1
      %v2822 = vrot.slane %v2618, 1
      %v2823 = vrot.slane %v2619, 1
      %v2824 = vrot.slane %v2620, 1
      %v2825 = vsel %vm484, %v2821, %v2823
      %v2826 = vsel %vm484, %v2822, %v2824
      %v2827 = vsel %vm484, %v2819, %v2821
      %v2828 = vsel %vm484, %v2820, %v2822
      %v2829 = vsel %vm484, %v2817, %v2819
      %v2830 = vsel %vm484, %v2818, %v2820
      %v2831 = vsel %vm484, %v2815, %v2817
      %v2832 = vsel %vm484, %v2816, %v2818
      %v2833 = vsel %vm484, %v2813, %v2815
      %v2834 = vsel %vm484, %v2814, %v2816
      %v2835 = vsel %vm484, %v2811, %v2813
      %v2836 = vsel %vm484, %v2812, %v2814
      %v2837 = vsel %vm484, %v2809, %v2811
      %v2838 = vsel %vm484, %v2810, %v2812
      %v2839 = vsel %vm484, %v2807, %v2809
      %v2840 = vsel %vm484, %v2808, %v2810
      %v2841 = vsel %vm484, %v2805, %v2807
      %v2842 = vsel %vm484, %v2806, %v2808
      %v2843 = vsel %vm484, %v2803, %v2805
      %v2844 = vsel %vm484, %v2804, %v2806
      %v2845 = vsel %vm484, %v2801, %v2803
      %v2846 = vsel %vm484, %v2802, %v2804
      %v2847 = vsel %vm484, %v2799, %v2801
      %v2848 = vsel %vm484, %v2800, %v2802
      %v2849 = vsel %vm484, %v2797, %v2799
      %v2850 = vsel %vm484, %v2798, %v2800
      %v2851 = vsel %vm484, %v2795, %v2797
      %v2852 = vsel %vm484, %v2796, %v2798
      %v2853 = vsel %vm484, %v2793, %v2795
      %v2854 = vsel %vm484, %v2794, %v2796
      %v2855 = vsel %vm484, %v2791, %v2793
      %v2856 = vsel %vm484, %v2792, %v2794
      %v2857 = vsel %vm484, %v2789, %v2791
      %v2858 = vsel %vm484, %v2790, %v2792
      %v2859 = vsel %vm484, %v2787, %v2789
      %v2860 = vsel %vm484, %v2788, %v2790
      %v2861 = vsel %vm484, %v2785, %v2787
      %v2862 = vsel %vm484, %v2786, %v2788
      %v2863 = vsel %vm484, %v2783, %v2785
      %v2864 = vsel %vm484, %v2784, %v2786
      %v2865 = vsel %vm484, %v2781, %v2783
      %v2866 = vsel %vm484, %v2782, %v2784
      %v2867 = vsel %vm484, %v2779, %v2781
      %v2868 = vsel %vm484, %v2780, %v2782
      %v2869 = vsel %vm484, %v2777, %v2779
      %v2870 = vsel %vm484, %v2778, %v2780
      %v2871 = vsel %vm484, %v2775, %v2777
      %v2872 = vsel %vm484, %v2776, %v2778
      %v2873 = vsel %vm484, %v2773, %v2775
      %v2874 = vsel %vm484, %v2774, %v2776
      %v2875 = vsel %vm484, %v2771, %v2773
      %v2876 = vsel %vm484, %v2772, %v2774
      %v2877 = vsel %vm484, %v2769, %v2771
      %v2878 = vsel %vm484, %v2770, %v2772
      %v2879 = vsel %vm484, %v2767, %v2769
      %v2880 = vsel %vm484, %v2768, %v2770
      %v2881 = vsel %vm484, %v2765, %v2767
      %v2882 = vsel %vm484, %v2766, %v2768
      %v2883 = vsel %vm484, %v2763, %v2765
      %v2884 = vsel %vm484, %v2764, %v2766
      %v2885 = vsel %vm484, %v2761, %v2763
      %v2886 = vsel %vm484, %v2762, %v2764
      %v2887 = vsel %vm484, %v2759, %v2761
      %v2888 = vsel %vm484, %v2760, %v2762
      %v2889 = vsel %vm484, %v2757, %v2759
      %v2890 = vsel %vm484, %v2758, %v2760
      %v2891 = vsel %vm484, %v2823, %v2757
      %v2892 = vsel %vm484, %v2824, %v2758
      %v2894 = vlaneseq
      %v2895 = vshrl.u32 %v2894, 7
      %v2896 = vsub.s32 0, %v2895
      %v2897 = vrot.slane %v378, %v2896
      %v2898 = vlaneseq
      %v2899 = vshrl.u32 %v2898, 7
      %v2900 = vsub.s32 4, %v2899
      %v2901 = vrot.slane %v378, %v2900
      %v2904 = vlaneseq
      %v2905 = vshrl.u32 %v2904, 7
      %v2906 = vsub.s32 0, %v2905
      %v2907 = vrot.slane %v2897, %v2906
      %v2908 = vlaneseq
      %v2909 = vshrl.u32 %v2908, 7
      %v2910 = vsub.s32 0, %v2909
      %v2911 = vrot.slane %v2901, %v2910
      %v2912 = vmul.f32 %v2755, %v2907
      %v2913 = vmul.f32 %v2756, %v2911
      %v2914 = vmul.f32 %v2753, %v2907
      %v2915 = vmul.f32 %v2754, %v2911
      %v2916 = vmul.f32 %v2751, %v2907
      %v2917 = vmul.f32 %v2752, %v2911
      %v2918 = vmul.f32 %v2749, %v2907
      %v2919 = vmul.f32 %v2750, %v2911
      %v2920 = vmul.f32 %v2747, %v2907
      %v2921 = vmul.f32 %v2748, %v2911
      %v2922 = vmul.f32 %v2745, %v2907
      %v2923 = vmul.f32 %v2746, %v2911
      %v2924 = vmul.f32 %v2743, %v2907
      %v2925 = vmul.f32 %v2744, %v2911
      %v2926 = vmul.f32 %v2741, %v2907
      %v2927 = vmul.f32 %v2742, %v2911
      %v2928 = vmul.f32 %v2739, %v2907
      %v2929 = vmul.f32 %v2740, %v2911
      %v2930 = vmul.f32 %v2737, %v2907
      %v2931 = vmul.f32 %v2738, %v2911
      %v2932 = vmul.f32 %v2735, %v2907
      %v2933 = vmul.f32 %v2736, %v2911
      %v2934 = vmul.f32 %v2733, %v2907
      %v2935 = vmul.f32 %v2734, %v2911
      %v2936 = vmul.f32 %v2731, %v2907
      %v2937 = vmul.f32 %v2732, %v2911
      %v2938 = vmul.f32 %v2729, %v2907
      %v2939 = vmul.f32 %v2730, %v2911
      %v2940 = vmul.f32 %v2727, %v2907
      %v2941 = vmul.f32 %v2728, %v2911
      %v2942 = vmul.f32 %v2725, %v2907
      %v2943 = vmul.f32 %v2726, %v2911
      %v2944 = vmul.f32 %v2723, %v2907
      %v2945 = vmul.f32 %v2724, %v2911
      %v2946 = vmul.f32 %v2721, %v2907
      %v2947 = vmul.f32 %v2722, %v2911
      %v2948 = vmul.f32 %v2719, %v2907
      %v2949 = vmul.f32 %v2720, %v2911
      %v2950 = vmul.f32 %v2717, %v2907
      %v2951 = vmul.f32 %v2718, %v2911
      %v2952 = vmul.f32 %v2715, %v2907
      %v2953 = vmul.f32 %v2716, %v2911
      %v2954 = vmul.f32 %v2713, %v2907
      %v2955 = vmul.f32 %v2714, %v2911
      %v2956 = vmul.f32 %v2711, %v2907
      %v2957 = vmul.f32 %v2712, %v2911
      %v2958 = vmul.f32 %v2709, %v2907
      %v2959 = vmul.f32 %v2710, %v2911
      %v2960 = vmul.f32 %v2707, %v2907
      %v2961 = vmul.f32 %v2708, %v2911
      %v2962 = vmul.f32 %v2705, %v2907
      %v2963 = vmul.f32 %v2706, %v2911
      %v2964 = vmul.f32 %v2703, %v2907
      %v2965 = vmul.f32 %v2704, %v2911
      %v2966 = vmul.f32 %v2701, %v2907
      %v2967 = vmul.f32 %v2702, %v2911
      %v2968 = vmul.f32 %v2699, %v2907
      %v2969 = vmul.f32 %v2700, %v2911
      %v2970 = vmul.f32 %v2697, %v2907
      %v2971 = vmul.f32 %v2698, %v2911
      %v2972 = vmul.f32 %v2695, %v2907
      %v2973 = vmul.f32 %v2696, %v2911
      %v2974 = vmul.f32 %v2693, %v2907
      %v2975 = vmul.f32 %v2694, %v2911
      %v2976 = vmul.f32 %v2691, %v2907
      %v2977 = vmul.f32 %v2692, %v2911
      %v2978 = vmul.f32 %v2689, %v2907
      %v2979 = vmul.f32 %v2690, %v2911
      %v2980 = vlaneseq
      %v2981 = vshrl.u32 %v2980, 7
      %v2982 = vsub.s32 1, %v2981
      %v2983 = vrot.slane %v378, %v2982
      %v2984 = vlaneseq
      %v2985 = vshrl.u32 %v2984, 7
      %v2986 = vsub.s32 5, %v2985
      %v2987 = vrot.slane %v378, %v2986
      %v2990 = vlaneseq
      %v2991 = vshrl.u32 %v2990, 7
      %v2992 = vsub.s32 1, %v2991
      %v2993 = vrot.slane %v2983, %v2992
      %v2994 = vlaneseq
      %v2995 = vshrl.u32 %v2994, 7
      %v2996 = vsub.s32 1, %v2995
      %v2997 = vrot.slane %v2987, %v2996
      %v2998 = vmul.f32 %v2553, %v2993
      %v2999 = vmul.f32 %v2554, %v2997
      %v3000 = vmul.f32 %v2555, %v2993
      %v3001 = vmul.f32 %v2556, %v2997
      %v3002 = vmul.f32 %v2557, %v2993
      %v3003 = vmul.f32 %v2558, %v2997
      %v3004 = vmul.f32 %v2559, %v2993
      %v3005 = vmul.f32 %v2560, %v2997
      %v3006 = vmul.f32 %v2561, %v2993
      %v3007 = vmul.f32 %v2562, %v2997
      %v3008 = vmul.f32 %v2563, %v2993
      %v3009 = vmul.f32 %v2564, %v2997
      %v3010 = vmul.f32 %v2565, %v2993
      %v3011 = vmul.f32 %v2566, %v2997
      %v3012 = vmul.f32 %v2567, %v2993
      %v3013 = vmul.f32 %v2568, %v2997
      %v3014 = vmul.f32 %v2569, %v2993
      %v3015 = vmul.f32 %v2570, %v2997
      %v3016 = vmul.f32 %v2571, %v2993
      %v3017 = vmul.f32 %v2572, %v2997
      %v3018 = vmul.f32 %v2573, %v2993
      %v3019 = vmul.f32 %v2574, %v2997
      %v3020 = vmul.f32 %v2575, %v2993
      %v3021 = vmul.f32 %v2576, %v2997
      %v3022 = vmul.f32 %v2577, %v2993
      %v3023 = vmul.f32 %v2578, %v2997
      %v3024 = vmul.f32 %v2579, %v2993
      %v3025 = vmul.f32 %v2580, %v2997
      %v3026 = vmul.f32 %v2581, %v2993
      %v3027 = vmul.f32 %v2582, %v2997
      %v3028 = vmul.f32 %v2583, %v2993
      %v3029 = vmul.f32 %v2584, %v2997
      %v3030 = vmul.f32 %v2585, %v2993
      %v3031 = vmul.f32 %v2586, %v2997
      %v3032 = vmul.f32 %v2587, %v2993
      %v3033 = vmul.f32 %v2588, %v2997
      %v3034 = vmul.f32 %v2589, %v2993
      %v3035 = vmul.f32 %v2590, %v2997
      %v3036 = vmul.f32 %v2591, %v2993
      %v3037 = vmul.f32 %v2592, %v2997
      %v3038 = vmul.f32 %v2593, %v2993
      %v3039 = vmul.f32 %v2594, %v2997
      %v3040 = vmul.f32 %v2595, %v2993
      %v3041 = vmul.f32 %v2596, %v2997
      %v3042 = vmul.f32 %v2597, %v2993
      %v3043 = vmul.f32 %v2598, %v2997
      %v3044 = vmul.f32 %v2599, %v2993
      %v3045 = vmul.f32 %v2600, %v2997
      %v3046 = vmul.f32 %v2601, %v2993
      %v3047 = vmul.f32 %v2602, %v2997
      %v3048 = vmul.f32 %v2603, %v2993
      %v3049 = vmul.f32 %v2604, %v2997
      %v3050 = vmul.f32 %v2605, %v2993
      %v3051 = vmul.f32 %v2606, %v2997
      %v3052 = vmul.f32 %v2607, %v2993
      %v3053 = vmul.f32 %v2608, %v2997
      %v3054 = vmul.f32 %v2609, %v2993
      %v3055 = vmul.f32 %v2610, %v2997
      %v3056 = vmul.f32 %v2611, %v2993
      %v3057 = vmul.f32 %v2612, %v2997
      %v3058 = vmul.f32 %v2613, %v2993
      %v3059 = vmul.f32 %v2614, %v2997
      %v3060 = vmul.f32 %v2615, %v2993
      %v3061 = vmul.f32 %v2616, %v2997
      %v3062 = vmul.f32 %v2617, %v2993
      %v3063 = vmul.f32 %v2618, %v2997
      %v3064 = vmul.f32 %v2619, %v2993
      %v3065 = vmul.f32 %v2620, %v2997
      %v3066 = vadd.f32 %v2912, %v2998
      %v3067 = vadd.f32 %v2913, %v2999
      %v3068 = vadd.f32 %v2914, %v3000
      %v3069 = vadd.f32 %v2915, %v3001
      %v3070 = vadd.f32 %v2916, %v3002
      %v3071 = vadd.f32 %v2917, %v3003
      %v3072 = vadd.f32 %v2918, %v3004
      %v3073 = vadd.f32 %v2919, %v3005
      %v3074 = vadd.f32 %v2920, %v3006
      %v3075 = vadd.f32 %v2921, %v3007
      %v3076 = vadd.f32 %v2922, %v3008
      %v3077 = vadd.f32 %v2923, %v3009
      %v3078 = vadd.f32 %v2924, %v3010
      %v3079 = vadd.f32 %v2925, %v3011
      %v3080 = vadd.f32 %v2926, %v3012
      %v3081 = vadd.f32 %v2927, %v3013
      %v3082 = vadd.f32 %v2928, %v3014
      %v3083 = vadd.f32 %v2929, %v3015
      %v3084 = vadd.f32 %v2930, %v3016
      %v3085 = vadd.f32 %v2931, %v3017
      %v3086 = vadd.f32 %v2932, %v3018
      %v3087 = vadd.f32 %v2933, %v3019
      %v3088 = vadd.f32 %v2934, %v3020
      %v3089 = vadd.f32 %v2935, %v3021
      %v3090 = vadd.f32 %v2936, %v3022
      %v3091 = vadd.f32 %v2937, %v3023
      %v3092 = vadd.f32 %v2938, %v3024
      %v3093 = vadd.f32 %v2939, %v3025
      %v3094 = vadd.f32 %v2940, %v3026
      %v3095 = vadd.f32 %v2941, %v3027
      %v3096 = vadd.f32 %v2942, %v3028
      %v3097 = vadd.f32 %v2943, %v3029
      %v3098 = vadd.f32 %v2944, %v3030
      %v3099 = vadd.f32 %v2945, %v3031
      %v3100 = vadd.f32 %v2946, %v3032
      %v3101 = vadd.f32 %v2947, %v3033
      %v3102 = vadd.f32 %v2948, %v3034
      %v3103 = vadd.f32 %v2949, %v3035
      %v3104 = vadd.f32 %v2950, %v3036
      %v3105 = vadd.f32 %v2951, %v3037
      %v3106 = vadd.f32 %v2952, %v3038
      %v3107 = vadd.f32 %v2953, %v3039
      %v3108 = vadd.f32 %v2954, %v3040
      %v3109 = vadd.f32 %v2955, %v3041
      %v3110 = vadd.f32 %v2956, %v3042
      %v3111 = vadd.f32 %v2957, %v3043
      %v3112 = vadd.f32 %v2958, %v3044
      %v3113 = vadd.f32 %v2959, %v3045
      %v3114 = vadd.f32 %v2960, %v3046
      %v3115 = vadd.f32 %v2961, %v3047
      %v3116 = vadd.f32 %v2962, %v3048
      %v3117 = vadd.f32 %v2963, %v3049
      %v3118 = vadd.f32 %v2964, %v3050
      %v3119 = vadd.f32 %v2965, %v3051
      %v3120 = vadd.f32 %v2966, %v3052
      %v3121 = vadd.f32 %v2967, %v3053
      %v3122 = vadd.f32 %v2968, %v3054
      %v3123 = vadd.f32 %v2969, %v3055
      %v3124 = vadd.f32 %v2970, %v3056
      %v3125 = vadd.f32 %v2971, %v3057
      %v3126 = vadd.f32 %v2972, %v3058
      %v3127 = vadd.f32 %v2973, %v3059
      %v3128 = vadd.f32 %v2974, %v3060
      %v3129 = vadd.f32 %v2975, %v3061
      %v3130 = vadd.f32 %v2976, %v3062
      %v3131 = vadd.f32 %v2977, %v3063
      %v3132 = vadd.f32 %v2978, %v3064
      %v3133 = vadd.f32 %v2979, %v3065
      %v3134 = vlaneseq
      %v3135 = vshrl.u32 %v3134, 7
      %v3136 = vsub.s32 2, %v3135
      %v3137 = vrot.slane %v378, %v3136
      %v3138 = vlaneseq
      %v3139 = vshrl.u32 %v3138, 7
      %v3140 = vsub.s32 6, %v3139
      %v3141 = vrot.slane %v378, %v3140
      %v3144 = vlaneseq
      %v3145 = vshrl.u32 %v3144, 7
      %v3146 = vsub.s32 2, %v3145
      %v3147 = vrot.slane %v3137, %v3146
      %v3148 = vlaneseq
      %v3149 = vshrl.u32 %v3148, 7
      %v3150 = vsub.s32 2, %v3149
      %v3151 = vrot.slane %v3141, %v3150
      %v3152 = vmul.f32 %v2889, %v3147
      %v3153 = vmul.f32 %v2890, %v3151
      %v3154 = vmul.f32 %v2887, %v3147
      %v3155 = vmul.f32 %v2888, %v3151
      %v3156 = vmul.f32 %v2885, %v3147
      %v3157 = vmul.f32 %v2886, %v3151
      %v3158 = vmul.f32 %v2883, %v3147
      %v3159 = vmul.f32 %v2884, %v3151
      %v3160 = vmul.f32 %v2881, %v3147
      %v3161 = vmul.f32 %v2882, %v3151
      %v3162 = vmul.f32 %v2879, %v3147
      %v3163 = vmul.f32 %v2880, %v3151
      %v3164 = vmul.f32 %v2877, %v3147
      %v3165 = vmul.f32 %v2878, %v3151
      %v3166 = vmul.f32 %v2875, %v3147
      %v3167 = vmul.f32 %v2876, %v3151
      %v3168 = vmul.f32 %v2873, %v3147
      %v3169 = vmul.f32 %v2874, %v3151
      %v3170 = vmul.f32 %v2871, %v3147
      %v3171 = vmul.f32 %v2872, %v3151
      %v3172 = vmul.f32 %v2869, %v3147
      %v3173 = vmul.f32 %v2870, %v3151
      %v3174 = vmul.f32 %v2867, %v3147
      %v3175 = vmul.f32 %v2868, %v3151
      %v3176 = vmul.f32 %v2865, %v3147
      %v3177 = vmul.f32 %v2866, %v3151
      %v3178 = vmul.f32 %v2863, %v3147
      %v3179 = vmul.f32 %v2864, %v3151
      %v3180 = vmul.f32 %v2861, %v3147
      %v3181 = vmul.f32 %v2862, %v3151
      %v3182 = vmul.f32 %v2859, %v3147
      %v3183 = vmul.f32 %v2860, %v3151
      %v3184 = vmul.f32 %v2857, %v3147
      %v3185 = vmul.f32 %v2858, %v3151
      %v3186 = vmul.f32 %v2855, %v3147
      %v3187 = vmul.f32 %v2856, %v3151
      %v3188 = vmul.f32 %v2853, %v3147
      %v3189 = vmul.f32 %v2854, %v3151
      %v3190 = vmul.f32 %v2851, %v3147
      %v3191 = vmul.f32 %v2852, %v3151
      %v3192 = vmul.f32 %v2849, %v3147
      %v3193 = vmul.f32 %v2850, %v3151
      %v3194 = vmul.f32 %v2847, %v3147
      %v3195 = vmul.f32 %v2848, %v3151
      %v3196 = vmul.f32 %v2845, %v3147
      %v3197 = vmul.f32 %v2846, %v3151
      %v3198 = vmul.f32 %v2843, %v3147
      %v3199 = vmul.f32 %v2844, %v3151
      %v3200 = vmul.f32 %v2841, %v3147
      %v3201 = vmul.f32 %v2842, %v3151
      %v3202 = vmul.f32 %v2839, %v3147
      %v3203 = vmul.f32 %v2840, %v3151
      %v3204 = vmul.f32 %v2837, %v3147
      %v3205 = vmul.f32 %v2838, %v3151
      %v3206 = vmul.f32 %v2835, %v3147
      %v3207 = vmul.f32 %v2836, %v3151
      %v3208 = vmul.f32 %v2833, %v3147
      %v3209 = vmul.f32 %v2834, %v3151
      %v3210 = vmul.f32 %v2831, %v3147
      %v3211 = vmul.f32 %v2832, %v3151
      %v3212 = vmul.f32 %v2829, %v3147
      %v3213 = vmul.f32 %v2830, %v3151
      %v3214 = vmul.f32 %v2827, %v3147
      %v3215 = vmul.f32 %v2828, %v3151
      %v3216 = vmul.f32 %v2825, %v3147
      %v3217 = vmul.f32 %v2826, %v3151
      %v3218 = vmul.f32 %v2891, %v3147
      %v3219 = vmul.f32 %v2892, %v3151
      %v3220 = vadd.f32 %v3066, %v3152
      %v3221 = vadd.f32 %v3067, %v3153
      %v3222 = vadd.f32 %v3068, %v3154
      %v3223 = vadd.f32 %v3069, %v3155
      %v3224 = vadd.f32 %v3070, %v3156
      %v3225 = vadd.f32 %v3071, %v3157
      %v3226 = vadd.f32 %v3072, %v3158
      %v3227 = vadd.f32 %v3073, %v3159
      %v3228 = vadd.f32 %v3074, %v3160
      %v3229 = vadd.f32 %v3075, %v3161
      %v3230 = vadd.f32 %v3076, %v3162
      %v3231 = vadd.f32 %v3077, %v3163
      %v3232 = vadd.f32 %v3078, %v3164
      %v3233 = vadd.f32 %v3079, %v3165
      %v3234 = vadd.f32 %v3080, %v3166
      %v3235 = vadd.f32 %v3081, %v3167
      %v3236 = vadd.f32 %v3082, %v3168
      %v3237 = vadd.f32 %v3083, %v3169
      %v3238 = vadd.f32 %v3084, %v3170
      %v3239 = vadd.f32 %v3085, %v3171
      %v3240 = vadd.f32 %v3086, %v3172
      %v3241 = vadd.f32 %v3087, %v3173
      %v3242 = vadd.f32 %v3088, %v3174
      %v3243 = vadd.f32 %v3089, %v3175
      %v3244 = vadd.f32 %v3090, %v3176
      %v3245 = vadd.f32 %v3091, %v3177
      %v3246 = vadd.f32 %v3092, %v3178
      %v3247 = vadd.f32 %v3093, %v3179
      %v3248 = vadd.f32 %v3094, %v3180
      %v3249 = vadd.f32 %v3095, %v3181
      %v3250 = vadd.f32 %v3096, %v3182
      %v3251 = vadd.f32 %v3097, %v3183
      %v3252 = vadd.f32 %v3098, %v3184
      %v3253 = vadd.f32 %v3099, %v3185
      %v3254 = vadd.f32 %v3100, %v3186
      %v3255 = vadd.f32 %v3101, %v3187
      %v3256 = vadd.f32 %v3102, %v3188
      %v3257 = vadd.f32 %v3103, %v3189
      %v3258 = vadd.f32 %v3104, %v3190
      %v3259 = vadd.f32 %v3105, %v3191
      %v3260 = vadd.f32 %v3106, %v3192
      %v3261 = vadd.f32 %v3107, %v3193
      %v3262 = vadd.f32 %v3108, %v3194
      %v3263 = vadd.f32 %v3109, %v3195
      %v3264 = vadd.f32 %v3110, %v3196
      %v3265 = vadd.f32 %v3111, %v3197
      %v3266 = vadd.f32 %v3112, %v3198
      %v3267 = vadd.f32 %v3113, %v3199
      %v3268 = vadd.f32 %v3114, %v3200
      %v3269 = vadd.f32 %v3115, %v3201
      %v3270 = vadd.f32 %v3116, %v3202
      %v3271 = vadd.f32 %v3117, %v3203
      %v3272 = vadd.f32 %v3118, %v3204
      %v3273 = vadd.f32 %v3119, %v3205
      %v3274 = vadd.f32 %v3120, %v3206
      %v3275 = vadd.f32 %v3121, %v3207
      %v3276 = vadd.f32 %v3122, %v3208
      %v3277 = vadd.f32 %v3123, %v3209
      %v3278 = vadd.f32 %v3124, %v3210
      %v3279 = vadd.f32 %v3125, %v3211
      %v3280 = vadd.f32 %v3126, %v3212
      %v3281 = vadd.f32 %v3127, %v3213
      %v3282 = vadd.f32 %v3128, %v3214
      %v3283 = vadd.f32 %v3129, %v3215
      %v3284 = vadd.f32 %v3130, %v3216
      %v3285 = vadd.f32 %v3131, %v3217
      %v3286 = vadd.f32 %v3132, %v3218
      %v3287 = vadd.f32 %v3133, %v3219
      %v3288 = vadd.f32 %v3220, %v3221
      %3289 = vadd.xlane.f32.xlu0 %v3288
      %v3290 = vpop.xlane.xlu0 %3289
      %v3291 = vadd.f32 %v3222, %v3223
      %3292 = vadd.xlane.f32.xlu0 %v3291
      %v3293 = vpop.xlane.xlu0 %3292
      %v3294 = vadd.f32 %v3224, %v3225
      %3295 = vadd.xlane.f32.xlu0 %v3294
      %v3296 = vpop.xlane.xlu0 %3295
      %v3297 = vadd.f32 %v3226, %v3227
      %3298 = vadd.xlane.f32.xlu0 %v3297
      %v3299 = vpop.xlane.xlu0 %3298
      %v3300 = vadd.f32 %v3228, %v3229
      %3301 = vadd.xlane.f32.xlu0 %v3300
      %v3302 = vpop.xlane.xlu0 %3301
      %v3303 = vadd.f32 %v3230, %v3231
      %3304 = vadd.xlane.f32.xlu0 %v3303
      %v3305 = vpop.xlane.xlu0 %3304
      %v3306 = vadd.f32 %v3232, %v3233
      %3307 = vadd.xlane.f32.xlu0 %v3306
      %v3308 = vpop.xlane.xlu0 %3307
      %v3309 = vadd.f32 %v3234, %v3235
      %3310 = vadd.xlane.f32.xlu0 %v3309
      %v3311 = vpop.xlane.xlu0 %3310
      %v3312 = vadd.f32 %v3236, %v3237
      %3313 = vadd.xlane.f32.xlu0 %v3312
      %v3314 = vpop.xlane.xlu0 %3313
      %v3315 = vadd.f32 %v3238, %v3239
      %3316 = vadd.xlane.f32.xlu0 %v3315
      %v3317 = vpop.xlane.xlu0 %3316
      %v3318 = vadd.f32 %v3240, %v3241
      %3319 = vadd.xlane.f32.xlu0 %v3318
      %v3320 = vpop.xlane.xlu0 %3319
      %v3321 = vadd.f32 %v3242, %v3243
      %3322 = vadd.xlane.f32.xlu0 %v3321
      %v3323 = vpop.xlane.xlu0 %3322
      %v3324 = vadd.f32 %v3244, %v3245
      %3325 = vadd.xlane.f32.xlu0 %v3324
      %v3326 = vpop.xlane.xlu0 %3325
      %v3327 = vadd.f32 %v3246, %v3247
      %3328 = vadd.xlane.f32.xlu0 %v3327
      %v3329 = vpop.xlane.xlu0 %3328
      %v3330 = vadd.f32 %v3248, %v3249
      %3331 = vadd.xlane.f32.xlu0 %v3330
      %v3332 = vpop.xlane.xlu0 %3331
      %v3333 = vadd.f32 %v3250, %v3251
      %3334 = vadd.xlane.f32.xlu0 %v3333
      %v3335 = vpop.xlane.xlu0 %3334
      %v3336 = vadd.f32 %v3252, %v3253
      %3337 = vadd.xlane.f32.xlu0 %v3336
      %v3338 = vpop.xlane.xlu0 %3337
      %v3339 = vadd.f32 %v3254, %v3255
      %3340 = vadd.xlane.f32.xlu0 %v3339
      %v3341 = vpop.xlane.xlu0 %3340
      %v3342 = vadd.f32 %v3256, %v3257
      %3343 = vadd.xlane.f32.xlu0 %v3342
      %v3344 = vpop.xlane.xlu0 %3343
      %v3345 = vadd.f32 %v3258, %v3259
      %3346 = vadd.xlane.f32.xlu0 %v3345
      %v3347 = vpop.xlane.xlu0 %3346
      %v3348 = vadd.f32 %v3260, %v3261
      %3349 = vadd.xlane.f32.xlu0 %v3348
      %v3350 = vpop.xlane.xlu0 %3349
      %v3351 = vadd.f32 %v3262, %v3263
      %3352 = vadd.xlane.f32.xlu0 %v3351
      %v3353 = vpop.xlane.xlu0 %3352
      %v3354 = vadd.f32 %v3264, %v3265
      %3355 = vadd.xlane.f32.xlu0 %v3354
      %v3356 = vpop.xlane.xlu0 %3355
      %v3357 = vadd.f32 %v3266, %v3267
      %3358 = vadd.xlane.f32.xlu0 %v3357
      %v3359 = vpop.xlane.xlu0 %3358
      %v3360 = vadd.f32 %v3268, %v3269
      %3361 = vadd.xlane.f32.xlu0 %v3360
      %v3362 = vpop.xlane.xlu0 %3361
      %v3363 = vadd.f32 %v3270, %v3271
      %3364 = vadd.xlane.f32.xlu0 %v3363
      %v3365 = vpop.xlane.xlu0 %3364
      %v3366 = vadd.f32 %v3272, %v3273
      %3367 = vadd.xlane.f32.xlu0 %v3366
      %v3368 = vpop.xlane.xlu0 %3367
      %v3369 = vadd.f32 %v3274, %v3275
      %3370 = vadd.xlane.f32.xlu0 %v3369
      %v3371 = vpop.xlane.xlu0 %3370
      %v3372 = vadd.f32 %v3276, %v3277
      %3373 = vadd.xlane.f32.xlu0 %v3372
      %v3374 = vpop.xlane.xlu0 %3373
      %v3375 = vadd.f32 %v3278, %v3279
      %3376 = vadd.xlane.f32.xlu0 %v3375
      %v3377 = vpop.xlane.xlu0 %3376
      %v3378 = vadd.f32 %v3280, %v3281
      %3379 = vadd.xlane.f32.xlu0 %v3378
      %v3380 = vpop.xlane.xlu0 %3379
      %v3381 = vadd.f32 %v3282, %v3283
      %3382 = vadd.xlane.f32.xlu0 %v3381
      %v3383 = vpop.xlane.xlu0 %3382
      %v3384 = vadd.f32 %v3284, %v3285
      %3385 = vadd.xlane.f32.xlu0 %v3384
      %v3386 = vpop.xlane.xlu0 %3385
      %v3387 = vadd.f32 %v3286, %v3287
      %3388 = vadd.xlane.f32.xlu0 %v3387
      %v3389 = vpop.xlane.xlu0 %3388
      %v3390 = vld [vmem:[#allocation2] sm:$0x1]
      %v3392 = vlaneseq
      %v3393 = vshrl.u32 %v3392, 7
      %v3394 = vsub.s32 0, %v3393
      %v3395 = vrot.slane %v3390, %v3394
      %v3397 = vadd.f32 %v3290, %v3395
      %v3398 = vadd.f32 %v3293, %v3395
      %v3399 = vadd.f32 %v3296, %v3395
      %v3400 = vadd.f32 %v3299, %v3395
      %v3401 = vadd.f32 %v3302, %v3395
      %v3402 = vadd.f32 %v3305, %v3395
      %v3403 = vadd.f32 %v3308, %v3395
      %v3404 = vadd.f32 %v3311, %v3395
      %v3405 = vadd.f32 %v3314, %v3395
      %v3406 = vadd.f32 %v3317, %v3395
      %v3407 = vadd.f32 %v3320, %v3395
      %v3408 = vadd.f32 %v3323, %v3395
      %v3409 = vadd.f32 %v3326, %v3395
      %v3410 = vadd.f32 %v3329, %v3395
      %v3411 = vadd.f32 %v3332, %v3395
      %v3412 = vadd.f32 %v3335, %v3395
      %v3413 = vadd.f32 %v3338, %v3395
      %v3414 = vadd.f32 %v3341, %v3395
      %v3415 = vadd.f32 %v3344, %v3395
      %v3416 = vadd.f32 %v3347, %v3395
      %v3417 = vadd.f32 %v3350, %v3395
      %v3418 = vadd.f32 %v3353, %v3395
      %v3419 = vadd.f32 %v3356, %v3395
      %v3420 = vadd.f32 %v3359, %v3395
      %v3421 = vadd.f32 %v3362, %v3395
      %v3422 = vadd.f32 %v3365, %v3395
      %v3423 = vadd.f32 %v3368, %v3395
      %v3424 = vadd.f32 %v3371, %v3395
      %v3425 = vadd.f32 %v3374, %v3395
      %v3426 = vadd.f32 %v3377, %v3395
      %v3427 = vadd.f32 %v3380, %v3395
      %v3428 = vadd.f32 %v3383, %v3395
      %v3429 = vadd.f32 %v3386, %v3395
      %v3430 = vadd.f32 %v3389, %v3395
      %v3431 = vmul.f32 %v3397, 0.2
      %v3432 = vmul.f32 %v3398, 0.2
      %v3433 = vmul.f32 %v3399, 0.2
      %v3434 = vmul.f32 %v3400, 0.2
      %v3435 = vmul.f32 %v3401, 0.2
      %v3436 = vmul.f32 %v3402, 0.2
      %v3437 = vmul.f32 %v3403, 0.2
      %v3438 = vmul.f32 %v3404, 0.2
      %v3439 = vmul.f32 %v3405, 0.2
      %v3440 = vmul.f32 %v3406, 0.2
      %v3441 = vmul.f32 %v3407, 0.2
      %v3442 = vmul.f32 %v3408, 0.2
      %v3443 = vmul.f32 %v3409, 0.2
      %v3444 = vmul.f32 %v3410, 0.2
      %v3445 = vmul.f32 %v3411, 0.2
      %v3446 = vmul.f32 %v3412, 0.2
      %v3447 = vmul.f32 %v3413, 0.2
      %v3448 = vmul.f32 %v3414, 0.2
      %v3449 = vmul.f32 %v3415, 0.2
      %v3450 = vmul.f32 %v3416, 0.2
      %v3451 = vmul.f32 %v3417, 0.2
      %v3452 = vmul.f32 %v3418, 0.2
      %v3453 = vmul.f32 %v3419, 0.2
      %v3454 = vmul.f32 %v3420, 0.2
      %v3455 = vmul.f32 %v3421, 0.2
      %v3456 = vmul.f32 %v3422, 0.2
      %v3457 = vmul.f32 %v3423, 0.2
      %v3458 = vmul.f32 %v3424, 0.2
      %v3459 = vmul.f32 %v3425, 0.2
      %v3460 = vmul.f32 %v3426, 0.2
      %v3461 = vmul.f32 %v3427, 0.2
      %v3462 = vmul.f32 %v3428, 0.2
      %v3463 = vmul.f32 %v3429, 0.2
      %v3464 = vmul.f32 %v3430, 0.2
      %v3465 = vmax.f32 %v3397, %v3431
      %v3466 = vmax.f32 %v3398, %v3432
      %v3467 = vmax.f32 %v3399, %v3433
      %v3468 = vmax.f32 %v3400, %v3434
      %v3469 = vmax.f32 %v3401, %v3435
      %v3470 = vmax.f32 %v3402, %v3436
      %v3471 = vmax.f32 %v3403, %v3437
      %v3472 = vmax.f32 %v3404, %v3438
      %v3473 = vmax.f32 %v3405, %v3439
      %v3474 = vmax.f32 %v3406, %v3440
      %v3475 = vmax.f32 %v3407, %v3441
      %v3476 = vmax.f32 %v3408, %v3442
      %v3477 = vmax.f32 %v3409, %v3443
      %v3478 = vmax.f32 %v3410, %v3444
      %v3479 = vmax.f32 %v3411, %v3445
      %v3480 = vmax.f32 %v3412, %v3446
      %v3481 = vmax.f32 %v3413, %v3447
      %v3482 = vmax.f32 %v3414, %v3448
      %v3483 = vmax.f32 %v3415, %v3449
      %v3484 = vmax.f32 %v3416, %v3450
      %v3485 = vmax.f32 %v3417, %v3451
      %v3486 = vmax.f32 %v3418, %v3452
      %v3487 = vmax.f32 %v3419, %v3453
      %v3488 = vmax.f32 %v3420, %v3454
      %v3489 = vmax.f32 %v3421, %v3455
      %v3490 = vmax.f32 %v3422, %v3456
      %v3491 = vmax.f32 %v3423, %v3457
      %v3492 = vmax.f32 %v3424, %v3458
      %v3493 = vmax.f32 %v3425, %v3459
      %v3494 = vmax.f32 %v3426, %v3460
      %v3495 = vmax.f32 %v3427, %v3461
      %v3496 = vmax.f32 %v3428, %v3462
      %v3497 = vmax.f32 %v3429, %v3463
      %v3498 = vmax.f32 %v3430, %v3464
      %vm3499 = vcmask 7168
      %3500 = vst.msk [vmem:[%s307] sm:$0xff] %vm3499, %v3465
      %3501 = vst.msk [vmem:[%s307 + $0x8] sm:$0xff] %vm3499, %v3466
      %3502 = vst.msk [vmem:[%s307 + $0x10] sm:$0xff] %vm3499, %v3467
      %3503 = vst.msk [vmem:[%s307 + $0x18] sm:$0xff] %vm3499, %v3468
      %3504 = vst.msk [vmem:[%s307 + $0x20] sm:$0xff] %vm3499, %v3469
      %3505 = vst.msk [vmem:[%s307 + $0x28] sm:$0xff] %vm3499, %v3470
      %3506 = vst.msk [vmem:[%s307 + $0x30] sm:$0xff] %vm3499, %v3471
      %3507 = vst.msk [vmem:[%s307 + $0x38] sm:$0xff] %vm3499, %v3472
      %3508 = vst.msk [vmem:[%s307 + $0x40] sm:$0xff] %vm3499, %v3473
      %3509 = vst.msk [vmem:[%s307 + $0x48] sm:$0xff] %vm3499, %v3474
      %3510 = vst.msk [vmem:[%s307 + $0x50] sm:$0xff] %vm3499, %v3475
      %3511 = vst.msk [vmem:[%s307 + $0x58] sm:$0xff] %vm3499, %v3476
      %3512 = vst.msk [vmem:[%s307 + $0x60] sm:$0xff] %vm3499, %v3477
      %3513 = vst.msk [vmem:[%s307 + $0x68] sm:$0xff] %vm3499, %v3478
      %3514 = vst.msk [vmem:[%s307 + $0x70] sm:$0xff] %vm3499, %v3479
      %3515 = vst.msk [vmem:[%s307 + $0x78] sm:$0xff] %vm3499, %v3480
      %3516 = vst.msk [vmem:[%s307 + $0x80] sm:$0xff] %vm3499, %v3481
      %3517 = vst.msk [vmem:[%s307 + $0x88] sm:$0xff] %vm3499, %v3482
      %3518 = vst.msk [vmem:[%s307 + $0x90] sm:$0xff] %vm3499, %v3483
      %3519 = vst.msk [vmem:[%s307 + $0x98] sm:$0xff] %vm3499, %v3484
      %3520 = vst.msk [vmem:[%s307 + $0xa0] sm:$0xff] %vm3499, %v3485
      %3521 = vst.msk [vmem:[%s307 + $0xa8] sm:$0xff] %vm3499, %v3486
      %3522 = vst.msk [vmem:[%s307 + $0xb0] sm:$0xff] %vm3499, %v3487
      %3523 = vst.msk [vmem:[%s307 + $0xb8] sm:$0xff] %vm3499, %v3488
      %3524 = vst.msk [vmem:[%s307 + $0xc0] sm:$0xff] %vm3499, %v3489
      %3525 = vst.msk [vmem:[%s307 + $0xc8] sm:$0xff] %vm3499, %v3490
      %3526 = vst.msk [vmem:[%s307 + $0xd0] sm:$0xff] %vm3499, %v3491
      %3527 = vst.msk [vmem:[%s307 + $0xd8] sm:$0xff] %vm3499, %v3492
      %3528 = vst.msk [vmem:[%s307 + $0xe0] sm:$0xff] %vm3499, %v3493
      %3529 = vst.msk [vmem:[%s307 + $0xe8] sm:$0xff] %vm3499, %v3494
      %3530 = vst.msk [vmem:[%s307 + $0xf0] sm:$0xff] %vm3499, %v3495
      %3531 = vst.msk [vmem:[%s307 + $0xf8] sm:$0xff] %vm3499, %v3496
      %3532 = vst.msk [vmem:[%s307 + $0x100] sm:$0xff] %vm3499, %v3497
      %3533 = vst.msk [vmem:[%s307 + $0x108] sm:$0xff] %vm3499, %v3498
      %p3534 = scmp.lt.s32.totalorder %s21, 1
      %s3535 = scalar_select %p3534, %s21, 1
      %s3536 = smul.addr %s3535, 34
      %s3537 = smul.addr %s3536, 8
      %s3538 = scalar_lea.vmem %s8, %s3537
      // Predicated region
      $region53: #{iclabel_autocorr_forward.1} parent=51 // pred_check
        %p3539 = pneg %p212
      $region54: #{iclabel_autocorr_forward.1} parent=51 // pred_check_branch
        %3541 = sbr.rel (%p3539) target = $region56
      $region55: #{iclabel_autocorr_forward.1} parent=51 // pred_region
        _
      $region56: #{iclabel_autocorr_forward.1} parent=51 // pred_fallthru
        _
    $region52: #{iclabel_autocorr_forward.1} parent=5 // pred_fallthru
      _
    %p3542 = scmp.le.s32.totalorder 2, %s16
    // Predicated region
    $region57: #{iclabel_autocorr_forward.1} parent=5 // pred_check
      %p3543 = pneg %p3542
    $region58: #{iclabel_autocorr_forward.1} parent=5 // pred_check_branch
      %3545 = sbr.rel (%p3543) target = $region60
    $region59: #{iclabel_autocorr_forward.1} parent=5 // pred_region
      %s3546 = ssub.s32 %s16, 2
      // Predicated region
      $region61: #{iclabel_autocorr_forward.1} parent=59 // pred_check
        %p3547 = pneg %p218
      $region62: #{iclabel_autocorr_forward.1} parent=59 // pred_check_branch
        %3549 = sbr.rel (%p3547) target = $region64
      $region63: #{iclabel_autocorr_forward.1} parent=59 // pred_region
        %p3550 = scmp.lt.s32.totalorder %s22, 1
        %s3551 = scalar_select %p3550, %s22, 1
        %s3552 = smul.addr %s3551, 34
        %s3553 = smul.addr %s3552, 8
        %s3554 = scalar_lea.vmem %s8, %s3553
      $region64: #{iclabel_autocorr_forward.1} parent=59 // pred_fallthru
        _
    $region60: #{iclabel_autocorr_forward.1} parent=5 // pred_fallthru
      _
  $region6: #{iclabel_autocorr_forward.1} parent=0 // loop_footer
    %s20 = sadd.s32 1, %s16
  $region7: #{iclabel_autocorr_forward.1} parent=0 // loop_footer_branch
    %15 = sbr.rel target = $region3
  $region8: #{iclabel_autocorr_forward.1} parent=0 // loop_exit
    _

</llo_original>
